<compile_context>
chip_gen: v6e
topology: v6e:2x2x1
jax: 0.10.0
libtpu: 0.0.40
codegen_flags: <defaults>
</compile_context>

<pallas_src>
import functools

import jax
import jax.numpy as jnp
from jax.experimental import pallas as pl
from jax.experimental.pallas import tpu as pltpu

# ---------------------------- configuration ---------------------------------
NUM_LAYERS = 2      # num_layers of IFCEncoder
D_MODEL = 32        # d_model of encoder_layer
NHEAD = 4           # nhead
DIM_FF = 64         # dim_feedforward
BATCH = 2
SEQ = 8
LN_EPS = 1e-5
ROWS_PER_LAYER = 8  # bqk, bo, b1, b2, n1g, n1b, n2g, n2b


def _layer_norm(x, g, b, eps=LN_EPS):
    mu = jnp.mean(x, axis=-1, keepdims=True)
    var = jnp.mean(jnp.square(x - mu), axis=-1, keepdims=True)
    return (x - mu) * jax.lax.rsqrt(var + eps) * g + b


# ------------------------------ Pallas kernel --------------------------------
def _ifc_encoder_kernel(num_layers, nhead, d_model, dim_ff,
                        src_ref, pos_ref,
                        wqk_ref, wv_ref, wo_ref, w1_ref, w2_ref, small_ref,
                        o_ref):
    D = d_model
    H = nhead
    hd = D // H

    x = src_ref[0, :, :]      # (S, D)   this grid step's batch element
    pos = pos_ref[0, :, :]    # (S, D)

    def vec(row, width):      # (1, width) static row slice of packed params
        return small_ref[row:row + 1, 0:width]

    for l in range(num_layers):                       # static unroll over layers
        base = l * ROWS_PER_LAYER
        bqk = vec(base + 0, 2 * D)
        bo = vec(base + 1, D)          # out-proj bias (V bias already folded in)
        b1 = vec(base + 2, dim_ff)
        b2 = vec(base + 3, D)
        n1g, n1b = vec(base + 4, D), vec(base + 5, D)
        n2g, n2b = vec(base + 6, D), vec(base + 7, D)

        # ---- multi-head self-attention (q = k = x + pos, v = x) ----
        xp = x + pos
        # Single lane-dense Q|K projection; 1/sqrt(hd) folded into the Q half.
        qk = jnp.dot(xp, wqk_ref[l], preferred_element_type=jnp.float32) + bqk  # (S, 2D)
        v = jnp.dot(x, wv_ref[l], preferred_element_type=jnp.float32)           # (S, D)

        heads = []
        for h in range(H):             # static hd-offset lane slices, tiny tiles
            q_h = qk[:, h * hd:(h + 1) * hd]                 # (S, hd)
            k_h = qk[:, D + h * hd:D + (h + 1) * hd]         # (S, hd)
            v_h = v[:, h * hd:(h + 1) * hd]                  # (S, hd)
            # NT matmul (contract lane dims); Mosaic's transposed-rhs path
            # handles this — at (S, hd)=(8, 8) any relayout is negligible.
            s = jax.lax.dot_general(q_h, k_h, (((1,), (1,)), ((), ())),
                                    preferred_element_type=jnp.float32)  # (S, S)
            s = s - jnp.max(s, axis=-1, keepdims=True)
            p = jnp.exp(s)
            p = p / jnp.sum(p, axis=-1, keepdims=True)       # exact divide
            heads.append(jnp.dot(p, v_h, preferred_element_type=jnp.float32))
        o_cat = jnp.concatenate(heads, axis=-1)              # (S, D)

        attn = jnp.dot(o_cat, wo_ref[l], preferred_element_type=jnp.float32) + bo

        # ---- residual + norm1 ----
        x = _layer_norm(x + attn, n1g, n1b)

        # ---- FFN: linear1 -> ReLU -> linear2, residual + norm2 ----
        h1 = jnp.dot(x, w1_ref[l], preferred_element_type=jnp.float32) + b1
        h1 = jnp.maximum(h1, 0.0)
        h2 = jnp.dot(h1, w2_ref[l], preferred_element_type=jnp.float32) + b2
        x = _layer_norm(x + h2, n2g, n2b)

    # ---- out_norm ----
    ong = vec(num_layers * ROWS_PER_LAYER + 0, D)
    onb = vec(num_layers * ROWS_PER_LAYER + 1, D)
    x = _layer_norm(x, ong, onb)
    o_ref[0, :, :] = x.astype(o_ref.dtype)


# --------------------- host-side parameter preparation -----------------------
def _prep_params(params, nhead):
    """Pre-transpose, fuse, fold and pack all weights (free, host-side)."""
    in_w, in_b = params["in_w"], params["in_b"]        # (L,3D,D), (L,3D)
    L, _, D = in_w.shape
    hd = D // nhead
    scale = float(hd) ** -0.5
    F = params["l1_w"].shape[1]

    wq = jnp.swapaxes(in_w[:, 0:D], 1, 2) * scale      # (L, D, D)  scale folded
    wk = jnp.swapaxes(in_w[:, D:2 * D], 1, 2)          # (L, D, D)
    wqk = jnp.concatenate([wq, wk], axis=-1)           # (L, D, 2D) fused Q|K
    wv = jnp.swapaxes(in_w[:, 2 * D:3 * D], 1, 2)      # (L, D, D)
    wo = jnp.swapaxes(params["out_w"], 1, 2)           # (L, D, D)
    w1 = jnp.swapaxes(params["l1_w"], 1, 2)            # (L, D, F)
    w2 = jnp.swapaxes(params["l2_w"], 1, 2)            # (L, F, D)

    bqk = jnp.concatenate([in_b[:, 0:D] * scale, in_b[:, D:2 * D]], axis=-1)  # (L,2D)
    bv = in_b[:, 2 * D:3 * D]                                                 # (L, D)
    # Softmax rows sum to 1 => the V bias passes through attention unchanged,
    # so it folds exactly into the out-proj bias.
    bo = params["out_b"] + jnp.einsum("ld,lde->le", bv, wo)                   # (L, D)

    maxw = max(2 * D, F, D)

    def padw(vrow):
        return jnp.pad(vrow, (0, maxw - vrow.shape[0]))

    rows = []
    for l in range(L):
        rows += [padw(bqk[l]), padw(bo[l]),
                 padw(params["l1_b"][l]), padw(params["l2_b"][l]),
                 padw(params["n1_g"][l]), padw(params["n1_b"][l]),
                 padw(params["n2_g"][l]), padw(params["n2_b"][l])]
    rows += [padw(params["on_g"]), padw(params["on_b"])]
    small = jnp.stack(rows, axis=0)                     # (8L+2, maxw) packed

    return [wqk, wv, wo, w1, w2, small]


# -------------------------------- wrapper ------------------------------------
def ifc_encoder_forward(src, pos, params, *, num_layers=NUM_LAYERS, nhead=NHEAD):
    """src, pos: (B, S, D) float32 -> (B, S, D)."""
    B, S, D = src.shape
    weights = _prep_params(params, nhead)
    wqk, wv, wo, w1, w2, small = weights
    F = w1.shape[-1]

    kernel = functools.partial(_ifc_encoder_kernel, num_layers, nhead, D, F)
    out = pl.pallas_call(
        kernel,
        out_shape=jax.ShapeDtypeStruct((B, S, D), src.dtype),
        grid=(B,),
        in_specs=[
            pl.BlockSpec((1, S, D), lambda b: (b, 0, 0)),      # src   (per batch)
            pl.BlockSpec((1, S, D), lambda b: (b, 0, 0)),      # pos   (per batch)
            pl.BlockSpec(wqk.shape, lambda b: (0, 0, 0)),      # wqk   (resident)
            pl.BlockSpec(wv.shape, lambda b: (0, 0, 0)),       # wv
            pl.BlockSpec(wo.shape, lambda b: (0, 0, 0)),       # wo
            pl.BlockSpec(w1.shape, lambda b: (0, 0, 0)),       # w1
            pl.BlockSpec(w2.shape, lambda b: (0, 0, 0)),       # w2
            pl.BlockSpec(small.shape, lambda b: (0, 0)),       # packed biases/LN
        ],
        out_specs=pl.BlockSpec((1, S, D), lambda b: (b, 0, 0)),
        compiler_params=pltpu.CompilerParams(
            dimension_semantics=("parallel",)),
    )(src, pos, *weights)
    return out


# ------------------------ pure-JAX reference (check) --------------------------
def _reference_single(x, pos, params, num_layers, nhead):
    D = x.shape[-1]
    hd = D // nhead
    scale = float(hd) ** -0.5
    for l in range(num_layers):
        w_qkv, b_qkv = params["in_w"][l], params["in_b"][l]
        qk_in = x + pos
        q = qk_in @ w_qkv[0:D].T + b_qkv[0:D]
        k = qk_in @ w_qkv[D:2 * D].T + b_qkv[D:2 * D]
        v = x @ w_qkv[2 * D:].T + b_qkv[2 * D:]
        outs = []
        for h in range(nhead):
            sl = slice(h * hd, (h + 1) * hd)
            s = (q[:, sl] * scale) @ k[:, sl].T
            p = jax.nn.softmax(s, axis=-1)
            outs.append(p @ v[:, sl])
        attn = jnp.concatenate(outs, axis=-1) @ params["out_w"][l].T + params["out_b"][l]
        x = _layer_norm(x + attn, params["n1_g"][l], params["n1_b"][l])
        h1 = jnp.maximum(x @ params["l1_w"][l].T + params["l1_b"][l], 0.0)
        h2 = h1 @ params["l2_w"][l].T + params["l2_b"][l]
        x = _layer_norm(x + h2, params["n2_g"][l], params["n2_b"][l])
    return _layer_norm(x, params["on_g"], params["on_b"])


def reference_forward(src, pos, params, *, num_layers=NUM_LAYERS, nhead=NHEAD):
    return jax.vmap(lambda s, p: _reference_single(s, p, params, num_layers, nhead))(src, pos)


# -------------------------------- params init --------------------------------
def init_params(key, num_layers=NUM_LAYERS, d_model=D_MODEL, dim_ff=DIM_FF):
    ks = jax.random.split(key, 8)
    std = 0.02
    f32 = jnp.float32
    return {
        "in_w":  jax.random.normal(ks[0], (num_layers, 3 * d_model, d_model), f32) * std,
        "in_b":  jax.random.normal(ks[1], (num_layers, 3 * d_model), f32) * std,
        "out_w": jax.random.normal(ks[2], (num_layers, d_model, d_model), f32) * std,
        "out_b": jax.random.normal(ks[3], (num_layers, d_model), f32) * std,
        "l1_w":  jax.random.normal(ks[4], (num_layers, dim_ff, d_model), f32) * std,
        "l1_b":  jax.random.normal(ks[5], (num_layers, dim_ff), f32) * std,
        "l2_w":  jax.random.normal(ks[6], (num_layers, d_model, dim_ff), f32) * std,
        "l2_b":  jax.random.normal(ks[7], (num_layers, d_model), f32) * std,
        "n1_g": jnp.ones((num_layers, d_model), f32),
        "n1_b": jnp.zeros((num_layers, d_model), f32),
        "n2_g": jnp.ones((num_layers, d_model), f32),
        "n2_b": jnp.zeros((num_layers, d_model), f32),
        "on_g": jnp.ones((d_model,), f32),
        "on_b": jnp.zeros((d_model,), f32),
    }


# ----------------------------------- main -------------------------------------
if __name__ == "__main__":
    key = jax.random.PRNGKey(0)
    k_src, k_pos, k_par = jax.random.split(key, 3)

    src = jax.random.normal(k_src, (BATCH, SEQ, D_MODEL), jnp.float32)
    pos = jax.random.normal(k_pos, (BATCH, SEQ, D_MODEL), jnp.float32)
    params = init_params(k_par)

    out = jax.block_until_ready(ifc_encoder_forward(src, pos, params))
    ref = jax.block_until_ready(reference_forward(src, pos, params))

    assert out.shape == (BATCH, SEQ, D_MODEL)
    assert jnp.allclose(out, ref, atol=1e-3, rtol=1e-3), "mismatch vs pure-JAX reference"

    print("KERNEL_OK")
</pallas_src>

<mosaic_0001>
module attributes {stable_mosaic.version = 11 : i64} {
  func.func @_ifc_encoder_kernel(%arg0: i32, %arg1: memref<1x8x32xf32, #tpu.memory_space<vmem>>, %arg2: memref<1x8x32xf32, #tpu.memory_space<vmem>>, %arg3: memref<2x32x64xf32, #tpu.memory_space<vmem>>, %arg4: memref<2x32x32xf32, #tpu.memory_space<vmem>>, %arg5: memref<2x32x32xf32, #tpu.memory_space<vmem>>, %arg6: memref<2x32x64xf32, #tpu.memory_space<vmem>>, %arg7: memref<2x64x32xf32, #tpu.memory_space<vmem>>, %arg8: memref<18x64xf32, #tpu.memory_space<vmem>>, %arg9: memref<1x8x32xf32, #tpu.memory_space<vmem>>) attributes {dimension_semantics = [#tpu.dimension_semantics<parallel>], iteration_bounds = array<i64: 2>, scalar_prefetch = 0 : i64, scratch_operands = 0 : i64, tpu.core_type = #tpu.core_type<tc>, window_params = [{transform_indices = @transform_0, window_bounds = array<i64: 1, 8, 32>}, {transform_indices = @transform_1, window_bounds = array<i64: 1, 8, 32>}, {pipeline_mode = #tpu.pipeline_mode<synchronous>, transform_indices = @transform_2, window_bounds = array<i64: 2, 32, 64>}, {pipeline_mode = #tpu.pipeline_mode<synchronous>, transform_indices = @transform_3, window_bounds = array<i64: 2, 32, 32>}, {pipeline_mode = #tpu.pipeline_mode<synchronous>, transform_indices = @transform_4, window_bounds = array<i64: 2, 32, 32>}, {pipeline_mode = #tpu.pipeline_mode<synchronous>, transform_indices = @transform_5, window_bounds = array<i64: 2, 32, 64>}, {pipeline_mode = #tpu.pipeline_mode<synchronous>, transform_indices = @transform_6, window_bounds = array<i64: 2, 64, 32>}, {pipeline_mode = #tpu.pipeline_mode<synchronous>, transform_indices = @transform_7, window_bounds = array<i64: 18, 64>}, {transform_indices = @transform_8, window_bounds = array<i64: 1, 8, 32>}]} {
    %c0 = arith.constant 0 : index
    %c0_0 = arith.constant 0 : index
    %c0_1 = arith.constant 0 : index
    %0 = vector.load %arg1[%c0, %c0_0, %c0_1] : memref<1x8x32xf32, #tpu.memory_space<vmem>>, vector<1x8x32xf32>
    %1 = vector.shape_cast %0 : vector<1x8x32xf32> to vector<8x32xf32>
    %c0_2 = arith.constant 0 : index
    %c0_3 = arith.constant 0 : index
    %c0_4 = arith.constant 0 : index
    %2 = vector.load %arg2[%c0_2, %c0_3, %c0_4] : memref<1x8x32xf32, #tpu.memory_space<vmem>>, vector<1x8x32xf32>
    %3 = vector.shape_cast %2 : vector<1x8x32xf32> to vector<8x32xf32>
    %c0_5 = arith.constant 0 : index
    %c0_6 = arith.constant 0 : index
    %4 = vector.load %arg8[%c0_5, %c0_6] : memref<18x64xf32, #tpu.memory_space<vmem>>, vector<1x64xf32>
    %c1 = arith.constant 1 : index
    %c0_7 = arith.constant 0 : index
    %5 = vector.load %arg8[%c1, %c0_7] : memref<18x64xf32, #tpu.memory_space<vmem>>, vector<1x32xf32>
    %c2 = arith.constant 2 : index
    %c0_8 = arith.constant 0 : index
    %6 = vector.load %arg8[%c2, %c0_8] : memref<18x64xf32, #tpu.memory_space<vmem>>, vector<1x64xf32>
    %c3 = arith.constant 3 : index
    %c0_9 = arith.constant 0 : index
    %7 = vector.load %arg8[%c3, %c0_9] : memref<18x64xf32, #tpu.memory_space<vmem>>, vector<1x32xf32>
    %c4 = arith.constant 4 : index
    %c0_10 = arith.constant 0 : index
    %8 = vector.load %arg8[%c4, %c0_10] : memref<18x64xf32, #tpu.memory_space<vmem>>, vector<1x32xf32>
    %c5 = arith.constant 5 : index
    %c0_11 = arith.constant 0 : index
    %9 = vector.load %arg8[%c5, %c0_11] : memref<18x64xf32, #tpu.memory_space<vmem>>, vector<1x32xf32>
    %c6 = arith.constant 6 : index
    %c0_12 = arith.constant 0 : index
    %10 = vector.load %arg8[%c6, %c0_12] : memref<18x64xf32, #tpu.memory_space<vmem>>, vector<1x32xf32>
    %c7 = arith.constant 7 : index
    %c0_13 = arith.constant 0 : index
    %11 = vector.load %arg8[%c7, %c0_13] : memref<18x64xf32, #tpu.memory_space<vmem>>, vector<1x32xf32>
    %12 = arith.addf %1, %3 : vector<8x32xf32>
    %c0_14 = arith.constant 0 : index
    %c0_15 = arith.constant 0 : index
    %c0_16 = arith.constant 0 : index
    %13 = vector.load %arg3[%c0_14, %c0_15, %c0_16] : memref<2x32x64xf32, #tpu.memory_space<vmem>>, vector<1x32x64xf32>
    %14 = vector.shape_cast %13 : vector<1x32x64xf32> to vector<32x64xf32>
    %cst = arith.constant dense<0.000000e+00> : vector<8x64xf32>
    %15 = tpu.matmul %12, %14, %cst {dimension_numbers = #tpu.dot_dimension_numbers<[1], [0], [0], [1], [0, 0, 1, 1], [], []>} : vector<8x32xf32>, vector<32x64xf32>, vector<8x64xf32> -> vector<8x64xf32>
    %16 = vector.broadcast %4 : vector<1x64xf32> to vector<8x64xf32>
    %17 = arith.addf %15, %16 : vector<8x64xf32>
    %c0_17 = arith.constant 0 : index
    %c0_18 = arith.constant 0 : index
    %c0_19 = arith.constant 0 : index
    %18 = vector.load %arg4[%c0_17, %c0_18, %c0_19] : memref<2x32x32xf32, #tpu.memory_space<vmem>>, vector<1x32x32xf32>
    %19 = vector.shape_cast %18 : vector<1x32x32xf32> to vector<32x32xf32>
    %cst_20 = arith.constant dense<0.000000e+00> : vector<8x32xf32>
    %20 = tpu.matmul %1, %19, %cst_20 {dimension_numbers = #tpu.dot_dimension_numbers<[1], [0], [0], [1], [0, 0, 1, 1], [], []>} : vector<8x32xf32>, vector<32x32xf32>, vector<8x32xf32> -> vector<8x32xf32>
    %21 = vector.extract_strided_slice %17 {offsets = [0, 0], sizes = [8, 8], strides = [1, 1]} : vector<8x64xf32> to vector<8x8xf32>
    %22 = vector.extract_strided_slice %17 {offsets = [0, 32], sizes = [8, 8], strides = [1, 1]} : vector<8x64xf32> to vector<8x8xf32>
    %23 = vector.extract_strided_slice %20 {offsets = [0, 0], sizes = [8, 8], strides = [1, 1]} : vector<8x32xf32> to vector<8x8xf32>
    %cst_21 = arith.constant dense<0.000000e+00> : vector<8x8xf32>
    %24 = tpu.matmul %21, %22, %cst_21 {dimension_numbers = #tpu.dot_dimension_numbers<[1], [1], [0], [0], [0, 0, 1, 0], [], []>} : vector<8x8xf32>, vector<8x8xf32>, vector<8x8xf32> -> vector<8x8xf32>
    %cst_22 = arith.constant dense<0xFF800000> : vector<8xf32>
    %25 = vector.multi_reduction <maximumf>, %24, %cst_22 [1] : vector<8x8xf32> to vector<8xf32>
    %26 = vector.shape_cast %25 : vector<8xf32> to vector<8x1xf32>
    %27 = vector.broadcast %26 : vector<8x1xf32> to vector<8x8xf32>
    %28 = arith.subf %24, %27 : vector<8x8xf32>
    %29 = math.exp %28 : vector<8x8xf32>
    %cst_23 = arith.constant dense<0.000000e+00> : vector<8xf32>
    %30 = vector.multi_reduction <add>, %29, %cst_23 [1] : vector<8x8xf32> to vector<8xf32>
    %31 = vector.shape_cast %30 : vector<8xf32> to vector<8x1xf32>
    %32 = vector.broadcast %31 : vector<8x1xf32> to vector<8x8xf32>
    %33 = arith.divf %29, %32 : vector<8x8xf32>
    %cst_24 = arith.constant dense<0.000000e+00> : vector<8x8xf32>
    %34 = tpu.matmul %33, %23, %cst_24 {dimension_numbers = #tpu.dot_dimension_numbers<[1], [0], [0], [1], [0, 0, 1, 1], [], []>} : vector<8x8xf32>, vector<8x8xf32>, vector<8x8xf32> -> vector<8x8xf32>
    %35 = vector.extract_strided_slice %17 {offsets = [0, 8], sizes = [8, 8], strides = [1, 1]} : vector<8x64xf32> to vector<8x8xf32>
    %36 = vector.extract_strided_slice %17 {offsets = [0, 40], sizes = [8, 8], strides = [1, 1]} : vector<8x64xf32> to vector<8x8xf32>
    %37 = vector.extract_strided_slice %20 {offsets = [0, 8], sizes = [8, 8], strides = [1, 1]} : vector<8x32xf32> to vector<8x8xf32>
    %cst_25 = arith.constant dense<0.000000e+00> : vector<8x8xf32>
    %38 = tpu.matmul %35, %36, %cst_25 {dimension_numbers = #tpu.dot_dimension_numbers<[1], [1], [0], [0], [0, 0, 1, 0], [], []>} : vector<8x8xf32>, vector<8x8xf32>, vector<8x8xf32> -> vector<8x8xf32>
    %cst_26 = arith.constant dense<0xFF800000> : vector<8xf32>
    %39 = vector.multi_reduction <maximumf>, %38, %cst_26 [1] : vector<8x8xf32> to vector<8xf32>
    %40 = vector.shape_cast %39 : vector<8xf32> to vector<8x1xf32>
    %41 = vector.broadcast %40 : vector<8x1xf32> to vector<8x8xf32>
    %42 = arith.subf %38, %41 : vector<8x8xf32>
    %43 = math.exp %42 : vector<8x8xf32>
    %cst_27 = arith.constant dense<0.000000e+00> : vector<8xf32>
    %44 = vector.multi_reduction <add>, %43, %cst_27 [1] : vector<8x8xf32> to vector<8xf32>
    %45 = vector.shape_cast %44 : vector<8xf32> to vector<8x1xf32>
    %46 = vector.broadcast %45 : vector<8x1xf32> to vector<8x8xf32>
    %47 = arith.divf %43, %46 : vector<8x8xf32>
    %cst_28 = arith.constant dense<0.000000e+00> : vector<8x8xf32>
    %48 = tpu.matmul %47, %37, %cst_28 {dimension_numbers = #tpu.dot_dimension_numbers<[1], [0], [0], [1], [0, 0, 1, 1], [], []>} : vector<8x8xf32>, vector<8x8xf32>, vector<8x8xf32> -> vector<8x8xf32>
    %49 = vector.extract_strided_slice %17 {offsets = [0, 16], sizes = [8, 8], strides = [1, 1]} : vector<8x64xf32> to vector<8x8xf32>
    %50 = vector.extract_strided_slice %17 {offsets = [0, 48], sizes = [8, 8], strides = [1, 1]} : vector<8x64xf32> to vector<8x8xf32>
    %51 = vector.extract_strided_slice %20 {offsets = [0, 16], sizes = [8, 8], strides = [1, 1]} : vector<8x32xf32> to vector<8x8xf32>
    %cst_29 = arith.constant dense<0.000000e+00> : vector<8x8xf32>
    %52 = tpu.matmul %49, %50, %cst_29 {dimension_numbers = #tpu.dot_dimension_numbers<[1], [1], [0], [0], [0, 0, 1, 0], [], []>} : vector<8x8xf32>, vector<8x8xf32>, vector<8x8xf32> -> vector<8x8xf32>
    %cst_30 = arith.constant dense<0xFF800000> : vector<8xf32>
    %53 = vector.multi_reduction <maximumf>, %52, %cst_30 [1] : vector<8x8xf32> to vector<8xf32>
    %54 = vector.shape_cast %53 : vector<8xf32> to vector<8x1xf32>
    %55 = vector.broadcast %54 : vector<8x1xf32> to vector<8x8xf32>
    %56 = arith.subf %52, %55 : vector<8x8xf32>
    %57 = math.exp %56 : vector<8x8xf32>
    %cst_31 = arith.constant dense<0.000000e+00> : vector<8xf32>
    %58 = vector.multi_reduction <add>, %57, %cst_31 [1] : vector<8x8xf32> to vector<8xf32>
    %59 = vector.shape_cast %58 : vector<8xf32> to vector<8x1xf32>
    %60 = vector.broadcast %59 : vector<8x1xf32> to vector<8x8xf32>
    %61 = arith.divf %57, %60 : vector<8x8xf32>
    %cst_32 = arith.constant dense<0.000000e+00> : vector<8x8xf32>
    %62 = tpu.matmul %61, %51, %cst_32 {dimension_numbers = #tpu.dot_dimension_numbers<[1], [0], [0], [1], [0, 0, 1, 1], [], []>} : vector<8x8xf32>, vector<8x8xf32>, vector<8x8xf32> -> vector<8x8xf32>
    %63 = vector.extract_strided_slice %17 {offsets = [0, 24], sizes = [8, 8], strides = [1, 1]} : vector<8x64xf32> to vector<8x8xf32>
    %64 = vector.extract_strided_slice %17 {offsets = [0, 56], sizes = [8, 8], strides = [1, 1]} : vector<8x64xf32> to vector<8x8xf32>
    %65 = vector.extract_strided_slice %20 {offsets = [0, 24], sizes = [8, 8], strides = [1, 1]} : vector<8x32xf32> to vector<8x8xf32>
    %cst_33 = arith.constant dense<0.000000e+00> : vector<8x8xf32>
    %66 = tpu.matmul %63, %64, %cst_33 {dimension_numbers = #tpu.dot_dimension_numbers<[1], [1], [0], [0], [0, 0, 1, 0], [], []>} : vector<8x8xf32>, vector<8x8xf32>, vector<8x8xf32> -> vector<8x8xf32>
    %cst_34 = arith.constant dense<0xFF800000> : vector<8xf32>
    %67 = vector.multi_reduction <maximumf>, %66, %cst_34 [1] : vector<8x8xf32> to vector<8xf32>
    %68 = vector.shape_cast %67 : vector<8xf32> to vector<8x1xf32>
    %69 = vector.broadcast %68 : vector<8x1xf32> to vector<8x8xf32>
    %70 = arith.subf %66, %69 : vector<8x8xf32>
    %71 = math.exp %70 : vector<8x8xf32>
    %cst_35 = arith.constant dense<0.000000e+00> : vector<8xf32>
    %72 = vector.multi_reduction <add>, %71, %cst_35 [1] : vector<8x8xf32> to vector<8xf32>
    %73 = vector.shape_cast %72 : vector<8xf32> to vector<8x1xf32>
    %74 = vector.broadcast %73 : vector<8x1xf32> to vector<8x8xf32>
    %75 = arith.divf %71, %74 : vector<8x8xf32>
    %cst_36 = arith.constant dense<0.000000e+00> : vector<8x8xf32>
    %76 = tpu.matmul %75, %65, %cst_36 {dimension_numbers = #tpu.dot_dimension_numbers<[1], [0], [0], [1], [0, 0, 1, 1], [], []>} : vector<8x8xf32>, vector<8x8xf32>, vector<8x8xf32> -> vector<8x8xf32>
    %77 = tpu.concatenate %34, %48, %62, %76 in 1 : vector<8x8xf32>, vector<8x8xf32>, vector<8x8xf32>, vector<8x8xf32> -> vector<8x32xf32>
    %c0_37 = arith.constant 0 : index
    %c0_38 = arith.constant 0 : index
    %c0_39 = arith.constant 0 : index
    %78 = vector.load %arg5[%c0_37, %c0_38, %c0_39] : memref<2x32x32xf32, #tpu.memory_space<vmem>>, vector<1x32x32xf32>
    %79 = vector.shape_cast %78 : vector<1x32x32xf32> to vector<32x32xf32>
    %cst_40 = arith.constant dense<0.000000e+00> : vector<8x32xf32>
    %80 = tpu.matmul %77, %79, %cst_40 {dimension_numbers = #tpu.dot_dimension_numbers<[1], [0], [0], [1], [0, 0, 1, 1], [], []>} : vector<8x32xf32>, vector<32x32xf32>, vector<8x32xf32> -> vector<8x32xf32>
    %81 = vector.broadcast %5 : vector<1x32xf32> to vector<8x32xf32>
    %82 = arith.addf %80, %81 : vector<8x32xf32>
    %83 = arith.addf %1, %82 : vector<8x32xf32>
    %cst_41 = arith.constant dense<0.000000e+00> : vector<8xf32>
    %84 = vector.multi_reduction <add>, %83, %cst_41 [1] : vector<8x32xf32> to vector<8xf32>
    %85 = vector.shape_cast %84 : vector<8xf32> to vector<8x1xf32>
    %cst_42 = arith.constant 3.200000e+01 : f32
    %86 = vector.broadcast %cst_42 : f32 to vector<8x1xf32>
    %87 = arith.divf %85, %86 : vector<8x1xf32>
    %88 = vector.broadcast %87 : vector<8x1xf32> to vector<8x32xf32>
    %89 = arith.subf %83, %88 : vector<8x32xf32>
    %90 = arith.mulf %89, %89 : vector<8x32xf32>
    %cst_43 = arith.constant dense<0.000000e+00> : vector<8xf32>
    %91 = vector.multi_reduction <add>, %90, %cst_43 [1] : vector<8x32xf32> to vector<8xf32>
    %92 = vector.shape_cast %91 : vector<8xf32> to vector<8x1xf32>
    %cst_44 = arith.constant 3.200000e+01 : f32
    %93 = vector.broadcast %cst_44 : f32 to vector<8x1xf32>
    %94 = arith.divf %92, %93 : vector<8x1xf32>
    %95 = vector.broadcast %87 : vector<8x1xf32> to vector<8x32xf32>
    %96 = arith.subf %83, %95 : vector<8x32xf32>
    %cst_45 = arith.constant 9.99999974E-6 : f32
    %97 = vector.broadcast %cst_45 : f32 to vector<8x1xf32>
    %98 = arith.addf %94, %97 : vector<8x1xf32>
    %99 = math.rsqrt %98 : vector<8x1xf32>
    %100 = vector.broadcast %99 : vector<8x1xf32> to vector<8x32xf32>
    %101 = arith.mulf %96, %100 : vector<8x32xf32>
    %102 = vector.broadcast %8 : vector<1x32xf32> to vector<8x32xf32>
    %103 = arith.mulf %101, %102 : vector<8x32xf32>
    %104 = vector.broadcast %9 : vector<1x32xf32> to vector<8x32xf32>
    %105 = arith.addf %103, %104 : vector<8x32xf32>
    %c0_46 = arith.constant 0 : index
    %c0_47 = arith.constant 0 : index
    %c0_48 = arith.constant 0 : index
    %106 = vector.load %arg6[%c0_46, %c0_47, %c0_48] : memref<2x32x64xf32, #tpu.memory_space<vmem>>, vector<1x32x64xf32>
    %107 = vector.shape_cast %106 : vector<1x32x64xf32> to vector<32x64xf32>
    %cst_49 = arith.constant dense<0.000000e+00> : vector<8x64xf32>
    %108 = tpu.matmul %105, %107, %cst_49 {dimension_numbers = #tpu.dot_dimension_numbers<[1], [0], [0], [1], [0, 0, 1, 1], [], []>} : vector<8x32xf32>, vector<32x64xf32>, vector<8x64xf32> -> vector<8x64xf32>
    %109 = vector.broadcast %6 : vector<1x64xf32> to vector<8x64xf32>
    %110 = arith.addf %108, %109 : vector<8x64xf32>
    %cst_50 = arith.constant 0.000000e+00 : f32
    %111 = vector.broadcast %cst_50 : f32 to vector<8x64xf32>
    %112 = arith.maximumf %110, %111 : vector<8x64xf32>
    %c0_51 = arith.constant 0 : index
    %c0_52 = arith.constant 0 : index
    %c0_53 = arith.constant 0 : index
    %113 = vector.load %arg7[%c0_51, %c0_52, %c0_53] : memref<2x64x32xf32, #tpu.memory_space<vmem>>, vector<1x64x32xf32>
    %114 = vector.shape_cast %113 : vector<1x64x32xf32> to vector<64x32xf32>
    %cst_54 = arith.constant dense<0.000000e+00> : vector<8x32xf32>
    %115 = tpu.matmul %112, %114, %cst_54 {dimension_numbers = #tpu.dot_dimension_numbers<[1], [0], [0], [1], [0, 0, 1, 1], [], []>} : vector<8x64xf32>, vector<64x32xf32>, vector<8x32xf32> -> vector<8x32xf32>
    %116 = vector.broadcast %7 : vector<1x32xf32> to vector<8x32xf32>
    %117 = arith.addf %115, %116 : vector<8x32xf32>
    %118 = arith.addf %105, %117 : vector<8x32xf32>
    %cst_55 = arith.constant dense<0.000000e+00> : vector<8xf32>
    %119 = vector.multi_reduction <add>, %118, %cst_55 [1] : vector<8x32xf32> to vector<8xf32>
    %120 = vector.shape_cast %119 : vector<8xf32> to vector<8x1xf32>
    %cst_56 = arith.constant 3.200000e+01 : f32
    %121 = vector.broadcast %cst_56 : f32 to vector<8x1xf32>
    %122 = arith.divf %120, %121 : vector<8x1xf32>
    %123 = vector.broadcast %122 : vector<8x1xf32> to vector<8x32xf32>
    %124 = arith.subf %118, %123 : vector<8x32xf32>
    %125 = arith.mulf %124, %124 : vector<8x32xf32>
    %cst_57 = arith.constant dense<0.000000e+00> : vector<8xf32>
    %126 = vector.multi_reduction <add>, %125, %cst_57 [1] : vector<8x32xf32> to vector<8xf32>
    %127 = vector.shape_cast %126 : vector<8xf32> to vector<8x1xf32>
    %cst_58 = arith.constant 3.200000e+01 : f32
    %128 = vector.broadcast %cst_58 : f32 to vector<8x1xf32>
    %129 = arith.divf %127, %128 : vector<8x1xf32>
    %130 = vector.broadcast %122 : vector<8x1xf32> to vector<8x32xf32>
    %131 = arith.subf %118, %130 : vector<8x32xf32>
    %cst_59 = arith.constant 9.99999974E-6 : f32
    %132 = vector.broadcast %cst_59 : f32 to vector<8x1xf32>
    %133 = arith.addf %129, %132 : vector<8x1xf32>
    %134 = math.rsqrt %133 : vector<8x1xf32>
    %135 = vector.broadcast %134 : vector<8x1xf32> to vector<8x32xf32>
    %136 = arith.mulf %131, %135 : vector<8x32xf32>
    %137 = vector.broadcast %10 : vector<1x32xf32> to vector<8x32xf32>
    %138 = arith.mulf %136, %137 : vector<8x32xf32>
    %139 = vector.broadcast %11 : vector<1x32xf32> to vector<8x32xf32>
    %140 = arith.addf %138, %139 : vector<8x32xf32>
    %c8 = arith.constant 8 : index
    %c0_60 = arith.constant 0 : index
    %141 = vector.load %arg8[%c8, %c0_60] : memref<18x64xf32, #tpu.memory_space<vmem>>, vector<1x64xf32>
    %c9 = arith.constant 9 : index
    %c0_61 = arith.constant 0 : index
    %142 = vector.load %arg8[%c9, %c0_61] : memref<18x64xf32, #tpu.memory_space<vmem>>, vector<1x32xf32>
    %c10 = arith.constant 10 : index
    %c0_62 = arith.constant 0 : index
    %143 = vector.load %arg8[%c10, %c0_62] : memref<18x64xf32, #tpu.memory_space<vmem>>, vector<1x64xf32>
    %c11 = arith.constant 11 : index
    %c0_63 = arith.constant 0 : index
    %144 = vector.load %arg8[%c11, %c0_63] : memref<18x64xf32, #tpu.memory_space<vmem>>, vector<1x32xf32>
    %c12 = arith.constant 12 : index
    %c0_64 = arith.constant 0 : index
    %145 = vector.load %arg8[%c12, %c0_64] : memref<18x64xf32, #tpu.memory_space<vmem>>, vector<1x32xf32>
    %c13 = arith.constant 13 : index
    %c0_65 = arith.constant 0 : index
    %146 = vector.load %arg8[%c13, %c0_65] : memref<18x64xf32, #tpu.memory_space<vmem>>, vector<1x32xf32>
    %c14 = arith.constant 14 : index
    %c0_66 = arith.constant 0 : index
    %147 = vector.load %arg8[%c14, %c0_66] : memref<18x64xf32, #tpu.memory_space<vmem>>, vector<1x32xf32>
    %c15 = arith.constant 15 : index
    %c0_67 = arith.constant 0 : index
    %148 = vector.load %arg8[%c15, %c0_67] : memref<18x64xf32, #tpu.memory_space<vmem>>, vector<1x32xf32>
    %149 = arith.addf %140, %3 : vector<8x32xf32>
    %c1_68 = arith.constant 1 : index
    %c0_69 = arith.constant 0 : index
    %c0_70 = arith.constant 0 : index
    %150 = vector.load %arg3[%c1_68, %c0_69, %c0_70] : memref<2x32x64xf32, #tpu.memory_space<vmem>>, vector<1x32x64xf32>
    %151 = vector.shape_cast %150 : vector<1x32x64xf32> to vector<32x64xf32>
    %cst_71 = arith.constant dense<0.000000e+00> : vector<8x64xf32>
    %152 = tpu.matmul %149, %151, %cst_71 {dimension_numbers = #tpu.dot_dimension_numbers<[1], [0], [0], [1], [0, 0, 1, 1], [], []>} : vector<8x32xf32>, vector<32x64xf32>, vector<8x64xf32> -> vector<8x64xf32>
    %153 = vector.broadcast %141 : vector<1x64xf32> to vector<8x64xf32>
    %154 = arith.addf %152, %153 : vector<8x64xf32>
    %c1_72 = arith.constant 1 : index
    %c0_73 = arith.constant 0 : index
    %c0_74 = arith.constant 0 : index
    %155 = vector.load %arg4[%c1_72, %c0_73, %c0_74] : memref<2x32x32xf32, #tpu.memory_space<vmem>>, vector<1x32x32xf32>
    %156 = vector.shape_cast %155 : vector<1x32x32xf32> to vector<32x32xf32>
    %cst_75 = arith.constant dense<0.000000e+00> : vector<8x32xf32>
    %157 = tpu.matmul %140, %156, %cst_75 {dimension_numbers = #tpu.dot_dimension_numbers<[1], [0], [0], [1], [0, 0, 1, 1], [], []>} : vector<8x32xf32>, vector<32x32xf32>, vector<8x32xf32> -> vector<8x32xf32>
    %158 = vector.extract_strided_slice %154 {offsets = [0, 0], sizes = [8, 8], strides = [1, 1]} : vector<8x64xf32> to vector<8x8xf32>
    %159 = vector.extract_strided_slice %154 {offsets = [0, 32], sizes = [8, 8], strides = [1, 1]} : vector<8x64xf32> to vector<8x8xf32>
    %160 = vector.extract_strided_slice %157 {offsets = [0, 0], sizes = [8, 8], strides = [1, 1]} : vector<8x32xf32> to vector<8x8xf32>
    %cst_76 = arith.constant dense<0.000000e+00> : vector<8x8xf32>
    %161 = tpu.matmul %158, %159, %cst_76 {dimension_numbers = #tpu.dot_dimension_numbers<[1], [1], [0], [0], [0, 0, 1, 0], [], []>} : vector<8x8xf32>, vector<8x8xf32>, vector<8x8xf32> -> vector<8x8xf32>
    %cst_77 = arith.constant dense<0xFF800000> : vector<8xf32>
    %162 = vector.multi_reduction <maximumf>, %161, %cst_77 [1] : vector<8x8xf32> to vector<8xf32>
    %163 = vector.shape_cast %162 : vector<8xf32> to vector<8x1xf32>
    %164 = vector.broadcast %163 : vector<8x1xf32> to vector<8x8xf32>
    %165 = arith.subf %161, %164 : vector<8x8xf32>
    %166 = math.exp %165 : vector<8x8xf32>
    %cst_78 = arith.constant dense<0.000000e+00> : vector<8xf32>
    %167 = vector.multi_reduction <add>, %166, %cst_78 [1] : vector<8x8xf32> to vector<8xf32>
    %168 = vector.shape_cast %167 : vector<8xf32> to vector<8x1xf32>
    %169 = vector.broadcast %168 : vector<8x1xf32> to vector<8x8xf32>
    %170 = arith.divf %166, %169 : vector<8x8xf32>
    %cst_79 = arith.constant dense<0.000000e+00> : vector<8x8xf32>
    %171 = tpu.matmul %170, %160, %cst_79 {dimension_numbers = #tpu.dot_dimension_numbers<[1], [0], [0], [1], [0, 0, 1, 1], [], []>} : vector<8x8xf32>, vector<8x8xf32>, vector<8x8xf32> -> vector<8x8xf32>
    %172 = vector.extract_strided_slice %154 {offsets = [0, 8], sizes = [8, 8], strides = [1, 1]} : vector<8x64xf32> to vector<8x8xf32>
    %173 = vector.extract_strided_slice %154 {offsets = [0, 40], sizes = [8, 8], strides = [1, 1]} : vector<8x64xf32> to vector<8x8xf32>
    %174 = vector.extract_strided_slice %157 {offsets = [0, 8], sizes = [8, 8], strides = [1, 1]} : vector<8x32xf32> to vector<8x8xf32>
    %cst_80 = arith.constant dense<0.000000e+00> : vector<8x8xf32>
    %175 = tpu.matmul %172, %173, %cst_80 {dimension_numbers = #tpu.dot_dimension_numbers<[1], [1], [0], [0], [0, 0, 1, 0], [], []>} : vector<8x8xf32>, vector<8x8xf32>, vector<8x8xf32> -> vector<8x8xf32>
    %cst_81 = arith.constant dense<0xFF800000> : vector<8xf32>
    %176 = vector.multi_reduction <maximumf>, %175, %cst_81 [1] : vector<8x8xf32> to vector<8xf32>
    %177 = vector.shape_cast %176 : vector<8xf32> to vector<8x1xf32>
    %178 = vector.broadcast %177 : vector<8x1xf32> to vector<8x8xf32>
    %179 = arith.subf %175, %178 : vector<8x8xf32>
    %180 = math.exp %179 : vector<8x8xf32>
    %cst_82 = arith.constant dense<0.000000e+00> : vector<8xf32>
    %181 = vector.multi_reduction <add>, %180, %cst_82 [1] : vector<8x8xf32> to vector<8xf32>
    %182 = vector.shape_cast %181 : vector<8xf32> to vector<8x1xf32>
    %183 = vector.broadcast %182 : vector<8x1xf32> to vector<8x8xf32>
    %184 = arith.divf %180, %183 : vector<8x8xf32>
    %cst_83 = arith.constant dense<0.000000e+00> : vector<8x8xf32>
    %185 = tpu.matmul %184, %174, %cst_83 {dimension_numbers = #tpu.dot_dimension_numbers<[1], [0], [0], [1], [0, 0, 1, 1], [], []>} : vector<8x8xf32>, vector<8x8xf32>, vector<8x8xf32> -> vector<8x8xf32>
    %186 = vector.extract_strided_slice %154 {offsets = [0, 16], sizes = [8, 8], strides = [1, 1]} : vector<8x64xf32> to vector<8x8xf32>
    %187 = vector.extract_strided_slice %154 {offsets = [0, 48], sizes = [8, 8], strides = [1, 1]} : vector<8x64xf32> to vector<8x8xf32>
    %188 = vector.extract_strided_slice %157 {offsets = [0, 16], sizes = [8, 8], strides = [1, 1]} : vector<8x32xf32> to vector<8x8xf32>
    %cst_84 = arith.constant dense<0.000000e+00> : vector<8x8xf32>
    %189 = tpu.matmul %186, %187, %cst_84 {dimension_numbers = #tpu.dot_dimension_numbers<[1], [1], [0], [0], [0, 0, 1, 0], [], []>} : vector<8x8xf32>, vector<8x8xf32>, vector<8x8xf32> -> vector<8x8xf32>
    %cst_85 = arith.constant dense<0xFF800000> : vector<8xf32>
    %190 = vector.multi_reduction <maximumf>, %189, %cst_85 [1] : vector<8x8xf32> to vector<8xf32>
    %191 = vector.shape_cast %190 : vector<8xf32> to vector<8x1xf32>
    %192 = vector.broadcast %191 : vector<8x1xf32> to vector<8x8xf32>
    %193 = arith.subf %189, %192 : vector<8x8xf32>
    %194 = math.exp %193 : vector<8x8xf32>
    %cst_86 = arith.constant dense<0.000000e+00> : vector<8xf32>
    %195 = vector.multi_reduction <add>, %194, %cst_86 [1] : vector<8x8xf32> to vector<8xf32>
    %196 = vector.shape_cast %195 : vector<8xf32> to vector<8x1xf32>
    %197 = vector.broadcast %196 : vector<8x1xf32> to vector<8x8xf32>
    %198 = arith.divf %194, %197 : vector<8x8xf32>
    %cst_87 = arith.constant dense<0.000000e+00> : vector<8x8xf32>
    %199 = tpu.matmul %198, %188, %cst_87 {dimension_numbers = #tpu.dot_dimension_numbers<[1], [0], [0], [1], [0, 0, 1, 1], [], []>} : vector<8x8xf32>, vector<8x8xf32>, vector<8x8xf32> -> vector<8x8xf32>
    %200 = vector.extract_strided_slice %154 {offsets = [0, 24], sizes = [8, 8], strides = [1, 1]} : vector<8x64xf32> to vector<8x8xf32>
    %201 = vector.extract_strided_slice %154 {offsets = [0, 56], sizes = [8, 8], strides = [1, 1]} : vector<8x64xf32> to vector<8x8xf32>
    %202 = vector.extract_strided_slice %157 {offsets = [0, 24], sizes = [8, 8], strides = [1, 1]} : vector<8x32xf32> to vector<8x8xf32>
    %cst_88 = arith.constant dense<0.000000e+00> : vector<8x8xf32>
    %203 = tpu.matmul %200, %201, %cst_88 {dimension_numbers = #tpu.dot_dimension_numbers<[1], [1], [0], [0], [0, 0, 1, 0], [], []>} : vector<8x8xf32>, vector<8x8xf32>, vector<8x8xf32> -> vector<8x8xf32>
    %cst_89 = arith.constant dense<0xFF800000> : vector<8xf32>
    %204 = vector.multi_reduction <maximumf>, %203, %cst_89 [1] : vector<8x8xf32> to vector<8xf32>
    %205 = vector.shape_cast %204 : vector<8xf32> to vector<8x1xf32>
    %206 = vector.broadcast %205 : vector<8x1xf32> to vector<8x8xf32>
    %207 = arith.subf %203, %206 : vector<8x8xf32>
    %208 = math.exp %207 : vector<8x8xf32>
    %cst_90 = arith.constant dense<0.000000e+00> : vector<8xf32>
    %209 = vector.multi_reduction <add>, %208, %cst_90 [1] : vector<8x8xf32> to vector<8xf32>
    %210 = vector.shape_cast %209 : vector<8xf32> to vector<8x1xf32>
    %211 = vector.broadcast %210 : vector<8x1xf32> to vector<8x8xf32>
    %212 = arith.divf %208, %211 : vector<8x8xf32>
    %cst_91 = arith.constant dense<0.000000e+00> : vector<8x8xf32>
    %213 = tpu.matmul %212, %202, %cst_91 {dimension_numbers = #tpu.dot_dimension_numbers<[1], [0], [0], [1], [0, 0, 1, 1], [], []>} : vector<8x8xf32>, vector<8x8xf32>, vector<8x8xf32> -> vector<8x8xf32>
    %214 = tpu.concatenate %171, %185, %199, %213 in 1 : vector<8x8xf32>, vector<8x8xf32>, vector<8x8xf32>, vector<8x8xf32> -> vector<8x32xf32>
    %c1_92 = arith.constant 1 : index
    %c0_93 = arith.constant 0 : index
    %c0_94 = arith.constant 0 : index
    %215 = vector.load %arg5[%c1_92, %c0_93, %c0_94] : memref<2x32x32xf32, #tpu.memory_space<vmem>>, vector<1x32x32xf32>
    %216 = vector.shape_cast %215 : vector<1x32x32xf32> to vector<32x32xf32>
    %cst_95 = arith.constant dense<0.000000e+00> : vector<8x32xf32>
    %217 = tpu.matmul %214, %216, %cst_95 {dimension_numbers = #tpu.dot_dimension_numbers<[1], [0], [0], [1], [0, 0, 1, 1], [], []>} : vector<8x32xf32>, vector<32x32xf32>, vector<8x32xf32> -> vector<8x32xf32>
    %218 = vector.broadcast %142 : vector<1x32xf32> to vector<8x32xf32>
    %219 = arith.addf %217, %218 : vector<8x32xf32>
    %220 = arith.addf %140, %219 : vector<8x32xf32>
    %cst_96 = arith.constant dense<0.000000e+00> : vector<8xf32>
    %221 = vector.multi_reduction <add>, %220, %cst_96 [1] : vector<8x32xf32> to vector<8xf32>
    %222 = vector.shape_cast %221 : vector<8xf32> to vector<8x1xf32>
    %cst_97 = arith.constant 3.200000e+01 : f32
    %223 = vector.broadcast %cst_97 : f32 to vector<8x1xf32>
    %224 = arith.divf %222, %223 : vector<8x1xf32>
    %225 = vector.broadcast %224 : vector<8x1xf32> to vector<8x32xf32>
    %226 = arith.subf %220, %225 : vector<8x32xf32>
    %227 = arith.mulf %226, %226 : vector<8x32xf32>
    %cst_98 = arith.constant dense<0.000000e+00> : vector<8xf32>
    %228 = vector.multi_reduction <add>, %227, %cst_98 [1] : vector<8x32xf32> to vector<8xf32>
    %229 = vector.shape_cast %228 : vector<8xf32> to vector<8x1xf32>
    %cst_99 = arith.constant 3.200000e+01 : f32
    %230 = vector.broadcast %cst_99 : f32 to vector<8x1xf32>
    %231 = arith.divf %229, %230 : vector<8x1xf32>
    %232 = vector.broadcast %224 : vector<8x1xf32> to vector<8x32xf32>
    %233 = arith.subf %220, %232 : vector<8x32xf32>
    %cst_100 = arith.constant 9.99999974E-6 : f32
    %234 = vector.broadcast %cst_100 : f32 to vector<8x1xf32>
    %235 = arith.addf %231, %234 : vector<8x1xf32>
    %236 = math.rsqrt %235 : vector<8x1xf32>
    %237 = vector.broadcast %236 : vector<8x1xf32> to vector<8x32xf32>
    %238 = arith.mulf %233, %237 : vector<8x32xf32>
    %239 = vector.broadcast %145 : vector<1x32xf32> to vector<8x32xf32>
    %240 = arith.mulf %238, %239 : vector<8x32xf32>
    %241 = vector.broadcast %146 : vector<1x32xf32> to vector<8x32xf32>
    %242 = arith.addf %240, %241 : vector<8x32xf32>
    %c1_101 = arith.constant 1 : index
    %c0_102 = arith.constant 0 : index
    %c0_103 = arith.constant 0 : index
    %243 = vector.load %arg6[%c1_101, %c0_102, %c0_103] : memref<2x32x64xf32, #tpu.memory_space<vmem>>, vector<1x32x64xf32>
    %244 = vector.shape_cast %243 : vector<1x32x64xf32> to vector<32x64xf32>
    %cst_104 = arith.constant dense<0.000000e+00> : vector<8x64xf32>
    %245 = tpu.matmul %242, %244, %cst_104 {dimension_numbers = #tpu.dot_dimension_numbers<[1], [0], [0], [1], [0, 0, 1, 1], [], []>} : vector<8x32xf32>, vector<32x64xf32>, vector<8x64xf32> -> vector<8x64xf32>
    %246 = vector.broadcast %143 : vector<1x64xf32> to vector<8x64xf32>
    %247 = arith.addf %245, %246 : vector<8x64xf32>
    %cst_105 = arith.constant 0.000000e+00 : f32
    %248 = vector.broadcast %cst_105 : f32 to vector<8x64xf32>
    %249 = arith.maximumf %247, %248 : vector<8x64xf32>
    %c1_106 = arith.constant 1 : index
    %c0_107 = arith.constant 0 : index
    %c0_108 = arith.constant 0 : index
    %250 = vector.load %arg7[%c1_106, %c0_107, %c0_108] : memref<2x64x32xf32, #tpu.memory_space<vmem>>, vector<1x64x32xf32>
    %251 = vector.shape_cast %250 : vector<1x64x32xf32> to vector<64x32xf32>
    %cst_109 = arith.constant dense<0.000000e+00> : vector<8x32xf32>
    %252 = tpu.matmul %249, %251, %cst_109 {dimension_numbers = #tpu.dot_dimension_numbers<[1], [0], [0], [1], [0, 0, 1, 1], [], []>} : vector<8x64xf32>, vector<64x32xf32>, vector<8x32xf32> -> vector<8x32xf32>
    %253 = vector.broadcast %144 : vector<1x32xf32> to vector<8x32xf32>
    %254 = arith.addf %252, %253 : vector<8x32xf32>
    %255 = arith.addf %242, %254 : vector<8x32xf32>
    %cst_110 = arith.constant dense<0.000000e+00> : vector<8xf32>
    %256 = vector.multi_reduction <add>, %255, %cst_110 [1] : vector<8x32xf32> to vector<8xf32>
    %257 = vector.shape_cast %256 : vector<8xf32> to vector<8x1xf32>
    %cst_111 = arith.constant 3.200000e+01 : f32
    %258 = vector.broadcast %cst_111 : f32 to vector<8x1xf32>
    %259 = arith.divf %257, %258 : vector<8x1xf32>
    %260 = vector.broadcast %259 : vector<8x1xf32> to vector<8x32xf32>
    %261 = arith.subf %255, %260 : vector<8x32xf32>
    %262 = arith.mulf %261, %261 : vector<8x32xf32>
    %cst_112 = arith.constant dense<0.000000e+00> : vector<8xf32>
    %263 = vector.multi_reduction <add>, %262, %cst_112 [1] : vector<8x32xf32> to vector<8xf32>
    %264 = vector.shape_cast %263 : vector<8xf32> to vector<8x1xf32>
    %cst_113 = arith.constant 3.200000e+01 : f32
    %265 = vector.broadcast %cst_113 : f32 to vector<8x1xf32>
    %266 = arith.divf %264, %265 : vector<8x1xf32>
    %267 = vector.broadcast %259 : vector<8x1xf32> to vector<8x32xf32>
    %268 = arith.subf %255, %267 : vector<8x32xf32>
    %cst_114 = arith.constant 9.99999974E-6 : f32
    %269 = vector.broadcast %cst_114 : f32 to vector<8x1xf32>
    %270 = arith.addf %266, %269 : vector<8x1xf32>
    %271 = math.rsqrt %270 : vector<8x1xf32>
    %272 = vector.broadcast %271 : vector<8x1xf32> to vector<8x32xf32>
    %273 = arith.mulf %268, %272 : vector<8x32xf32>
    %274 = vector.broadcast %147 : vector<1x32xf32> to vector<8x32xf32>
    %275 = arith.mulf %273, %274 : vector<8x32xf32>
    %276 = vector.broadcast %148 : vector<1x32xf32> to vector<8x32xf32>
    %277 = arith.addf %275, %276 : vector<8x32xf32>
    %c16 = arith.constant 16 : index
    %c0_115 = arith.constant 0 : index
    %278 = vector.load %arg8[%c16, %c0_115] : memref<18x64xf32, #tpu.memory_space<vmem>>, vector<1x32xf32>
    %c17 = arith.constant 17 : index
    %c0_116 = arith.constant 0 : index
    %279 = vector.load %arg8[%c17, %c0_116] : memref<18x64xf32, #tpu.memory_space<vmem>>, vector<1x32xf32>
    %cst_117 = arith.constant dense<0.000000e+00> : vector<8xf32>
    %280 = vector.multi_reduction <add>, %277, %cst_117 [1] : vector<8x32xf32> to vector<8xf32>
    %281 = vector.shape_cast %280 : vector<8xf32> to vector<8x1xf32>
    %cst_118 = arith.constant 3.200000e+01 : f32
    %282 = vector.broadcast %cst_118 : f32 to vector<8x1xf32>
    %283 = arith.divf %281, %282 : vector<8x1xf32>
    %284 = vector.broadcast %283 : vector<8x1xf32> to vector<8x32xf32>
    %285 = arith.subf %277, %284 : vector<8x32xf32>
    %286 = arith.mulf %285, %285 : vector<8x32xf32>
    %cst_119 = arith.constant dense<0.000000e+00> : vector<8xf32>
    %287 = vector.multi_reduction <add>, %286, %cst_119 [1] : vector<8x32xf32> to vector<8xf32>
    %288 = vector.shape_cast %287 : vector<8xf32> to vector<8x1xf32>
    %cst_120 = arith.constant 3.200000e+01 : f32
    %289 = vector.broadcast %cst_120 : f32 to vector<8x1xf32>
    %290 = arith.divf %288, %289 : vector<8x1xf32>
    %291 = vector.broadcast %283 : vector<8x1xf32> to vector<8x32xf32>
    %292 = arith.subf %277, %291 : vector<8x32xf32>
    %cst_121 = arith.constant 9.99999974E-6 : f32
    %293 = vector.broadcast %cst_121 : f32 to vector<8x1xf32>
    %294 = arith.addf %290, %293 : vector<8x1xf32>
    %295 = math.rsqrt %294 : vector<8x1xf32>
    %296 = vector.broadcast %295 : vector<8x1xf32> to vector<8x32xf32>
    %297 = arith.mulf %292, %296 : vector<8x32xf32>
    %298 = vector.broadcast %278 : vector<1x32xf32> to vector<8x32xf32>
    %299 = arith.mulf %297, %298 : vector<8x32xf32>
    %300 = vector.broadcast %279 : vector<1x32xf32> to vector<8x32xf32>
    %301 = arith.addf %299, %300 : vector<8x32xf32>
    %c0_122 = arith.constant 0 : index
    %c0_123 = arith.constant 0 : index
    %c0_124 = arith.constant 0 : index
    %302 = vector.load %arg9[%c0_122, %c0_123, %c0_124] : memref<1x8x32xf32, #tpu.memory_space<vmem>>, vector<1x8x32xf32>
    %303 = vector.shape_cast %302 : vector<1x8x32xf32> to vector<8x32xf32>
    %304 = vector.shape_cast %301 : vector<8x32xf32> to vector<1x8x32xf32>
    tpu.vector_store %arg9[%c0_122, %c0_123, %c0_124], %304 {strides = array<i32>} : memref<1x8x32xf32, #tpu.memory_space<vmem>>, vector<1x8x32xf32>,
    return
  }
  func.func @transform_0(%arg0: i32) -> (i32, i32, i32) {
    %c0_i32 = arith.constant 0 : i32
    %c0_i32_0 = arith.constant 0 : i32
    %c0_i32_1 = arith.constant 0 : i32
    return %arg0, %c0_i32, %c0_i32_0 : i32, i32, i32
  }
  func.func @transform_1(%arg0: i32) -> (i32, i32, i32) {
    %c0_i32 = arith.constant 0 : i32
    %c0_i32_0 = arith.constant 0 : i32
    %c0_i32_1 = arith.constant 0 : i32
    return %arg0, %c0_i32, %c0_i32_0 : i32, i32, i32
  }
  func.func @transform_2(%arg0: i32) -> (i32, i32, i32) {
    %c0_i32 = arith.constant 0 : i32
    %c0_i32_0 = arith.constant 0 : i32
    %c0_i32_1 = arith.constant 0 : i32
    %c0_i32_2 = arith.constant 0 : i32
    return %c0_i32, %c0_i32_0, %c0_i32_1 : i32, i32, i32
  }
  func.func @transform_3(%arg0: i32) -> (i32, i32, i32) {
    %c0_i32 = arith.constant 0 : i32
    %c0_i32_0 = arith.constant 0 : i32
    %c0_i32_1 = arith.constant 0 : i32
    %c0_i32_2 = arith.constant 0 : i32
    return %c0_i32, %c0_i32_0, %c0_i32_1 : i32, i32, i32
  }
  func.func @transform_4(%arg0: i32) -> (i32, i32, i32) {
    %c0_i32 = arith.constant 0 : i32
    %c0_i32_0 = arith.constant 0 : i32
    %c0_i32_1 = arith.constant 0 : i32
    %c0_i32_2 = arith.constant 0 : i32
    return %c0_i32, %c0_i32_0, %c0_i32_1 : i32, i32, i32
  }
  func.func @transform_5(%arg0: i32) -> (i32, i32, i32) {
    %c0_i32 = arith.constant 0 : i32
    %c0_i32_0 = arith.constant 0 : i32
    %c0_i32_1 = arith.constant 0 : i32
    %c0_i32_2 = arith.constant 0 : i32
    return %c0_i32, %c0_i32_0, %c0_i32_1 : i32, i32, i32
  }
  func.func @transform_6(%arg0: i32) -> (i32, i32, i32) {
    %c0_i32 = arith.constant 0 : i32
    %c0_i32_0 = arith.constant 0 : i32
    %c0_i32_1 = arith.constant 0 : i32
    %c0_i32_2 = arith.constant 0 : i32
    return %c0_i32, %c0_i32_0, %c0_i32_1 : i32, i32, i32
  }
  func.func @transform_7(%arg0: i32) -> (i32, i32) {
    %c0_i32 = arith.constant 0 : i32
    %c0_i32_0 = arith.constant 0 : i32
    %c0_i32_1 = arith.constant 0 : i32
    return %c0_i32, %c0_i32_0 : i32, i32
  }
  func.func @transform_8(%arg0: i32) -> (i32, i32, i32) {
    %c0_i32 = arith.constant 0 : i32
    %c0_i32_0 = arith.constant 0 : i32
    %c0_i32_1 = arith.constant 0 : i32
    return %arg0, %c0_i32, %c0_i32_0 : i32, i32, i32
  }
}

</mosaic_0001>

<llo_original>
// kernel: tpu_custom_call.1
$region0: #{tpu_custom_call.1}
  #allocation0 [shape = 'u32[]', space=smem, size = 0x4, offset = 0x4, fixed_abs, tag = 'smem constant byte address 0x4 - core index']
  #allocation1 [shape = 'u32[144,128]{1,0:T(1,128)}', space=vmem, size = 0x12000, scoped, tag = 'internal scratch']
  %s0 = inlined_call_operand.hbm [shape: f32[2,8,32], index: 0, kind: input, shape index: {}]
  %s1 = inlined_call_operand.hbm [shape: f32[2,8,32], index: 1, kind: input, shape index: {}]
  %s2 = inlined_call_operand.vmem [shape: f32[2,32,64], index: 2, kind: input, shape index: {}]
  %s3 = inlined_call_operand.vmem [shape: f32[2,32,32], index: 3, kind: input, shape index: {}]
  %s4 = inlined_call_operand.vmem [shape: f32[2,32,32], index: 4, kind: input, shape index: {}]
  %s5 = inlined_call_operand.hbm [shape: f32[2,32,64], index: 5, kind: input, shape index: {}]
  %s6 = inlined_call_operand.vmem [shape: f32[2,64,32], index: 6, kind: input, shape index: {}]
  %s7 = inlined_call_operand.hbm [shape: f32[18,64], index: 7, kind: input, shape index: {}]
  %s8 = inlined_call_operand.hbm [shape: f32[2,8,32], index: 8, kind: output, shape index: {}]
  %s9 = sld [smem:[#allocation0]]
  $region81: #{tpu_custom_call.1} parent=0
    _
  %s11 = ssub.s32 1, %s9
  %s12 = scalar_select 0, %s11, %s9
  $region1: #{tpu_custom_call.1} parent=0
    #allocation2 [shape = 'u8[8192]{0}', space=vmem, size = 0x2000, scoped, tag = 'input window, operand 0']
    #allocation3 [shape = 's32[2]{0}', space=sflag, size = 0x8, scoped, tag = 'scoped memory for tpu_custom_call.1']
    #allocation4 [shape = 's32[2]{0}', space=sflag, size = 0x8, scoped, tag = 'scoped memory for tpu_custom_call.1']
    #allocation5 [shape = 'u8[8192]{0}', space=vmem, size = 0x2000, scoped, tag = 'input window, operand 1']
    #allocation6 [shape = 's32[2]{0}', space=sflag, size = 0x8, scoped, tag = 'scoped memory for tpu_custom_call.1']
    #allocation7 [shape = 'u8[32768]{0}', space=vmem, size = 0x8000, scoped, tag = 'input window, operand 5, single buffered']
    #allocation8 [shape = 'u8[12288]{0}', space=vmem, size = 0x3000, scoped, tag = 'input window, operand 7, single buffered']
    #allocation9 [shape = 's32[1]{0}', space=sflag, size = 0x4, scoped, tag = 'scoped memory for tpu_custom_call.1']
    #allocation10 [shape = 'u8[8192]{0}', space=vmem, size = 0x2000, scoped, tag = 'output window, operand 0']
    %13 = vsyncpa [#allocation3], 0
    %s14 = scalar_lea.sflag [#allocation3], 1
    %15 = vsyncpa %s14, 0
    %16 = vsyncpa [#allocation6], 0
    %s17 = scalar_lea.sflag [#allocation6], 1
    %18 = vsyncpa %s17, 0
    %19 = vsyncpa [#allocation9], 0
    %20 = vsyncpa [#allocation4], 0
    %s21 = scalar_lea.sflag [#allocation4], 1
    %22 = vsyncpa %s21, 0
    loop: start=0, step=1, limit=4
    $region2: #{tpu_custom_call.1} parent=1 // loop_pre_header
      _
    $region3: #{tpu_custom_call.1} parent=1 // loop_header
      %s24 = sphi 0, %s28
      %p25 = scmp.ge.s32.totalorder %s24, 4
      %s34 = sphi 0, %s36
      %s37 = sphi 0, %s34
      %s38 = sphi 0, %s37
      %s54 = sphi 0, %s38
      %s60 = sphi 0, %s62
      %s63 = sphi 0, %s60
      %s64 = sphi 0, %s63
      %s80 = sphi 0, %s64
      %s84 = sphi 0, %s84
      %s86 = sphi 0, %s84
      %s87 = sphi 0, %s86
      %s101 = sphi 0, %s87
      %s105 = sphi 0, %s105
      %s107 = sphi 0, %s105
      %s108 = sphi 0, %s107
      %s122 = sphi 0, %s108
      %s126 = sphi 0, %s126
      %s128 = sphi 0, %s126
      %s129 = sphi 0, %s128
      %s143 = sphi 0, %s129
      %s147 = sphi 0, %s147
      %s149 = sphi 0, %s147
      %s150 = sphi 0, %s149
      %s164 = sphi 0, %s150
      %s168 = sphi 0, %s168
      %s170 = sphi 0, %s168
      %s171 = sphi 0, %s170
      %s185 = sphi 0, %s171
      %s189 = sphi 0, %s189
      %s191 = sphi 0, %s189
      %s192 = sphi 0, %s191
      %s206 = sphi 0, %s192
      %s212 = sphi 0, %s214
      %s215 = sphi 0, %s212
      %s216 = sphi 0, %s215
      %s232 = sphi 0, %s216
    $region4: #{tpu_custom_call.1} parent=1 // loop_header_branch
      %27 = sbr.rel (%p25) target = $region8
    $region5: #{tpu_custom_call.1} parent=1 // loop_body
      %s29 = ssub.s32 %s24, 1
      %s30 = ssub.s32 %s24, 2
      %s31 = sadd.s32 %s24, 1
      %s32 = ssub.s32 %s24, %s31
      %p33 = scmp.eq.s32.totalorder %s32, 0
      %s35 = sadd.s32 %s34, 1
      %s36 = scalar_select %p33, %s34, %s35
      %p39 = pneg %p33
      %p40 = scmp.eq.s32.totalorder %s24, 1
      %p41 = por %p39, %p40
      %p42 = scmp.ne.s32.totalorder %s34, %s37
      %p43 = scmp.eq.s32.totalorder %s24, 0
      %p44 = por %p42, %p43
      %p45 = scmp.ne.s32.totalorder %s34, %s37
      %p46 = scmp.eq.s32.totalorder %s29, 1
      %p47 = por %p45, %p46
      %p48 = scmp.ne.s32.totalorder %s37, %s38
      %p49 = scmp.eq.s32.totalorder %s29, 0
      %p50 = por %p48, %p49
      %p51 = scmp.ne.s32.totalorder %s37, %s38
      %p52 = scmp.eq.s32.totalorder %s30, 1
      %p53 = por %p51, %p52
      %p55 = scmp.ne.s32.totalorder %s38, %s54
      %p56 = scmp.eq.s32.totalorder %s30, 0
      %p57 = por %p55, %p56
      %s58 = ssub.s32 %s24, %s31
      %p59 = scmp.eq.s32.totalorder %s58, 0
      %s61 = sadd.s32 %s60, 1
      %s62 = scalar_select %p59, %s60, %s61
      %p65 = pneg %p59
      %p66 = scmp.eq.s32.totalorder %s24, 1
      %p67 = por %p65, %p66
      %p68 = scmp.ne.s32.totalorder %s60, %s63
      %p69 = scmp.eq.s32.totalorder %s24, 0
      %p70 = por %p68, %p69
      %p71 = scmp.ne.s32.totalorder %s60, %s63
      %p72 = scmp.eq.s32.totalorder %s29, 1
      %p73 = por %p71, %p72
      %p74 = scmp.ne.s32.totalorder %s63, %s64
      %p75 = scmp.eq.s32.totalorder %s29, 0
      %p76 = por %p74, %p75
      %p77 = scmp.ne.s32.totalorder %s63, %s64
      %p78 = scmp.eq.s32.totalorder %s30, 1
      %p79 = por %p77, %p78
      %p81 = scmp.ne.s32.totalorder %s64, %s80
      %p82 = scmp.eq.s32.totalorder %s30, 0
      %p83 = por %p81, %p82
      %s85 = sadd.s32 %s84, 1
      %p88 = scmp.eq.s32.totalorder %s24, 1
      %p89 = scmp.ne.s32.totalorder %s84, %s86
      %p90 = scmp.eq.s32.totalorder %s24, 0
      %p91 = por %p89, %p90
      %p92 = scmp.ne.s32.totalorder %s84, %s86
      %p93 = scmp.eq.s32.totalorder %s29, 1
      %p94 = por %p92, %p93
      %p95 = scmp.ne.s32.totalorder %s86, %s87
      %p96 = scmp.eq.s32.totalorder %s29, 0
      %p97 = por %p95, %p96
      %p98 = scmp.ne.s32.totalorder %s86, %s87
      %p99 = scmp.eq.s32.totalorder %s30, 1
      %p100 = por %p98, %p99
      %p102 = scmp.ne.s32.totalorder %s87, %s101
      %p103 = scmp.eq.s32.totalorder %s30, 0
      %p104 = por %p102, %p103
      %s106 = sadd.s32 %s105, 1
      %p109 = scmp.eq.s32.totalorder %s24, 1
      %p110 = scmp.ne.s32.totalorder %s105, %s107
      %p111 = scmp.eq.s32.totalorder %s24, 0
      %p112 = por %p110, %p111
      %p113 = scmp.ne.s32.totalorder %s105, %s107
      %p114 = scmp.eq.s32.totalorder %s29, 1
      %p115 = por %p113, %p114
      %p116 = scmp.ne.s32.totalorder %s107, %s108
      %p117 = scmp.eq.s32.totalorder %s29, 0
      %p118 = por %p116, %p117
      %p119 = scmp.ne.s32.totalorder %s107, %s108
      %p120 = scmp.eq.s32.totalorder %s30, 1
      %p121 = por %p119, %p120
      %p123 = scmp.ne.s32.totalorder %s108, %s122
      %p124 = scmp.eq.s32.totalorder %s30, 0
      %p125 = por %p123, %p124
      %s127 = sadd.s32 %s126, 1
      %p130 = scmp.eq.s32.totalorder %s24, 1
      %p131 = scmp.ne.s32.totalorder %s126, %s128
      %p132 = scmp.eq.s32.totalorder %s24, 0
      %p133 = por %p131, %p132
      %p134 = scmp.ne.s32.totalorder %s126, %s128
      %p135 = scmp.eq.s32.totalorder %s29, 1
      %p136 = por %p134, %p135
      %p137 = scmp.ne.s32.totalorder %s128, %s129
      %p138 = scmp.eq.s32.totalorder %s29, 0
      %p139 = por %p137, %p138
      %p140 = scmp.ne.s32.totalorder %s128, %s129
      %p141 = scmp.eq.s32.totalorder %s30, 1
      %p142 = por %p140, %p141
      %p144 = scmp.ne.s32.totalorder %s129, %s143
      %p145 = scmp.eq.s32.totalorder %s30, 0
      %p146 = por %p144, %p145
      %s148 = sadd.s32 %s147, 1
      %p151 = scmp.eq.s32.totalorder %s24, 1
      %p152 = scmp.ne.s32.totalorder %s147, %s149
      %p153 = scmp.eq.s32.totalorder %s24, 0
      %p154 = por %p152, %p153
      %p155 = scmp.ne.s32.totalorder %s147, %s149
      %p156 = scmp.eq.s32.totalorder %s29, 1
      %p157 = por %p155, %p156
      %p158 = scmp.ne.s32.totalorder %s149, %s150
      %p159 = scmp.eq.s32.totalorder %s29, 0
      %p160 = por %p158, %p159
      %p161 = scmp.ne.s32.totalorder %s149, %s150
      %p162 = scmp.eq.s32.totalorder %s30, 1
      %p163 = por %p161, %p162
      %p165 = scmp.ne.s32.totalorder %s150, %s164
      %p166 = scmp.eq.s32.totalorder %s30, 0
      %p167 = por %p165, %p166
      %s169 = sadd.s32 %s168, 1
      %p172 = scmp.eq.s32.totalorder %s24, 1
      %p173 = scmp.ne.s32.totalorder %s168, %s170
      %p174 = scmp.eq.s32.totalorder %s24, 0
      %p175 = por %p173, %p174
      %p176 = scmp.ne.s32.totalorder %s168, %s170
      %p177 = scmp.eq.s32.totalorder %s29, 1
      %p178 = por %p176, %p177
      %p179 = scmp.ne.s32.totalorder %s170, %s171
      %p180 = scmp.eq.s32.totalorder %s29, 0
      %p181 = por %p179, %p180
      %p182 = scmp.ne.s32.totalorder %s170, %s171
      %p183 = scmp.eq.s32.totalorder %s30, 1
      %p184 = por %p182, %p183
      %p186 = scmp.ne.s32.totalorder %s171, %s185
      %p187 = scmp.eq.s32.totalorder %s30, 0
      %p188 = por %p186, %p187
      %s190 = sadd.s32 %s189, 1
      %p193 = scmp.eq.s32.totalorder %s24, 1
      %p194 = scmp.ne.s32.totalorder %s189, %s191
      %p195 = scmp.eq.s32.totalorder %s24, 0
      %p196 = por %p194, %p195
      %p197 = scmp.ne.s32.totalorder %s189, %s191
      %p198 = scmp.eq.s32.totalorder %s29, 1
      %p199 = por %p197, %p198
      %p200 = scmp.ne.s32.totalorder %s191, %s192
      %p201 = scmp.eq.s32.totalorder %s29, 0
      %p202 = por %p200, %p201
      %p203 = scmp.ne.s32.totalorder %s191, %s192
      %p204 = scmp.eq.s32.totalorder %s30, 1
      %p205 = por %p203, %p204
      %p207 = scmp.ne.s32.totalorder %s192, %s206
      %p208 = scmp.eq.s32.totalorder %s30, 0
      %p209 = por %p207, %p208
      %s210 = ssub.s32 %s24, %s31
      %p211 = scmp.eq.s32.totalorder %s210, 0
      %s213 = sadd.s32 %s212, 1
      %s214 = scalar_select %p211, %s212, %s213
      %p217 = pneg %p211
      %p218 = scmp.eq.s32.totalorder %s24, 1
      %p219 = por %p217, %p218
      %p220 = scmp.ne.s32.totalorder %s212, %s215
      %p221 = scmp.eq.s32.totalorder %s24, 0
      %p222 = por %p220, %p221
      %p223 = scmp.ne.s32.totalorder %s212, %s215
      %p224 = scmp.eq.s32.totalorder %s29, 1
      %p225 = por %p223, %p224
      %p226 = scmp.ne.s32.totalorder %s215, %s216
      %p227 = scmp.eq.s32.totalorder %s29, 0
      %p228 = por %p226, %p227
      %p229 = scmp.ne.s32.totalorder %s215, %s216
      %p230 = scmp.eq.s32.totalorder %s30, 1
      %p231 = por %p229, %p230
      %p233 = scmp.ne.s32.totalorder %s216, %s232
      %p234 = scmp.eq.s32.totalorder %s30, 0
      %p235 = por %p233, %p234
      %p236 = scmp.le.s32.totalorder 1, %s24
      %p237 = scmp.lt.s32.totalorder %s24, 3
      %p238 = pnand %p236, %p237
      %p239 = pneg %p238
      // Predicated region
      $region9: #{tpu_custom_call.1} parent=5 // pred_check
        _
      $region10: #{tpu_custom_call.1} parent=5 // pred_check_branch
        %241 = sbr.rel (%p238) target = $region12
      $region11: #{tpu_custom_call.1} parent=5 // pred_region
        %s242 = ssub.s32 %s24, 1
        // Predicated region
        $region13: #{tpu_custom_call.1} parent=11 // pred_check
          %p243 = pneg %p97
        $region14: #{tpu_custom_call.1} parent=11 // pred_check_branch
          %245 = sbr.rel (%p243) target = $region16
        $region15: #{tpu_custom_call.1} parent=11 // pred_region
          _
        $region16: #{tpu_custom_call.1} parent=11 // pred_fallthru
          _
        // Predicated region
        $region17: #{tpu_custom_call.1} parent=11 // pred_check
          %p246 = pneg %p118
        $region18: #{tpu_custom_call.1} parent=11 // pred_check_branch
          %248 = sbr.rel (%p246) target = $region20
        $region19: #{tpu_custom_call.1} parent=11 // pred_region
          _
        $region20: #{tpu_custom_call.1} parent=11 // pred_fallthru
          _
        // Predicated region
        $region21: #{tpu_custom_call.1} parent=11 // pred_check
          %p249 = pneg %p139
        $region22: #{tpu_custom_call.1} parent=11 // pred_check_branch
          %251 = sbr.rel (%p249) target = $region24
        $region23: #{tpu_custom_call.1} parent=11 // pred_region
          _
        $region24: #{tpu_custom_call.1} parent=11 // pred_fallthru
          _
        // Predicated region
        $region25: #{tpu_custom_call.1} parent=11 // pred_check
          %p252 = pneg %p160
        $region26: #{tpu_custom_call.1} parent=11 // pred_check_branch
          %254 = sbr.rel (%p252) target = $region28
        $region27: #{tpu_custom_call.1} parent=11 // pred_region
          %s256 = ssub.s32 1024, 1024
          %257 = vsyncadd [#allocation6], %s256
          %s258 = sshll.u32 [#allocation7], 4
          %s259 = int_to_ptr.vmem [resolvable:$true] %s258
          %264 = dma.hbm_to_vmem [thread:$0]  %s5, 1024, %s259, [#allocation6], 128, 128, 8
        $region28: #{tpu_custom_call.1} parent=11 // pred_fallthru
          _
        // Predicated region
        $region29: #{tpu_custom_call.1} parent=11 // pred_check
          %p265 = pneg %p181
        $region30: #{tpu_custom_call.1} parent=11 // pred_check_branch
          %267 = sbr.rel (%p265) target = $region32
        $region31: #{tpu_custom_call.1} parent=11 // pred_region
          _
        $region32: #{tpu_custom_call.1} parent=11 // pred_fallthru
          _
        // Predicated region
        $region33: #{tpu_custom_call.1} parent=11 // pred_check
          %p268 = pneg %p202
        $region34: #{tpu_custom_call.1} parent=11 // pred_check_branch
          %270 = sbr.rel (%p268) target = $region36
        $region35: #{tpu_custom_call.1} parent=11 // pred_region
          %s272 = ssub.s32 384, 384
          %273 = vsyncadd [#allocation9], %s272
          %s274 = sshll.u32 [#allocation8], 4
          %s275 = int_to_ptr.vmem [resolvable:$true] %s274
          %280 = dma.hbm_to_vmem [thread:$0]  %s7, 384, %s275, [#allocation9], 128, 128, 8
        $region36: #{tpu_custom_call.1} parent=11 // pred_fallthru
          _
      $region12: #{tpu_custom_call.1} parent=5 // pred_fallthru
        _
      %p281 = scmp.lt.s32.totalorder %s24, 2
      // Predicated region
      $region37: #{tpu_custom_call.1} parent=5 // pred_check
        %p282 = pneg %p281
      $region38: #{tpu_custom_call.1} parent=5 // pred_check_branch
        %284 = sbr.rel (%p282) target = $region40
      $region39: #{tpu_custom_call.1} parent=5 // pred_region
        // Predicated region
        $region41: #{tpu_custom_call.1} parent=39 // pred_check
          %p285 = pneg %p44
        $region42: #{tpu_custom_call.1} parent=39 // pred_check_branch
          %287 = sbr.rel (%p285) target = $region44
        $region43: #{tpu_custom_call.1} parent=39 // pred_region
          %s288 = sand.u32 %s34, 1
          %s289 = scalar_lea.sflag [#allocation3], %s288
          %s290 = sand.u32 %s34, 1
          %s291 = smul.addr %s290, 8
          %s292 = scalar_lea.vmem [#allocation2], %s291
          %s294 = ssub.s32 128, 128
          %295 = vsyncadd %s289, %s294
          %s296 = smul.addr %s24, 128
          %s297 = scalar_lea.hbm %s0, %s296
          %s299 = sshll.u32 %s292, 4
          %s300 = int_to_ptr.vmem [resolvable:$true] %s299
          %302 = dma.hbm_to_vmem [thread:$0]  %s297, 128, %s300, %s289
        $region44: #{tpu_custom_call.1} parent=39 // pred_fallthru
          _
        // Predicated region
        $region45: #{tpu_custom_call.1} parent=39 // pred_check
          %p303 = pneg %p70
        $region46: #{tpu_custom_call.1} parent=39 // pred_check_branch
          %305 = sbr.rel (%p303) target = $region48
        $region47: #{tpu_custom_call.1} parent=39 // pred_region
          %s306 = sand.u32 %s24, 1
          %s307 = scalar_lea.sflag [#allocation6], %s306
          %s308 = sand.u32 %s60, 1
          %s309 = smul.addr %s308, 8
          %s310 = scalar_lea.vmem [#allocation5], %s309
          %s312 = ssub.s32 128, 128
          %313 = vsyncadd %s307, %s312
          %s314 = smul.addr %s24, 128
          %s315 = scalar_lea.hbm %s1, %s314
          %s317 = sshll.u32 %s310, 4
          %s318 = int_to_ptr.vmem [resolvable:$true] %s317
          %320 = dma.hbm_to_vmem [thread:$0]  %s315, 128, %s318, %s307
        $region48: #{tpu_custom_call.1} parent=39 // pred_fallthru
          _
      $region40: #{tpu_custom_call.1} parent=5 // pred_fallthru
        _
      %p321 = scmp.le.s32.totalorder 1, %s24
      %p322 = scmp.lt.s32.totalorder %s24, 3
      %p323 = pnand %p321, %p322
      %p324 = pneg %p323
      // Predicated region
      $region49: #{tpu_custom_call.1} parent=5 // pred_check
        _
      $region50: #{tpu_custom_call.1} parent=5 // pred_check_branch
        %326 = sbr.rel (%p323) target = $region52
      $region51: #{tpu_custom_call.1} parent=5 // pred_region
        %s327 = ssub.s32 %s24, 1
        %s328 = sand.u32 %s37, 1
        %s329 = scalar_lea.sflag [#allocation3], %s328
        %s330 = sand.u32 %s37, 1
        %s331 = smul.addr %s330, 8
        %s332 = scalar_lea.vmem [#allocation2], %s331
        // Predicated region
        $region53: #{tpu_custom_call.1} parent=51 // pred_check
          %p333 = pneg %p50
        $region54: #{tpu_custom_call.1} parent=51 // pred_check_branch
          %335 = sbr.rel (%p333) target = $region56
        $region55: #{tpu_custom_call.1} parent=51 // pred_region
          %336 = dma.done %s329, 128
        $region56: #{tpu_custom_call.1} parent=51 // pred_fallthru
          _
        %s337 = sand.u32 %s29, 1
        %s338 = scalar_lea.sflag [#allocation6], %s337
        %s339 = sand.u32 %s63, 1
        %s340 = smul.addr %s339, 8
        %s341 = scalar_lea.vmem [#allocation5], %s340
        // Predicated region
        $region57: #{tpu_custom_call.1} parent=51 // pred_check
          %p342 = pneg %p76
        $region58: #{tpu_custom_call.1} parent=51 // pred_check_branch
          %344 = sbr.rel (%p342) target = $region60
        $region59: #{tpu_custom_call.1} parent=51 // pred_region
          %345 = dma.done %s338, 128
        $region60: #{tpu_custom_call.1} parent=51 // pred_fallthru
          _
        // Predicated region
        $region61: #{tpu_custom_call.1} parent=51 // pred_check
          %p346 = pneg %p160
        $region62: #{tpu_custom_call.1} parent=51 // pred_check_branch
          %348 = sbr.rel (%p346) target = $region64
        $region63: #{tpu_custom_call.1} parent=51 // pred_region
          %349 = dma.done [#allocation6], 1024
        $region64: #{tpu_custom_call.1} parent=51 // pred_fallthru
          _
        // Predicated region
        $region65: #{tpu_custom_call.1} parent=51 // pred_check
          %p350 = pneg %p202
        $region66: #{tpu_custom_call.1} parent=51 // pred_check_branch
          %352 = sbr.rel (%p350) target = $region68
        $region67: #{tpu_custom_call.1} parent=51 // pred_region
          %353 = dma.done [#allocation9], 384
        $region68: #{tpu_custom_call.1} parent=51 // pred_fallthru
          _
        %s354 = sand.u32 %s37, 1
        %s355 = scalar_lea.sflag [#allocation3], %s354
        %s356 = sand.u32 %s37, 1
        %s357 = smul.addr %s356, 8
        %s358 = scalar_lea.vmem [#allocation2], %s357
        %p359 = pneg %p50
        %p360 = pneg %p47
        %s361 = sand.u32 %s29, 1
        %s362 = scalar_lea.sflag [#allocation6], %s361
        %s363 = sand.u32 %s63, 1
        %s364 = smul.addr %s363, 8
        %s365 = scalar_lea.vmem [#allocation5], %s364
        %p366 = pneg %p76
        %p367 = pneg %p73
        %p368 = pneg %p97
        %p369 = pneg %p94
        %p370 = pneg %p118
        %p371 = pneg %p115
        %p372 = pneg %p139
        %p373 = pneg %p136
        %p374 = pneg %p160
        %p375 = pneg %p157
        %p376 = pneg %p181
        %p377 = pneg %p178
        %p378 = pneg %p202
        %p379 = pneg %p199
        %p380 = pneg %p228
        %p381 = pneg %p225
        %s382 = sand.u32 %s215, 1
        %s383 = scalar_lea.sflag [#allocation4], %s382
        %s384 = sand.u32 %s215, 1
        %s385 = smul.addr %s384, 8
        %s386 = scalar_lea.vmem [#allocation10], %s385
        %v387 = vld [vmem:[%s332] sm:$0xff]
        %v388 = vld [vmem:[%s341] sm:$0xff]
        %v389 = vld [vmem:[#allocation8] sm:$0x1]
        %v390 = vld [vmem:[#allocation8 + $0x1] sm:$0x1]
        %v391 = vld [vmem:[#allocation8 + $0x2] sm:$0x1]
        %v392 = vld [vmem:[#allocation8 + $0x3] sm:$0x1]
        %v393 = vld [vmem:[#allocation8 + $0x4] sm:$0x1]
        %v394 = vld [vmem:[#allocation8 + $0x5] sm:$0x1]
        %v395 = vld [vmem:[#allocation8 + $0x6] sm:$0x1]
        %v396 = vld [vmem:[#allocation8 + $0x7] sm:$0x1]
        %v397 = vadd.f32 %v387, %v388
        %v398 = vld [vmem:[%s2] sm:$0xff]
        %v399 = vld [vmem:[%s2 + $0x8] sm:$0xff]
        %v400 = vld [vmem:[%s2 + $0x10] sm:$0xff]
        %v401 = vld [vmem:[%s2 + $0x18] sm:$0xff]
        %v402 = vlaneseq
        %v403 = vshrl.u32 %v402, 7
        %v404 = vsub.s32 0, %v403
        %v405 = vrot.slane %v389, %v404
        %vm406 = vcmask 261120
        %v408 = vsel %vm406, %v397, 0
        %410 = vmatprep.subr.mxu0 0.0
        %411 = vmatpush1.msra.mxu0 0.0
        %412 = vmatprep.subr.mxu0 0.0
        %413 = vmatpush1.msra.mxu0 0.0
        %414 = vmatprep.subr.mxu0 0.0
        %415 = vmatpush1.msra.mxu0 0.0
        %416 = vmatprep.subr.mxu0 0.0
        %417 = vmatpush1.msra.mxu0 0.0
        %418 = vmatprep.subr.mxu0 0.0
        %419 = vmatpush1.msra.mxu0 0.0
        %420 = vmatprep.subr.mxu0 0.0
        %421 = vmatpush1.msra.mxu0 0.0
        %422 = vmatprep.subr.mxu0 0.0
        %423 = vmatpush1.msra.mxu0 0.0
        %424 = vmatprep.subr.mxu0 0.0
        %425 = vmatpush1.msra.mxu0 0.0
        %426 = vmatprep.subr.mxu0 0.0
        %427 = vmatpush1.msra.mxu0 0.0
        %428 = vmatprep.subr.mxu0 0.0
        %429 = vmatpush1.msra.mxu0 0.0
        %430 = vmatprep.subr.mxu0 0.0
        %431 = vmatpush1.msra.mxu0 0.0
        %432 = vmatprep.subr.mxu0 0.0
        %433 = vmatpush1.msra.mxu0 0.0
        %434 = vmatprep.subr.mxu0 0.0
        %435 = vmatpush1.msra.mxu0 %v401
        %436 = vmatprep.subr.mxu0 0.0
        %437 = vmatpush1.msra.mxu0 %v400
        %438 = vmatprep.subr.mxu0 0.0
        %439 = vmatpush1.msra.mxu0 %v399
        %440 = vmatprep.subr.mxu0 0.0
        %441 = vmatpush1.msra.mxu0 %v398
        %442 = vmatprep.subr.mxu0 0.0
        %443 = vmatpush2.msra.mxu0 0.0
        %444 = vmatprep.subr.mxu0 0.0
        %445 = vmatpush2.msra.mxu0 0.0
        %446 = vmatprep.subr.mxu0 0.0
        %447 = vmatpush2.msra.mxu0 0.0
        %448 = vmatprep.subr.mxu0 0.0
        %449 = vmatpush2.msra.mxu0 0.0
        %450 = vmatprep.subr.mxu0 0.0
        %451 = vmatpush2.msra.mxu0 0.0
        %452 = vmatprep.subr.mxu0 0.0
        %453 = vmatpush2.msra.mxu0 0.0
        %454 = vmatprep.subr.mxu0 0.0
        %455 = vmatpush2.msra.mxu0 0.0
        %456 = vmatprep.subr.mxu0 0.0
        %457 = vmatpush2.msra.mxu0 0.0
        %458 = vmatprep.subr.mxu0 0.0
        %459 = vmatpush2.msra.mxu0 0.0
        %460 = vmatprep.subr.mxu0 0.0
        %461 = vmatpush2.msra.mxu0 0.0
        %462 = vmatprep.subr.mxu0 0.0
        %463 = vmatpush2.msra.mxu0 0.0
        %464 = vmatprep.subr.mxu0 0.0
        %465 = vmatpush2.msra.mxu0 0.0
        %466 = vmatprep.subr.mxu0 0.0
        %467 = vmatpush2.msra.mxu0 0.0
        %468 = vmatprep.subr.mxu0 0.0
        %469 = vmatpush2.msra.mxu0 0.0
        %470 = vmatprep.subr.mxu0 0.0
        %471 = vmatpush2.msra.mxu0 0.0
        %472 = vmatprep.subr.mxu0 0.0
        %473 = vmatpush2.msra.mxu0 0.0
        %474 = vmatprep.mubr.f32.mxu0 0.0
        %475 = vmatmul.mubr.f32.gmra.mxu0 %v408
        %v476 = vpop.f32.mrf.mxu0
        %v477 = vadd.f32 %v405, %v476
        %v478 = vpop.f32.mrf.mxu0
        %479 = vdwg.mxu0
        %v480 = vld [vmem:[%s3] sm:$0xff]
        %v481 = vld [vmem:[%s3 + $0x8] sm:$0xff]
        %v482 = vld [vmem:[%s3 + $0x10] sm:$0xff]
        %v483 = vld [vmem:[%s3 + $0x18] sm:$0xff]
        %v485 = vsel %vm406, %v387, 0
        %487 = vmatprep.subr.mxu0 0.0
        %488 = vmatpush1.msra.mxu0 0.0
        %489 = vmatprep.subr.mxu0 0.0
        %490 = vmatpush1.msra.mxu0 0.0
        %491 = vmatprep.subr.mxu0 0.0
        %492 = vmatpush1.msra.mxu0 0.0
        %493 = vmatprep.subr.mxu0 0.0
        %494 = vmatpush1.msra.mxu0 0.0
        %495 = vmatprep.subr.mxu0 0.0
        %496 = vmatpush1.msra.mxu0 0.0
        %497 = vmatprep.subr.mxu0 0.0
        %498 = vmatpush1.msra.mxu0 0.0
        %499 = vmatprep.subr.mxu0 0.0
        %500 = vmatpush1.msra.mxu0 0.0
        %501 = vmatprep.subr.mxu0 0.0
        %502 = vmatpush1.msra.mxu0 0.0
        %503 = vmatprep.subr.mxu0 0.0
        %504 = vmatpush1.msra.mxu0 0.0
        %505 = vmatprep.subr.mxu0 0.0
        %506 = vmatpush1.msra.mxu0 0.0
        %507 = vmatprep.subr.mxu0 0.0
        %508 = vmatpush1.msra.mxu0 0.0
        %509 = vmatprep.subr.mxu0 0.0
        %510 = vmatpush1.msra.mxu0 0.0
        %511 = vmatprep.subr.mxu0 0.0
        %512 = vmatpush1.msra.mxu0 %v483
        %513 = vmatprep.subr.mxu0 0.0
        %514 = vmatpush1.msra.mxu0 %v482
        %515 = vmatprep.subr.mxu0 0.0
        %516 = vmatpush1.msra.mxu0 %v481
        %517 = vmatprep.subr.mxu0 0.0
        %518 = vmatpush1.msra.mxu0 %v480
        %519 = vmatprep.subr.mxu0 0.0
        %520 = vmatpush2.msra.mxu0 0.0
        %521 = vmatprep.subr.mxu0 0.0
        %522 = vmatpush2.msra.mxu0 0.0
        %523 = vmatprep.subr.mxu0 0.0
        %524 = vmatpush2.msra.mxu0 0.0
        %525 = vmatprep.subr.mxu0 0.0
        %526 = vmatpush2.msra.mxu0 0.0
        %527 = vmatprep.subr.mxu0 0.0
        %528 = vmatpush2.msra.mxu0 0.0
        %529 = vmatprep.subr.mxu0 0.0
        %530 = vmatpush2.msra.mxu0 0.0
        %531 = vmatprep.subr.mxu0 0.0
        %532 = vmatpush2.msra.mxu0 0.0
        %533 = vmatprep.subr.mxu0 0.0
        %534 = vmatpush2.msra.mxu0 0.0
        %535 = vmatprep.subr.mxu0 0.0
        %536 = vmatpush2.msra.mxu0 0.0
        %537 = vmatprep.subr.mxu0 0.0
        %538 = vmatpush2.msra.mxu0 0.0
        %539 = vmatprep.subr.mxu0 0.0
        %540 = vmatpush2.msra.mxu0 0.0
        %541 = vmatprep.subr.mxu0 0.0
        %542 = vmatpush2.msra.mxu0 0.0
        %543 = vmatprep.subr.mxu0 0.0
        %544 = vmatpush2.msra.mxu0 0.0
        %545 = vmatprep.subr.mxu0 0.0
        %546 = vmatpush2.msra.mxu0 0.0
        %547 = vmatprep.subr.mxu0 0.0
        %548 = vmatpush2.msra.mxu0 0.0
        %549 = vmatprep.subr.mxu0 0.0
        %550 = vmatpush2.msra.mxu0 0.0
        %551 = vmatprep.mubr.f32.mxu0 0.0
        %552 = vmatmul.mubr.f32.gmra.mxu0 %v485
        %v553 = vpop.f32.mrf.mxu0
        %v554 = vadd.f32 0.0, %v553
        %v555 = vpop.f32.mrf.mxu0
        %556 = vdwg.mxu0
        %558 = vrot.lane.b32.xlu0 %v477, 96
        %v559 = vpop.permute.xlu0 %558
        %vm560 = vcmask 64512
        %v561 = vsel %vm560, %v477, 0
        %v563 = vsel %vm560, %v559, 0
        %565 = vmatprep.subr.mxu0 0.0
        %566 = vmatpush1.xpose.msra.mxu0 0.0
        %567 = vmatprep.subr.mxu0 0.0
        %568 = vmatpush1.xpose.msra.mxu0 0.0
        %569 = vmatprep.subr.mxu0 0.0
        %570 = vmatpush1.xpose.msra.mxu0 0.0
        %571 = vmatprep.subr.mxu0 0.0
        %572 = vmatpush1.xpose.msra.mxu0 0.0
        %573 = vmatprep.subr.mxu0 0.0
        %574 = vmatpush1.xpose.msra.mxu0 0.0
        %575 = vmatprep.subr.mxu0 0.0
        %576 = vmatpush1.xpose.msra.mxu0 0.0
        %577 = vmatprep.subr.mxu0 0.0
        %578 = vmatpush1.xpose.msra.mxu0 0.0
        %579 = vmatprep.subr.mxu0 0.0
        %580 = vmatpush1.xpose.msra.mxu0 0.0
        %581 = vmatprep.subr.mxu0 0.0
        %582 = vmatpush1.xpose.msra.mxu0 0.0
        %583 = vmatprep.subr.mxu0 0.0
        %584 = vmatpush1.xpose.msra.mxu0 0.0
        %585 = vmatprep.subr.mxu0 0.0
        %586 = vmatpush1.xpose.msra.mxu0 0.0
        %587 = vmatprep.subr.mxu0 0.0
        %588 = vmatpush1.xpose.msra.mxu0 0.0
        %589 = vmatprep.subr.mxu0 0.0
        %590 = vmatpush1.xpose.msra.mxu0 0.0
        %591 = vmatprep.subr.mxu0 0.0
        %592 = vmatpush1.xpose.msra.mxu0 0.0
        %593 = vmatprep.subr.mxu0 0.0
        %594 = vmatpush1.xpose.msra.mxu0 0.0
        %595 = vmatprep.subr.mxu0 0.0
        %596 = vmatpush1.xpose.msra.mxu0 %v563
        %597 = vmatprep.subr.mxu0 0.0
        %598 = vmatpush2.xpose.msra.mxu0 0.0
        %599 = vmatprep.subr.mxu0 0.0
        %600 = vmatpush2.xpose.msra.mxu0 0.0
        %601 = vmatprep.subr.mxu0 0.0
        %602 = vmatpush2.xpose.msra.mxu0 0.0
        %603 = vmatprep.subr.mxu0 0.0
        %604 = vmatpush2.xpose.msra.mxu0 0.0
        %605 = vmatprep.subr.mxu0 0.0
        %606 = vmatpush2.xpose.msra.mxu0 0.0
        %607 = vmatprep.subr.mxu0 0.0
        %608 = vmatpush2.xpose.msra.mxu0 0.0
        %609 = vmatprep.subr.mxu0 0.0
        %610 = vmatpush2.xpose.msra.mxu0 0.0
        %611 = vmatprep.subr.mxu0 0.0
        %612 = vmatpush2.xpose.msra.mxu0 0.0
        %613 = vmatprep.subr.mxu0 0.0
        %614 = vmatpush2.xpose.msra.mxu0 0.0
        %615 = vmatprep.subr.mxu0 0.0
        %616 = vmatpush2.xpose.msra.mxu0 0.0
        %617 = vmatprep.subr.mxu0 0.0
        %618 = vmatpush2.xpose.msra.mxu0 0.0
        %619 = vmatprep.subr.mxu0 0.0
        %620 = vmatpush2.xpose.msra.mxu0 0.0
        %621 = vmatprep.subr.mxu0 0.0
        %622 = vmatpush2.xpose.msra.mxu0 0.0
        %623 = vmatprep.subr.mxu0 0.0
        %624 = vmatpush2.xpose.msra.mxu0 0.0
        %625 = vmatprep.subr.mxu0 0.0
        %626 = vmatpush2.xpose.msra.mxu0 0.0
        %627 = vmatprep.subr.mxu0 0.0
        %628 = vmatpush2.xpose.msra.mxu0 0.0
        %629 = vmatprep.mubr.f32.mxu0 0.0
        %630 = vmatmul.mubr.f32.gmra.mxu0 %v561
        %v631 = vpop.f32.mrf.mxu0
        %v632 = vadd.f32 0.0, %v631
        %v633 = vpop.f32.mrf.mxu0
        %634 = vdwg.mxu0
        %v635 = vsel %vm560, %v632, -inf
        %636 = vmax.xlane.f32.xlu0 %v635
        %v637 = vpop.xlane.xlu0 %636
        %v638 = vsub.f32 %v632, %v637
        %v639 = vmul.f32 %v638, 1.442695
        %v640 = vpow.pop %v639
        %v641 = vsel %vm560, %v640, 0.0
        %642 = vadd.xlane.f32.xlu0 %v641
        %v643 = vpop.xlane.xlu0 %642
        %v644 = vrcp.pop %v643
        %v645 = vmul.f32 %v640, %v644
        %v647 = vsel %vm560, %v645, 0
        %649 = vmatprep.subr.mxu0 0.0
        %650 = vmatpush1.msra.mxu0 0.0
        %651 = vmatprep.subr.mxu0 0.0
        %652 = vmatpush1.msra.mxu0 0.0
        %653 = vmatprep.subr.mxu0 0.0
        %654 = vmatpush1.msra.mxu0 0.0
        %655 = vmatprep.subr.mxu0 0.0
        %656 = vmatpush1.msra.mxu0 0.0
        %657 = vmatprep.subr.mxu0 0.0
        %658 = vmatpush1.msra.mxu0 0.0
        %659 = vmatprep.subr.mxu0 0.0
        %660 = vmatpush1.msra.mxu0 0.0
        %661 = vmatprep.subr.mxu0 0.0
        %662 = vmatpush1.msra.mxu0 0.0
        %663 = vmatprep.subr.mxu0 0.0
        %664 = vmatpush1.msra.mxu0 0.0
        %665 = vmatprep.subr.mxu0 0.0
        %666 = vmatpush1.msra.mxu0 0.0
        %667 = vmatprep.subr.mxu0 0.0
        %668 = vmatpush1.msra.mxu0 0.0
        %669 = vmatprep.subr.mxu0 0.0
        %670 = vmatpush1.msra.mxu0 0.0
        %671 = vmatprep.subr.mxu0 0.0
        %672 = vmatpush1.msra.mxu0 0.0
        %673 = vmatprep.subr.mxu0 0.0
        %674 = vmatpush1.msra.mxu0 0.0
        %675 = vmatprep.subr.mxu0 0.0
        %676 = vmatpush1.msra.mxu0 0.0
        %677 = vmatprep.subr.mxu0 0.0
        %678 = vmatpush1.msra.mxu0 0.0
        %679 = vmatprep.subr.mxu0 0.0
        %680 = vmatpush1.msra.mxu0 %v554
        %681 = vmatprep.subr.mxu0 0.0
        %682 = vmatpush2.msra.mxu0 0.0
        %683 = vmatprep.subr.mxu0 0.0
        %684 = vmatpush2.msra.mxu0 0.0
        %685 = vmatprep.subr.mxu0 0.0
        %686 = vmatpush2.msra.mxu0 0.0
        %687 = vmatprep.subr.mxu0 0.0
        %688 = vmatpush2.msra.mxu0 0.0
        %689 = vmatprep.subr.mxu0 0.0
        %690 = vmatpush2.msra.mxu0 0.0
        %691 = vmatprep.subr.mxu0 0.0
        %692 = vmatpush2.msra.mxu0 0.0
        %693 = vmatprep.subr.mxu0 0.0
        %694 = vmatpush2.msra.mxu0 0.0
        %695 = vmatprep.subr.mxu0 0.0
        %696 = vmatpush2.msra.mxu0 0.0
        %697 = vmatprep.subr.mxu0 0.0
        %698 = vmatpush2.msra.mxu0 0.0
        %699 = vmatprep.subr.mxu0 0.0
        %700 = vmatpush2.msra.mxu0 0.0
        %701 = vmatprep.subr.mxu0 0.0
        %702 = vmatpush2.msra.mxu0 0.0
        %703 = vmatprep.subr.mxu0 0.0
        %704 = vmatpush2.msra.mxu0 0.0
        %705 = vmatprep.subr.mxu0 0.0
        %706 = vmatpush2.msra.mxu0 0.0
        %707 = vmatprep.subr.mxu0 0.0
        %708 = vmatpush2.msra.mxu0 0.0
        %709 = vmatprep.subr.mxu0 0.0
        %710 = vmatpush2.msra.mxu0 0.0
        %711 = vmatprep.subr.mxu0 0.0
        %712 = vmatpush2.msra.mxu0 0.0
        %713 = vmatprep.mubr.f32.mxu0 0.0
        %714 = vmatmul.mubr.f32.gmra.mxu0 %v647
        %v715 = vpop.f32.mrf.mxu0
        %v716 = vadd.f32 0.0, %v715
        %v717 = vpop.f32.mrf.mxu0
        %718 = vdwg.mxu0
        %719 = vrot.lane.b32.xlu0 %v477, 120
        %v720 = vpop.permute.xlu0 %719
        %721 = vrot.lane.b32.xlu0 %v477, 88
        %v722 = vpop.permute.xlu0 %721
        %v723 = vsel %vm560, %v720, 0
        %v725 = vsel %vm560, %v722, 0
        %727 = vmatprep.subr.mxu0 0.0
        %728 = vmatpush1.xpose.msra.mxu0 0.0
        %729 = vmatprep.subr.mxu0 0.0
        %730 = vmatpush1.xpose.msra.mxu0 0.0
        %731 = vmatprep.subr.mxu0 0.0
        %732 = vmatpush1.xpose.msra.mxu0 0.0
        %733 = vmatprep.subr.mxu0 0.0
        %734 = vmatpush1.xpose.msra.mxu0 0.0
        %735 = vmatprep.subr.mxu0 0.0
        %736 = vmatpush1.xpose.msra.mxu0 0.0
        %737 = vmatprep.subr.mxu0 0.0
        %738 = vmatpush1.xpose.msra.mxu0 0.0
        %739 = vmatprep.subr.mxu0 0.0
        %740 = vmatpush1.xpose.msra.mxu0 0.0
        %741 = vmatprep.subr.mxu0 0.0
        %742 = vmatpush1.xpose.msra.mxu0 0.0
        %743 = vmatprep.subr.mxu0 0.0
        %744 = vmatpush1.xpose.msra.mxu0 0.0
        %745 = vmatprep.subr.mxu0 0.0
        %746 = vmatpush1.xpose.msra.mxu0 0.0
        %747 = vmatprep.subr.mxu0 0.0
        %748 = vmatpush1.xpose.msra.mxu0 0.0
        %749 = vmatprep.subr.mxu0 0.0
        %750 = vmatpush1.xpose.msra.mxu0 0.0
        %751 = vmatprep.subr.mxu0 0.0
        %752 = vmatpush1.xpose.msra.mxu0 0.0
        %753 = vmatprep.subr.mxu0 0.0
        %754 = vmatpush1.xpose.msra.mxu0 0.0
        %755 = vmatprep.subr.mxu0 0.0
        %756 = vmatpush1.xpose.msra.mxu0 0.0
        %757 = vmatprep.subr.mxu0 0.0
        %758 = vmatpush1.xpose.msra.mxu0 %v725
        %759 = vmatprep.subr.mxu0 0.0
        %760 = vmatpush2.xpose.msra.mxu0 0.0
        %761 = vmatprep.subr.mxu0 0.0
        %762 = vmatpush2.xpose.msra.mxu0 0.0
        %763 = vmatprep.subr.mxu0 0.0
        %764 = vmatpush2.xpose.msra.mxu0 0.0
        %765 = vmatprep.subr.mxu0 0.0
        %766 = vmatpush2.xpose.msra.mxu0 0.0
        %767 = vmatprep.subr.mxu0 0.0
        %768 = vmatpush2.xpose.msra.mxu0 0.0
        %769 = vmatprep.subr.mxu0 0.0
        %770 = vmatpush2.xpose.msra.mxu0 0.0
        %771 = vmatprep.subr.mxu0 0.0
        %772 = vmatpush2.xpose.msra.mxu0 0.0
        %773 = vmatprep.subr.mxu0 0.0
        %774 = vmatpush2.xpose.msra.mxu0 0.0
        %775 = vmatprep.subr.mxu0 0.0
        %776 = vmatpush2.xpose.msra.mxu0 0.0
        %777 = vmatprep.subr.mxu0 0.0
        %778 = vmatpush2.xpose.msra.mxu0 0.0
        %779 = vmatprep.subr.mxu0 0.0
        %780 = vmatpush2.xpose.msra.mxu0 0.0
        %781 = vmatprep.subr.mxu0 0.0
        %782 = vmatpush2.xpose.msra.mxu0 0.0
        %783 = vmatprep.subr.mxu0 0.0
        %784 = vmatpush2.xpose.msra.mxu0 0.0
        %785 = vmatprep.subr.mxu0 0.0
        %786 = vmatpush2.xpose.msra.mxu0 0.0
        %787 = vmatprep.subr.mxu0 0.0
        %788 = vmatpush2.xpose.msra.mxu0 0.0
        %789 = vmatprep.subr.mxu0 0.0
        %790 = vmatpush2.xpose.msra.mxu0 0.0
        %791 = vmatprep.mubr.f32.mxu0 0.0
        %792 = vmatmul.mubr.f32.gmra.mxu0 %v723
        %v793 = vpop.f32.mrf.mxu0
        %v794 = vadd.f32 0.0, %v793
        %v795 = vpop.f32.mrf.mxu0
        %796 = vdwg.mxu0
        %v797 = vsel %vm560, %v794, -inf
        %798 = vmax.xlane.f32.xlu0 %v797
        %v799 = vpop.xlane.xlu0 %798
        %v800 = vsub.f32 %v794, %v799
        %v801 = vmul.f32 %v800, 1.442695
        %v802 = vpow.pop %v801
        %v803 = vsel %vm560, %v802, 0.0
        %804 = vadd.xlane.f32.xlu0 %v803
        %v805 = vpop.xlane.xlu0 %804
        %v806 = vrcp.pop %v805
        %v807 = vmul.f32 %v802, %v806
        %809 = vrot.lane.b32.xlu0 %v554, 120
        %v810 = vpop.permute.xlu0 %809
        %v813 = vsel %vm560, %v807, 0
        %815 = vmatprep.subr.mxu0 0.0
        %816 = vmatpush1.msra.mxu0 0.0
        %817 = vmatprep.subr.mxu0 0.0
        %818 = vmatpush1.msra.mxu0 0.0
        %819 = vmatprep.subr.mxu0 0.0
        %820 = vmatpush1.msra.mxu0 0.0
        %821 = vmatprep.subr.mxu0 0.0
        %822 = vmatpush1.msra.mxu0 0.0
        %823 = vmatprep.subr.mxu0 0.0
        %824 = vmatpush1.msra.mxu0 0.0
        %825 = vmatprep.subr.mxu0 0.0
        %826 = vmatpush1.msra.mxu0 0.0
        %827 = vmatprep.subr.mxu0 0.0
        %828 = vmatpush1.msra.mxu0 0.0
        %829 = vmatprep.subr.mxu0 0.0
        %830 = vmatpush1.msra.mxu0 0.0
        %831 = vmatprep.subr.mxu0 0.0
        %832 = vmatpush1.msra.mxu0 0.0
        %833 = vmatprep.subr.mxu0 0.0
        %834 = vmatpush1.msra.mxu0 0.0
        %835 = vmatprep.subr.mxu0 0.0
        %836 = vmatpush1.msra.mxu0 0.0
        %837 = vmatprep.subr.mxu0 0.0
        %838 = vmatpush1.msra.mxu0 0.0
        %839 = vmatprep.subr.mxu0 0.0
        %840 = vmatpush1.msra.mxu0 0.0
        %841 = vmatprep.subr.mxu0 0.0
        %842 = vmatpush1.msra.mxu0 0.0
        %843 = vmatprep.subr.mxu0 0.0
        %844 = vmatpush1.msra.mxu0 0.0
        %845 = vmatprep.subr.mxu0 0.0
        %846 = vmatpush1.msra.mxu0 %v810
        %847 = vmatprep.subr.mxu0 0.0
        %848 = vmatpush2.msra.mxu0 0.0
        %849 = vmatprep.subr.mxu0 0.0
        %850 = vmatpush2.msra.mxu0 0.0
        %851 = vmatprep.subr.mxu0 0.0
        %852 = vmatpush2.msra.mxu0 0.0
        %853 = vmatprep.subr.mxu0 0.0
        %854 = vmatpush2.msra.mxu0 0.0
        %855 = vmatprep.subr.mxu0 0.0
        %856 = vmatpush2.msra.mxu0 0.0
        %857 = vmatprep.subr.mxu0 0.0
        %858 = vmatpush2.msra.mxu0 0.0
        %859 = vmatprep.subr.mxu0 0.0
        %860 = vmatpush2.msra.mxu0 0.0
        %861 = vmatprep.subr.mxu0 0.0
        %862 = vmatpush2.msra.mxu0 0.0
        %863 = vmatprep.subr.mxu0 0.0
        %864 = vmatpush2.msra.mxu0 0.0
        %865 = vmatprep.subr.mxu0 0.0
        %866 = vmatpush2.msra.mxu0 0.0
        %867 = vmatprep.subr.mxu0 0.0
        %868 = vmatpush2.msra.mxu0 0.0
        %869 = vmatprep.subr.mxu0 0.0
        %870 = vmatpush2.msra.mxu0 0.0
        %871 = vmatprep.subr.mxu0 0.0
        %872 = vmatpush2.msra.mxu0 0.0
        %873 = vmatprep.subr.mxu0 0.0
        %874 = vmatpush2.msra.mxu0 0.0
        %875 = vmatprep.subr.mxu0 0.0
        %876 = vmatpush2.msra.mxu0 0.0
        %877 = vmatprep.subr.mxu0 0.0
        %878 = vmatpush2.msra.mxu0 0.0
        %879 = vmatprep.mubr.f32.mxu0 0.0
        %880 = vmatmul.mubr.f32.gmra.mxu0 %v813
        %v881 = vpop.f32.mrf.mxu0
        %v882 = vadd.f32 0.0, %v881
        %v883 = vpop.f32.mrf.mxu0
        %884 = vdwg.mxu0
        %885 = vrot.lane.b32.xlu0 %v477, 112
        %v886 = vpop.permute.xlu0 %885
        %887 = vrot.lane.b32.xlu0 %v477, 80
        %v888 = vpop.permute.xlu0 %887
        %v889 = vsel %vm560, %v886, 0
        %v891 = vsel %vm560, %v888, 0
        %893 = vmatprep.subr.mxu0 0.0
        %894 = vmatpush1.xpose.msra.mxu0 0.0
        %895 = vmatprep.subr.mxu0 0.0
        %896 = vmatpush1.xpose.msra.mxu0 0.0
        %897 = vmatprep.subr.mxu0 0.0
        %898 = vmatpush1.xpose.msra.mxu0 0.0
        %899 = vmatprep.subr.mxu0 0.0
        %900 = vmatpush1.xpose.msra.mxu0 0.0
        %901 = vmatprep.subr.mxu0 0.0
        %902 = vmatpush1.xpose.msra.mxu0 0.0
        %903 = vmatprep.subr.mxu0 0.0
        %904 = vmatpush1.xpose.msra.mxu0 0.0
        %905 = vmatprep.subr.mxu0 0.0
        %906 = vmatpush1.xpose.msra.mxu0 0.0
        %907 = vmatprep.subr.mxu0 0.0
        %908 = vmatpush1.xpose.msra.mxu0 0.0
        %909 = vmatprep.subr.mxu0 0.0
        %910 = vmatpush1.xpose.msra.mxu0 0.0
        %911 = vmatprep.subr.mxu0 0.0
        %912 = vmatpush1.xpose.msra.mxu0 0.0
        %913 = vmatprep.subr.mxu0 0.0
        %914 = vmatpush1.xpose.msra.mxu0 0.0
        %915 = vmatprep.subr.mxu0 0.0
        %916 = vmatpush1.xpose.msra.mxu0 0.0
        %917 = vmatprep.subr.mxu0 0.0
        %918 = vmatpush1.xpose.msra.mxu0 0.0
        %919 = vmatprep.subr.mxu0 0.0
        %920 = vmatpush1.xpose.msra.mxu0 0.0
        %921 = vmatprep.subr.mxu0 0.0
        %922 = vmatpush1.xpose.msra.mxu0 0.0
        %923 = vmatprep.subr.mxu0 0.0
        %924 = vmatpush1.xpose.msra.mxu0 %v891
        %925 = vmatprep.subr.mxu0 0.0
        %926 = vmatpush2.xpose.msra.mxu0 0.0
        %927 = vmatprep.subr.mxu0 0.0
        %928 = vmatpush2.xpose.msra.mxu0 0.0
        %929 = vmatprep.subr.mxu0 0.0
        %930 = vmatpush2.xpose.msra.mxu0 0.0
        %931 = vmatprep.subr.mxu0 0.0
        %932 = vmatpush2.xpose.msra.mxu0 0.0
        %933 = vmatprep.subr.mxu0 0.0
        %934 = vmatpush2.xpose.msra.mxu0 0.0
        %935 = vmatprep.subr.mxu0 0.0
        %936 = vmatpush2.xpose.msra.mxu0 0.0
        %937 = vmatprep.subr.mxu0 0.0
        %938 = vmatpush2.xpose.msra.mxu0 0.0
        %939 = vmatprep.subr.mxu0 0.0
        %940 = vmatpush2.xpose.msra.mxu0 0.0
        %941 = vmatprep.subr.mxu0 0.0
        %942 = vmatpush2.xpose.msra.mxu0 0.0
        %943 = vmatprep.subr.mxu0 0.0
        %944 = vmatpush2.xpose.msra.mxu0 0.0
        %945 = vmatprep.subr.mxu0 0.0
        %946 = vmatpush2.xpose.msra.mxu0 0.0
        %947 = vmatprep.subr.mxu0 0.0
        %948 = vmatpush2.xpose.msra.mxu0 0.0
        %949 = vmatprep.subr.mxu0 0.0
        %950 = vmatpush2.xpose.msra.mxu0 0.0
        %951 = vmatprep.subr.mxu0 0.0
        %952 = vmatpush2.xpose.msra.mxu0 0.0
        %953 = vmatprep.subr.mxu0 0.0
        %954 = vmatpush2.xpose.msra.mxu0 0.0
        %955 = vmatprep.subr.mxu0 0.0
        %956 = vmatpush2.xpose.msra.mxu0 0.0
        %957 = vmatprep.mubr.f32.mxu0 0.0
        %958 = vmatmul.mubr.f32.gmra.mxu0 %v889
        %v959 = vpop.f32.mrf.mxu0
        %v960 = vadd.f32 0.0, %v959
        %v961 = vpop.f32.mrf.mxu0
        %962 = vdwg.mxu0
        %v963 = vsel %vm560, %v960, -inf
        %964 = vmax.xlane.f32.xlu0 %v963
        %v965 = vpop.xlane.xlu0 %964
        %v966 = vsub.f32 %v960, %v965
        %v967 = vmul.f32 %v966, 1.442695
        %v968 = vpow.pop %v967
        %v969 = vsel %vm560, %v968, 0.0
        %970 = vadd.xlane.f32.xlu0 %v969
        %v971 = vpop.xlane.xlu0 %970
        %v972 = vrcp.pop %v971
        %v973 = vmul.f32 %v968, %v972
        %974 = vrot.lane.b32.xlu0 %v554, 112
        %v975 = vpop.permute.xlu0 %974
        %v978 = vsel %vm560, %v973, 0
        %980 = vmatprep.subr.mxu0 0.0
        %981 = vmatpush1.msra.mxu0 0.0
        %982 = vmatprep.subr.mxu0 0.0
        %983 = vmatpush1.msra.mxu0 0.0
        %984 = vmatprep.subr.mxu0 0.0
        %985 = vmatpush1.msra.mxu0 0.0
        %986 = vmatprep.subr.mxu0 0.0
        %987 = vmatpush1.msra.mxu0 0.0
        %988 = vmatprep.subr.mxu0 0.0
        %989 = vmatpush1.msra.mxu0 0.0
        %990 = vmatprep.subr.mxu0 0.0
        %991 = vmatpush1.msra.mxu0 0.0
        %992 = vmatprep.subr.mxu0 0.0
        %993 = vmatpush1.msra.mxu0 0.0
        %994 = vmatprep.subr.mxu0 0.0
        %995 = vmatpush1.msra.mxu0 0.0
        %996 = vmatprep.subr.mxu0 0.0
        %997 = vmatpush1.msra.mxu0 0.0
        %998 = vmatprep.subr.mxu0 0.0
        %999 = vmatpush1.msra.mxu0 0.0
        %1000 = vmatprep.subr.mxu0 0.0
        %1001 = vmatpush1.msra.mxu0 0.0
        %1002 = vmatprep.subr.mxu0 0.0
        %1003 = vmatpush1.msra.mxu0 0.0
        %1004 = vmatprep.subr.mxu0 0.0
        %1005 = vmatpush1.msra.mxu0 0.0
        %1006 = vmatprep.subr.mxu0 0.0
        %1007 = vmatpush1.msra.mxu0 0.0
        %1008 = vmatprep.subr.mxu0 0.0
        %1009 = vmatpush1.msra.mxu0 0.0
        %1010 = vmatprep.subr.mxu0 0.0
        %1011 = vmatpush1.msra.mxu0 %v975
        %1012 = vmatprep.subr.mxu0 0.0
        %1013 = vmatpush2.msra.mxu0 0.0
        %1014 = vmatprep.subr.mxu0 0.0
        %1015 = vmatpush2.msra.mxu0 0.0
        %1016 = vmatprep.subr.mxu0 0.0
        %1017 = vmatpush2.msra.mxu0 0.0
        %1018 = vmatprep.subr.mxu0 0.0
        %1019 = vmatpush2.msra.mxu0 0.0
        %1020 = vmatprep.subr.mxu0 0.0
        %1021 = vmatpush2.msra.mxu0 0.0
        %1022 = vmatprep.subr.mxu0 0.0
        %1023 = vmatpush2.msra.mxu0 0.0
        %1024 = vmatprep.subr.mxu0 0.0
        %1025 = vmatpush2.msra.mxu0 0.0
        %1026 = vmatprep.subr.mxu0 0.0
        %1027 = vmatpush2.msra.mxu0 0.0
        %1028 = vmatprep.subr.mxu0 0.0
        %1029 = vmatpush2.msra.mxu0 0.0
        %1030 = vmatprep.subr.mxu0 0.0
        %1031 = vmatpush2.msra.mxu0 0.0
        %1032 = vmatprep.subr.mxu0 0.0
        %1033 = vmatpush2.msra.mxu0 0.0
        %1034 = vmatprep.subr.mxu0 0.0
        %1035 = vmatpush2.msra.mxu0 0.0
        %1036 = vmatprep.subr.mxu0 0.0
        %1037 = vmatpush2.msra.mxu0 0.0
        %1038 = vmatprep.subr.mxu0 0.0
        %1039 = vmatpush2.msra.mxu0 0.0
        %1040 = vmatprep.subr.mxu0 0.0
        %1041 = vmatpush2.msra.mxu0 0.0
        %1042 = vmatprep.subr.mxu0 0.0
        %1043 = vmatpush2.msra.mxu0 0.0
        %1044 = vmatprep.mubr.f32.mxu0 0.0
        %1045 = vmatmul.mubr.f32.gmra.mxu0 %v978
        %v1046 = vpop.f32.mrf.mxu0
        %v1047 = vadd.f32 0.0, %v1046
        %v1048 = vpop.f32.mrf.mxu0
        %1049 = vdwg.mxu0
        %1050 = vrot.lane.b32.xlu0 %v477, 104
        %v1051 = vpop.permute.xlu0 %1050
        %1052 = vrot.lane.b32.xlu0 %v477, 72
        %v1053 = vpop.permute.xlu0 %1052
        %v1054 = vsel %vm560, %v1051, 0
        %v1056 = vsel %vm560, %v1053, 0
        %1058 = vmatprep.subr.mxu0 0.0
        %1059 = vmatpush1.xpose.msra.mxu0 0.0
        %1060 = vmatprep.subr.mxu0 0.0
        %1061 = vmatpush1.xpose.msra.mxu0 0.0
        %1062 = vmatprep.subr.mxu0 0.0
        %1063 = vmatpush1.xpose.msra.mxu0 0.0
        %1064 = vmatprep.subr.mxu0 0.0
        %1065 = vmatpush1.xpose.msra.mxu0 0.0
        %1066 = vmatprep.subr.mxu0 0.0
        %1067 = vmatpush1.xpose.msra.mxu0 0.0
        %1068 = vmatprep.subr.mxu0 0.0
        %1069 = vmatpush1.xpose.msra.mxu0 0.0
        %1070 = vmatprep.subr.mxu0 0.0
        %1071 = vmatpush1.xpose.msra.mxu0 0.0
        %1072 = vmatprep.subr.mxu0 0.0
        %1073 = vmatpush1.xpose.msra.mxu0 0.0
        %1074 = vmatprep.subr.mxu0 0.0
        %1075 = vmatpush1.xpose.msra.mxu0 0.0
        %1076 = vmatprep.subr.mxu0 0.0
        %1077 = vmatpush1.xpose.msra.mxu0 0.0
        %1078 = vmatprep.subr.mxu0 0.0
        %1079 = vmatpush1.xpose.msra.mxu0 0.0
        %1080 = vmatprep.subr.mxu0 0.0
        %1081 = vmatpush1.xpose.msra.mxu0 0.0
        %1082 = vmatprep.subr.mxu0 0.0
        %1083 = vmatpush1.xpose.msra.mxu0 0.0
        %1084 = vmatprep.subr.mxu0 0.0
        %1085 = vmatpush1.xpose.msra.mxu0 0.0
        %1086 = vmatprep.subr.mxu0 0.0
        %1087 = vmatpush1.xpose.msra.mxu0 0.0
        %1088 = vmatprep.subr.mxu0 0.0
        %1089 = vmatpush1.xpose.msra.mxu0 %v1056
        %1090 = vmatprep.subr.mxu0 0.0
        %1091 = vmatpush2.xpose.msra.mxu0 0.0
        %1092 = vmatprep.subr.mxu0 0.0
        %1093 = vmatpush2.xpose.msra.mxu0 0.0
        %1094 = vmatprep.subr.mxu0 0.0
        %1095 = vmatpush2.xpose.msra.mxu0 0.0
        %1096 = vmatprep.subr.mxu0 0.0
        %1097 = vmatpush2.xpose.msra.mxu0 0.0
        %1098 = vmatprep.subr.mxu0 0.0
        %1099 = vmatpush2.xpose.msra.mxu0 0.0
        %1100 = vmatprep.subr.mxu0 0.0
        %1101 = vmatpush2.xpose.msra.mxu0 0.0
        %1102 = vmatprep.subr.mxu0 0.0
        %1103 = vmatpush2.xpose.msra.mxu0 0.0
        %1104 = vmatprep.subr.mxu0 0.0
        %1105 = vmatpush2.xpose.msra.mxu0 0.0
        %1106 = vmatprep.subr.mxu0 0.0
        %1107 = vmatpush2.xpose.msra.mxu0 0.0
        %1108 = vmatprep.subr.mxu0 0.0
        %1109 = vmatpush2.xpose.msra.mxu0 0.0
        %1110 = vmatprep.subr.mxu0 0.0
        %1111 = vmatpush2.xpose.msra.mxu0 0.0
        %1112 = vmatprep.subr.mxu0 0.0
        %1113 = vmatpush2.xpose.msra.mxu0 0.0
        %1114 = vmatprep.subr.mxu0 0.0
        %1115 = vmatpush2.xpose.msra.mxu0 0.0
        %1116 = vmatprep.subr.mxu0 0.0
        %1117 = vmatpush2.xpose.msra.mxu0 0.0
        %1118 = vmatprep.subr.mxu0 0.0
        %1119 = vmatpush2.xpose.msra.mxu0 0.0
        %1120 = vmatprep.subr.mxu0 0.0
        %1121 = vmatpush2.xpose.msra.mxu0 0.0
        %1122 = vmatprep.mubr.f32.mxu0 0.0
        %1123 = vmatmul.mubr.f32.gmra.mxu0 %v1054
        %v1124 = vpop.f32.mrf.mxu0
        %v1125 = vadd.f32 0.0, %v1124
        %v1126 = vpop.f32.mrf.mxu0
        %1127 = vdwg.mxu0
        %v1128 = vsel %vm560, %v1125, -inf
        %1129 = vmax.xlane.f32.xlu0 %v1128
        %v1130 = vpop.xlane.xlu0 %1129
        %v1131 = vsub.f32 %v1125, %v1130
        %v1132 = vmul.f32 %v1131, 1.442695
        %v1133 = vpow.pop %v1132
        %v1134 = vsel %vm560, %v1133, 0.0
        %1135 = vadd.xlane.f32.xlu0 %v1134
        %v1136 = vpop.xlane.xlu0 %1135
        %v1137 = vrcp.pop %v1136
        %v1138 = vmul.f32 %v1133, %v1137
        %1139 = vrot.lane.b32.xlu0 %v554, 104
        %v1140 = vpop.permute.xlu0 %1139
        %v1143 = vsel %vm560, %v1138, 0
        %1145 = vmatprep.subr.mxu0 0.0
        %1146 = vmatpush1.msra.mxu0 0.0
        %1147 = vmatprep.subr.mxu0 0.0
        %1148 = vmatpush1.msra.mxu0 0.0
        %1149 = vmatprep.subr.mxu0 0.0
        %1150 = vmatpush1.msra.mxu0 0.0
        %1151 = vmatprep.subr.mxu0 0.0
        %1152 = vmatpush1.msra.mxu0 0.0
        %1153 = vmatprep.subr.mxu0 0.0
        %1154 = vmatpush1.msra.mxu0 0.0
        %1155 = vmatprep.subr.mxu0 0.0
        %1156 = vmatpush1.msra.mxu0 0.0
        %1157 = vmatprep.subr.mxu0 0.0
        %1158 = vmatpush1.msra.mxu0 0.0
        %1159 = vmatprep.subr.mxu0 0.0
        %1160 = vmatpush1.msra.mxu0 0.0
        %1161 = vmatprep.subr.mxu0 0.0
        %1162 = vmatpush1.msra.mxu0 0.0
        %1163 = vmatprep.subr.mxu0 0.0
        %1164 = vmatpush1.msra.mxu0 0.0
        %1165 = vmatprep.subr.mxu0 0.0
        %1166 = vmatpush1.msra.mxu0 0.0
        %1167 = vmatprep.subr.mxu0 0.0
        %1168 = vmatpush1.msra.mxu0 0.0
        %1169 = vmatprep.subr.mxu0 0.0
        %1170 = vmatpush1.msra.mxu0 0.0
        %1171 = vmatprep.subr.mxu0 0.0
        %1172 = vmatpush1.msra.mxu0 0.0
        %1173 = vmatprep.subr.mxu0 0.0
        %1174 = vmatpush1.msra.mxu0 0.0
        %1175 = vmatprep.subr.mxu0 0.0
        %1176 = vmatpush1.msra.mxu0 %v1140
        %1177 = vmatprep.subr.mxu0 0.0
        %1178 = vmatpush2.msra.mxu0 0.0
        %1179 = vmatprep.subr.mxu0 0.0
        %1180 = vmatpush2.msra.mxu0 0.0
        %1181 = vmatprep.subr.mxu0 0.0
        %1182 = vmatpush2.msra.mxu0 0.0
        %1183 = vmatprep.subr.mxu0 0.0
        %1184 = vmatpush2.msra.mxu0 0.0
        %1185 = vmatprep.subr.mxu0 0.0
        %1186 = vmatpush2.msra.mxu0 0.0
        %1187 = vmatprep.subr.mxu0 0.0
        %1188 = vmatpush2.msra.mxu0 0.0
        %1189 = vmatprep.subr.mxu0 0.0
        %1190 = vmatpush2.msra.mxu0 0.0
        %1191 = vmatprep.subr.mxu0 0.0
        %1192 = vmatpush2.msra.mxu0 0.0
        %1193 = vmatprep.subr.mxu0 0.0
        %1194 = vmatpush2.msra.mxu0 0.0
        %1195 = vmatprep.subr.mxu0 0.0
        %1196 = vmatpush2.msra.mxu0 0.0
        %1197 = vmatprep.subr.mxu0 0.0
        %1198 = vmatpush2.msra.mxu0 0.0
        %1199 = vmatprep.subr.mxu0 0.0
        %1200 = vmatpush2.msra.mxu0 0.0
        %1201 = vmatprep.subr.mxu0 0.0
        %1202 = vmatpush2.msra.mxu0 0.0
        %1203 = vmatprep.subr.mxu0 0.0
        %1204 = vmatpush2.msra.mxu0 0.0
        %1205 = vmatprep.subr.mxu0 0.0
        %1206 = vmatpush2.msra.mxu0 0.0
        %1207 = vmatprep.subr.mxu0 0.0
        %1208 = vmatpush2.msra.mxu0 0.0
        %1209 = vmatprep.mubr.f32.mxu0 0.0
        %1210 = vmatmul.mubr.f32.gmra.mxu0 %v1143
        %v1211 = vpop.f32.mrf.mxu0
        %v1212 = vadd.f32 0.0, %v1211
        %v1213 = vpop.f32.mrf.mxu0
        %1214 = vdwg.mxu0
        %1216 = vrot.lane.b32.xlu0 %v882, 8
        %v1217 = vpop.permute.xlu0 %1216
        %1220 = vrot.lane.b32.xlu0 %v1047, 16
        %v1221 = vpop.permute.xlu0 %1220
        %1224 = vrot.lane.b32.xlu0 %v1212, 24
        %v1225 = vpop.permute.xlu0 %1224
        %v1227 = vsel %vm560, %v716, %v1217
        %vm1228 = vcmask 130048
        %v1229 = vsel %vm1228, %v1227, %v1221
        %vm1230 = vcmask 195584
        %v1231 = vsel %vm1230, %v1229, %v1225
        %v1232 = vld [vmem:[%s4] sm:$0xff]
        %v1233 = vld [vmem:[%s4 + $0x8] sm:$0xff]
        %v1234 = vld [vmem:[%s4 + $0x10] sm:$0xff]
        %v1235 = vld [vmem:[%s4 + $0x18] sm:$0xff]
        %v1236 = vlaneseq
        %v1237 = vshrl.u32 %v1236, 7
        %v1238 = vsub.s32 0, %v1237
        %v1239 = vrot.slane %v390, %v1238
        %v1241 = vsel %vm406, %v1231, 0
        %1243 = vmatprep.subr.mxu0 0.0
        %1244 = vmatpush1.msra.mxu0 0.0
        %1245 = vmatprep.subr.mxu0 0.0
        %1246 = vmatpush1.msra.mxu0 0.0
        %1247 = vmatprep.subr.mxu0 0.0
        %1248 = vmatpush1.msra.mxu0 0.0
        %1249 = vmatprep.subr.mxu0 0.0
        %1250 = vmatpush1.msra.mxu0 0.0
        %1251 = vmatprep.subr.mxu0 0.0
        %1252 = vmatpush1.msra.mxu0 0.0
        %1253 = vmatprep.subr.mxu0 0.0
        %1254 = vmatpush1.msra.mxu0 0.0
        %1255 = vmatprep.subr.mxu0 0.0
        %1256 = vmatpush1.msra.mxu0 0.0
        %1257 = vmatprep.subr.mxu0 0.0
        %1258 = vmatpush1.msra.mxu0 0.0
        %1259 = vmatprep.subr.mxu0 0.0
        %1260 = vmatpush1.msra.mxu0 0.0
        %1261 = vmatprep.subr.mxu0 0.0
        %1262 = vmatpush1.msra.mxu0 0.0
        %1263 = vmatprep.subr.mxu0 0.0
        %1264 = vmatpush1.msra.mxu0 0.0
        %1265 = vmatprep.subr.mxu0 0.0
        %1266 = vmatpush1.msra.mxu0 0.0
        %1267 = vmatprep.subr.mxu0 0.0
        %1268 = vmatpush1.msra.mxu0 %v1235
        %1269 = vmatprep.subr.mxu0 0.0
        %1270 = vmatpush1.msra.mxu0 %v1234
        %1271 = vmatprep.subr.mxu0 0.0
        %1272 = vmatpush1.msra.mxu0 %v1233
        %1273 = vmatprep.subr.mxu0 0.0
        %1274 = vmatpush1.msra.mxu0 %v1232
        %1275 = vmatprep.subr.mxu0 0.0
        %1276 = vmatpush2.msra.mxu0 0.0
        %1277 = vmatprep.subr.mxu0 0.0
        %1278 = vmatpush2.msra.mxu0 0.0
        %1279 = vmatprep.subr.mxu0 0.0
        %1280 = vmatpush2.msra.mxu0 0.0
        %1281 = vmatprep.subr.mxu0 0.0
        %1282 = vmatpush2.msra.mxu0 0.0
        %1283 = vmatprep.subr.mxu0 0.0
        %1284 = vmatpush2.msra.mxu0 0.0
        %1285 = vmatprep.subr.mxu0 0.0
        %1286 = vmatpush2.msra.mxu0 0.0
        %1287 = vmatprep.subr.mxu0 0.0
        %1288 = vmatpush2.msra.mxu0 0.0
        %1289 = vmatprep.subr.mxu0 0.0
        %1290 = vmatpush2.msra.mxu0 0.0
        %1291 = vmatprep.subr.mxu0 0.0
        %1292 = vmatpush2.msra.mxu0 0.0
        %1293 = vmatprep.subr.mxu0 0.0
        %1294 = vmatpush2.msra.mxu0 0.0
        %1295 = vmatprep.subr.mxu0 0.0
        %1296 = vmatpush2.msra.mxu0 0.0
        %1297 = vmatprep.subr.mxu0 0.0
        %1298 = vmatpush2.msra.mxu0 0.0
        %1299 = vmatprep.subr.mxu0 0.0
        %1300 = vmatpush2.msra.mxu0 0.0
        %1301 = vmatprep.subr.mxu0 0.0
        %1302 = vmatpush2.msra.mxu0 0.0
        %1303 = vmatprep.subr.mxu0 0.0
        %1304 = vmatpush2.msra.mxu0 0.0
        %1305 = vmatprep.subr.mxu0 0.0
        %1306 = vmatpush2.msra.mxu0 0.0
        %1307 = vmatprep.mubr.f32.mxu0 0.0
        %1308 = vmatmul.mubr.f32.gmra.mxu0 %v1241
        %v1309 = vpop.f32.mrf.mxu0
        %v1310 = vadd.f32 %v1239, %v1309
        %v1311 = vpop.f32.mrf.mxu0
        %1312 = vdwg.mxu0
        %v1313 = vadd.f32 %v387, %v1310
        %v1314 = vsel %vm406, %v1313, 0.0
        %1315 = vadd.xlane.f32.xlu0 %v1314
        %v1316 = vpop.xlane.xlu0 %1315
        %v1317 = vrcp.pop 32.0
        %v1318 = vmul.f32 %v1316, %v1317
        %v1319 = vsub.f32 %v1313, %v1318
        %v1320 = vmul.f32 %v1319, %v1319
        %v1321 = vsel %vm406, %v1320, 0.0
        %1322 = vadd.xlane.f32.xlu0 %v1321
        %v1323 = vpop.xlane.xlu0 %1322
        %v1324 = vmul.f32 %v1323, %v1317
        %v1325 = vadd.f32 %v1324, 1e-05
        %v1326 = vrsqrt.pop %v1325
        %v1327 = vmul.f32 %v1319, %v1326
        %v1328 = vlaneseq
        %v1329 = vshrl.u32 %v1328, 7
        %v1330 = vsub.s32 0, %v1329
        %v1331 = vrot.slane %v393, %v1330
        %v1332 = vmul.f32 %v1327, %v1331
        %v1333 = vlaneseq
        %v1334 = vshrl.u32 %v1333, 7
        %v1335 = vsub.s32 0, %v1334
        %v1336 = vrot.slane %v394, %v1335
        %v1337 = vadd.f32 %v1332, %v1336
        %v1338 = vld [vmem:[#allocation7] sm:$0xff]
        %v1339 = vld [vmem:[#allocation7 + $0x8] sm:$0xff]
        %v1340 = vld [vmem:[#allocation7 + $0x10] sm:$0xff]
        %v1341 = vld [vmem:[#allocation7 + $0x18] sm:$0xff]
        %v1342 = vlaneseq
        %v1343 = vshrl.u32 %v1342, 7
        %v1344 = vsub.s32 0, %v1343
        %v1345 = vrot.slane %v391, %v1344
        %v1347 = vsel %vm406, %v1337, 0
        %1349 = vmatprep.subr.mxu0 0.0
        %1350 = vmatpush1.msra.mxu0 0.0
        %1351 = vmatprep.subr.mxu0 0.0
        %1352 = vmatpush1.msra.mxu0 0.0
        %1353 = vmatprep.subr.mxu0 0.0
        %1354 = vmatpush1.msra.mxu0 0.0
        %1355 = vmatprep.subr.mxu0 0.0
        %1356 = vmatpush1.msra.mxu0 0.0
        %1357 = vmatprep.subr.mxu0 0.0
        %1358 = vmatpush1.msra.mxu0 0.0
        %1359 = vmatprep.subr.mxu0 0.0
        %1360 = vmatpush1.msra.mxu0 0.0
        %1361 = vmatprep.subr.mxu0 0.0
        %1362 = vmatpush1.msra.mxu0 0.0
        %1363 = vmatprep.subr.mxu0 0.0
        %1364 = vmatpush1.msra.mxu0 0.0
        %1365 = vmatprep.subr.mxu0 0.0
        %1366 = vmatpush1.msra.mxu0 0.0
        %1367 = vmatprep.subr.mxu0 0.0
        %1368 = vmatpush1.msra.mxu0 0.0
        %1369 = vmatprep.subr.mxu0 0.0
        %1370 = vmatpush1.msra.mxu0 0.0
        %1371 = vmatprep.subr.mxu0 0.0
        %1372 = vmatpush1.msra.mxu0 0.0
        %1373 = vmatprep.subr.mxu0 0.0
        %1374 = vmatpush1.msra.mxu0 %v1341
        %1375 = vmatprep.subr.mxu0 0.0
        %1376 = vmatpush1.msra.mxu0 %v1340
        %1377 = vmatprep.subr.mxu0 0.0
        %1378 = vmatpush1.msra.mxu0 %v1339
        %1379 = vmatprep.subr.mxu0 0.0
        %1380 = vmatpush1.msra.mxu0 %v1338
        %1381 = vmatprep.subr.mxu0 0.0
        %1382 = vmatpush2.msra.mxu0 0.0
        %1383 = vmatprep.subr.mxu0 0.0
        %1384 = vmatpush2.msra.mxu0 0.0
        %1385 = vmatprep.subr.mxu0 0.0
        %1386 = vmatpush2.msra.mxu0 0.0
        %1387 = vmatprep.subr.mxu0 0.0
        %1388 = vmatpush2.msra.mxu0 0.0
        %1389 = vmatprep.subr.mxu0 0.0
        %1390 = vmatpush2.msra.mxu0 0.0
        %1391 = vmatprep.subr.mxu0 0.0
        %1392 = vmatpush2.msra.mxu0 0.0
        %1393 = vmatprep.subr.mxu0 0.0
        %1394 = vmatpush2.msra.mxu0 0.0
        %1395 = vmatprep.subr.mxu0 0.0
        %1396 = vmatpush2.msra.mxu0 0.0
        %1397 = vmatprep.subr.mxu0 0.0
        %1398 = vmatpush2.msra.mxu0 0.0
        %1399 = vmatprep.subr.mxu0 0.0
        %1400 = vmatpush2.msra.mxu0 0.0
        %1401 = vmatprep.subr.mxu0 0.0
        %1402 = vmatpush2.msra.mxu0 0.0
        %1403 = vmatprep.subr.mxu0 0.0
        %1404 = vmatpush2.msra.mxu0 0.0
        %1405 = vmatprep.subr.mxu0 0.0
        %1406 = vmatpush2.msra.mxu0 0.0
        %1407 = vmatprep.subr.mxu0 0.0
        %1408 = vmatpush2.msra.mxu0 0.0
        %1409 = vmatprep.subr.mxu0 0.0
        %1410 = vmatpush2.msra.mxu0 0.0
        %1411 = vmatprep.subr.mxu0 0.0
        %1412 = vmatpush2.msra.mxu0 0.0
        %1413 = vmatprep.mubr.f32.mxu0 0.0
        %1414 = vmatmul.mubr.f32.gmra.mxu0 %v1347
        %v1415 = vpop.f32.mrf.mxu0
        %v1416 = vadd.f32 %v1345, %v1415
        %v1417 = vpop.f32.mrf.mxu0
        %1418 = vdwg.mxu0
        %v1419 = vmax.f32 %v1416, 0.0
        %v1420 = vld [vmem:[%s6] sm:$0xff]
        %v1421 = vld [vmem:[%s6 + $0x8] sm:$0xff]
        %v1422 = vld [vmem:[%s6 + $0x10] sm:$0xff]
        %v1423 = vld [vmem:[%s6 + $0x18] sm:$0xff]
        %v1424 = vld [vmem:[%s6 + $0x20] sm:$0xff]
        %v1425 = vld [vmem:[%s6 + $0x28] sm:$0xff]
        %v1426 = vld [vmem:[%s6 + $0x30] sm:$0xff]
        %v1427 = vld [vmem:[%s6 + $0x38] sm:$0xff]
        %v1428 = vlaneseq
        %v1429 = vshrl.u32 %v1428, 7
        %v1430 = vsub.s32 0, %v1429
        %v1431 = vrot.slane %v392, %v1430
        %vm1432 = vcmask 523264
        %v1434 = vsel %vm1432, %v1419, 0
        %1436 = vmatprep.subr.mxu0 0.0
        %1437 = vmatpush1.msra.mxu0 0.0
        %1438 = vmatprep.subr.mxu0 0.0
        %1439 = vmatpush1.msra.mxu0 0.0
        %1440 = vmatprep.subr.mxu0 0.0
        %1441 = vmatpush1.msra.mxu0 0.0
        %1442 = vmatprep.subr.mxu0 0.0
        %1443 = vmatpush1.msra.mxu0 0.0
        %1444 = vmatprep.subr.mxu0 0.0
        %1445 = vmatpush1.msra.mxu0 0.0
        %1446 = vmatprep.subr.mxu0 0.0
        %1447 = vmatpush1.msra.mxu0 0.0
        %1448 = vmatprep.subr.mxu0 0.0
        %1449 = vmatpush1.msra.mxu0 0.0
        %1450 = vmatprep.subr.mxu0 0.0
        %1451 = vmatpush1.msra.mxu0 0.0
        %1452 = vmatprep.subr.mxu0 0.0
        %1453 = vmatpush1.msra.mxu0 %v1427
        %1454 = vmatprep.subr.mxu0 0.0
        %1455 = vmatpush1.msra.mxu0 %v1426
        %1456 = vmatprep.subr.mxu0 0.0
        %1457 = vmatpush1.msra.mxu0 %v1425
        %1458 = vmatprep.subr.mxu0 0.0
        %1459 = vmatpush1.msra.mxu0 %v1424
        %1460 = vmatprep.subr.mxu0 0.0
        %1461 = vmatpush1.msra.mxu0 %v1423
        %1462 = vmatprep.subr.mxu0 0.0
        %1463 = vmatpush1.msra.mxu0 %v1422
        %1464 = vmatprep.subr.mxu0 0.0
        %1465 = vmatpush1.msra.mxu0 %v1421
        %1466 = vmatprep.subr.mxu0 0.0
        %1467 = vmatpush1.msra.mxu0 %v1420
        %1468 = vmatprep.subr.mxu0 0.0
        %1469 = vmatpush2.msra.mxu0 0.0
        %1470 = vmatprep.subr.mxu0 0.0
        %1471 = vmatpush2.msra.mxu0 0.0
        %1472 = vmatprep.subr.mxu0 0.0
        %1473 = vmatpush2.msra.mxu0 0.0
        %1474 = vmatprep.subr.mxu0 0.0
        %1475 = vmatpush2.msra.mxu0 0.0
        %1476 = vmatprep.subr.mxu0 0.0
        %1477 = vmatpush2.msra.mxu0 0.0
        %1478 = vmatprep.subr.mxu0 0.0
        %1479 = vmatpush2.msra.mxu0 0.0
        %1480 = vmatprep.subr.mxu0 0.0
        %1481 = vmatpush2.msra.mxu0 0.0
        %1482 = vmatprep.subr.mxu0 0.0
        %1483 = vmatpush2.msra.mxu0 0.0
        %1484 = vmatprep.subr.mxu0 0.0
        %1485 = vmatpush2.msra.mxu0 0.0
        %1486 = vmatprep.subr.mxu0 0.0
        %1487 = vmatpush2.msra.mxu0 0.0
        %1488 = vmatprep.subr.mxu0 0.0
        %1489 = vmatpush2.msra.mxu0 0.0
        %1490 = vmatprep.subr.mxu0 0.0
        %1491 = vmatpush2.msra.mxu0 0.0
        %1492 = vmatprep.subr.mxu0 0.0
        %1493 = vmatpush2.msra.mxu0 0.0
        %1494 = vmatprep.subr.mxu0 0.0
        %1495 = vmatpush2.msra.mxu0 0.0
        %1496 = vmatprep.subr.mxu0 0.0
        %1497 = vmatpush2.msra.mxu0 0.0
        %1498 = vmatprep.subr.mxu0 0.0
        %1499 = vmatpush2.msra.mxu0 0.0
        %1500 = vmatprep.mubr.f32.mxu0 0.0
        %1501 = vmatmul.mubr.f32.gmra.mxu0 %v1434
        %v1502 = vpop.f32.mrf.mxu0
        %v1503 = vadd.f32 %v1431, %v1502
        %v1504 = vpop.f32.mrf.mxu0
        %1505 = vdwg.mxu0
        %v1506 = vadd.f32 %v1337, %v1503
        %v1507 = vsel %vm406, %v1506, 0.0
        %1508 = vadd.xlane.f32.xlu0 %v1507
        %v1509 = vpop.xlane.xlu0 %1508
        %v1510 = vmul.f32 %v1509, %v1317
        %v1511 = vsub.f32 %v1506, %v1510
        %v1512 = vmul.f32 %v1511, %v1511
        %v1513 = vsel %vm406, %v1512, 0.0
        %1514 = vadd.xlane.f32.xlu0 %v1513
        %v1515 = vpop.xlane.xlu0 %1514
        %v1516 = vmul.f32 %v1515, %v1317
        %v1517 = vadd.f32 %v1516, 1e-05
        %v1518 = vrsqrt.pop %v1517
        %v1519 = vmul.f32 %v1511, %v1518
        %v1520 = vlaneseq
        %v1521 = vshrl.u32 %v1520, 7
        %v1522 = vsub.s32 0, %v1521
        %v1523 = vrot.slane %v395, %v1522
        %v1524 = vmul.f32 %v1519, %v1523
        %v1525 = vlaneseq
        %v1526 = vshrl.u32 %v1525, 7
        %v1527 = vsub.s32 0, %v1526
        %v1528 = vrot.slane %v396, %v1527
        %v1529 = vadd.f32 %v1524, %v1528
        %v1530 = vld [vmem:[#allocation8 + $0x8] sm:$0x1]
        %v1531 = vld [vmem:[#allocation8 + $0x9] sm:$0x1]
        %v1532 = vld [vmem:[#allocation8 + $0xa] sm:$0x1]
        %v1533 = vld [vmem:[#allocation8 + $0xb] sm:$0x1]
        %v1534 = vld [vmem:[#allocation8 + $0xc] sm:$0x1]
        %v1535 = vld [vmem:[#allocation8 + $0xd] sm:$0x1]
        %v1536 = vld [vmem:[#allocation8 + $0xe] sm:$0x1]
        %v1537 = vld [vmem:[#allocation8 + $0xf] sm:$0x1]
        %v1538 = vadd.f32 %v1529, %v388
        %s1539 = scalar_lea.vmem %s2, 32
        %v1540 = vld [vmem:[%s1539] sm:$0xff]
        %v1541 = vld [vmem:[%s1539 + $0x8] sm:$0xff]
        %v1542 = vld [vmem:[%s1539 + $0x10] sm:$0xff]
        %v1543 = vld [vmem:[%s1539 + $0x18] sm:$0xff]
        %v1544 = vlaneseq
        %v1545 = vshrl.u32 %v1544, 7
        %v1546 = vsub.s32 0, %v1545
        %v1547 = vrot.slane %v1530, %v1546
        %v1549 = vsel %vm406, %v1538, 0
        %1551 = vmatprep.subr.mxu0 0.0
        %1552 = vmatpush1.msra.mxu0 0.0
        %1553 = vmatprep.subr.mxu0 0.0
        %1554 = vmatpush1.msra.mxu0 0.0
        %1555 = vmatprep.subr.mxu0 0.0
        %1556 = vmatpush1.msra.mxu0 0.0
        %1557 = vmatprep.subr.mxu0 0.0
        %1558 = vmatpush1.msra.mxu0 0.0
        %1559 = vmatprep.subr.mxu0 0.0
        %1560 = vmatpush1.msra.mxu0 0.0
        %1561 = vmatprep.subr.mxu0 0.0
        %1562 = vmatpush1.msra.mxu0 0.0
        %1563 = vmatprep.subr.mxu0 0.0
        %1564 = vmatpush1.msra.mxu0 0.0
        %1565 = vmatprep.subr.mxu0 0.0
        %1566 = vmatpush1.msra.mxu0 0.0
        %1567 = vmatprep.subr.mxu0 0.0
        %1568 = vmatpush1.msra.mxu0 0.0
        %1569 = vmatprep.subr.mxu0 0.0
        %1570 = vmatpush1.msra.mxu0 0.0
        %1571 = vmatprep.subr.mxu0 0.0
        %1572 = vmatpush1.msra.mxu0 0.0
        %1573 = vmatprep.subr.mxu0 0.0
        %1574 = vmatpush1.msra.mxu0 0.0
        %1575 = vmatprep.subr.mxu0 0.0
        %1576 = vmatpush1.msra.mxu0 %v1543
        %1577 = vmatprep.subr.mxu0 0.0
        %1578 = vmatpush1.msra.mxu0 %v1542
        %1579 = vmatprep.subr.mxu0 0.0
        %1580 = vmatpush1.msra.mxu0 %v1541
        %1581 = vmatprep.subr.mxu0 0.0
        %1582 = vmatpush1.msra.mxu0 %v1540
        %1583 = vmatprep.subr.mxu0 0.0
        %1584 = vmatpush2.msra.mxu0 0.0
        %1585 = vmatprep.subr.mxu0 0.0
        %1586 = vmatpush2.msra.mxu0 0.0
        %1587 = vmatprep.subr.mxu0 0.0
        %1588 = vmatpush2.msra.mxu0 0.0
        %1589 = vmatprep.subr.mxu0 0.0
        %1590 = vmatpush2.msra.mxu0 0.0
        %1591 = vmatprep.subr.mxu0 0.0
        %1592 = vmatpush2.msra.mxu0 0.0
        %1593 = vmatprep.subr.mxu0 0.0
        %1594 = vmatpush2.msra.mxu0 0.0
        %1595 = vmatprep.subr.mxu0 0.0
        %1596 = vmatpush2.msra.mxu0 0.0
        %1597 = vmatprep.subr.mxu0 0.0
        %1598 = vmatpush2.msra.mxu0 0.0
        %1599 = vmatprep.subr.mxu0 0.0
        %1600 = vmatpush2.msra.mxu0 0.0
        %1601 = vmatprep.subr.mxu0 0.0
        %1602 = vmatpush2.msra.mxu0 0.0
        %1603 = vmatprep.subr.mxu0 0.0
        %1604 = vmatpush2.msra.mxu0 0.0
        %1605 = vmatprep.subr.mxu0 0.0
        %1606 = vmatpush2.msra.mxu0 0.0
        %1607 = vmatprep.subr.mxu0 0.0
        %1608 = vmatpush2.msra.mxu0 0.0
        %1609 = vmatprep.subr.mxu0 0.0
        %1610 = vmatpush2.msra.mxu0 0.0
        %1611 = vmatprep.subr.mxu0 0.0
        %1612 = vmatpush2.msra.mxu0 0.0
        %1613 = vmatprep.subr.mxu0 0.0
        %1614 = vmatpush2.msra.mxu0 0.0
        %1615 = vmatprep.mubr.f32.mxu0 0.0
        %1616 = vmatmul.mubr.f32.gmra.mxu0 %v1549
        %v1617 = vpop.f32.mrf.mxu0
        %v1618 = vadd.f32 %v1547, %v1617
        %v1619 = vpop.f32.mrf.mxu0
        %1620 = vdwg.mxu0
        %s1621 = scalar_lea.vmem %s3, 32
        %v1622 = vld [vmem:[%s1621] sm:$0xff]
        %v1623 = vld [vmem:[%s1621 + $0x8] sm:$0xff]
        %v1624 = vld [vmem:[%s1621 + $0x10] sm:$0xff]
        %v1625 = vld [vmem:[%s1621 + $0x18] sm:$0xff]
        %v1627 = vsel %vm406, %v1529, 0
        %1629 = vmatprep.subr.mxu0 0.0
        %1630 = vmatpush1.msra.mxu0 0.0
        %1631 = vmatprep.subr.mxu0 0.0
        %1632 = vmatpush1.msra.mxu0 0.0
        %1633 = vmatprep.subr.mxu0 0.0
        %1634 = vmatpush1.msra.mxu0 0.0
        %1635 = vmatprep.subr.mxu0 0.0
        %1636 = vmatpush1.msra.mxu0 0.0
        %1637 = vmatprep.subr.mxu0 0.0
        %1638 = vmatpush1.msra.mxu0 0.0
        %1639 = vmatprep.subr.mxu0 0.0
        %1640 = vmatpush1.msra.mxu0 0.0
        %1641 = vmatprep.subr.mxu0 0.0
        %1642 = vmatpush1.msra.mxu0 0.0
        %1643 = vmatprep.subr.mxu0 0.0
        %1644 = vmatpush1.msra.mxu0 0.0
        %1645 = vmatprep.subr.mxu0 0.0
        %1646 = vmatpush1.msra.mxu0 0.0
        %1647 = vmatprep.subr.mxu0 0.0
        %1648 = vmatpush1.msra.mxu0 0.0
        %1649 = vmatprep.subr.mxu0 0.0
        %1650 = vmatpush1.msra.mxu0 0.0
        %1651 = vmatprep.subr.mxu0 0.0
        %1652 = vmatpush1.msra.mxu0 0.0
        %1653 = vmatprep.subr.mxu0 0.0
        %1654 = vmatpush1.msra.mxu0 %v1625
        %1655 = vmatprep.subr.mxu0 0.0
        %1656 = vmatpush1.msra.mxu0 %v1624
        %1657 = vmatprep.subr.mxu0 0.0
        %1658 = vmatpush1.msra.mxu0 %v1623
        %1659 = vmatprep.subr.mxu0 0.0
        %1660 = vmatpush1.msra.mxu0 %v1622
        %1661 = vmatprep.subr.mxu0 0.0
        %1662 = vmatpush2.msra.mxu0 0.0
        %1663 = vmatprep.subr.mxu0 0.0
        %1664 = vmatpush2.msra.mxu0 0.0
        %1665 = vmatprep.subr.mxu0 0.0
        %1666 = vmatpush2.msra.mxu0 0.0
        %1667 = vmatprep.subr.mxu0 0.0
        %1668 = vmatpush2.msra.mxu0 0.0
        %1669 = vmatprep.subr.mxu0 0.0
        %1670 = vmatpush2.msra.mxu0 0.0
        %1671 = vmatprep.subr.mxu0 0.0
        %1672 = vmatpush2.msra.mxu0 0.0
        %1673 = vmatprep.subr.mxu0 0.0
        %1674 = vmatpush2.msra.mxu0 0.0
        %1675 = vmatprep.subr.mxu0 0.0
        %1676 = vmatpush2.msra.mxu0 0.0
        %1677 = vmatprep.subr.mxu0 0.0
        %1678 = vmatpush2.msra.mxu0 0.0
        %1679 = vmatprep.subr.mxu0 0.0
        %1680 = vmatpush2.msra.mxu0 0.0
        %1681 = vmatprep.subr.mxu0 0.0
        %1682 = vmatpush2.msra.mxu0 0.0
        %1683 = vmatprep.subr.mxu0 0.0
        %1684 = vmatpush2.msra.mxu0 0.0
        %1685 = vmatprep.subr.mxu0 0.0
        %1686 = vmatpush2.msra.mxu0 0.0
        %1687 = vmatprep.subr.mxu0 0.0
        %1688 = vmatpush2.msra.mxu0 0.0
        %1689 = vmatprep.subr.mxu0 0.0
        %1690 = vmatpush2.msra.mxu0 0.0
        %1691 = vmatprep.subr.mxu0 0.0
        %1692 = vmatpush2.msra.mxu0 0.0
        %1693 = vmatprep.mubr.f32.mxu0 0.0
        %1694 = vmatmul.mubr.f32.gmra.mxu0 %v1627
        %v1695 = vpop.f32.mrf.mxu0
        %v1696 = vadd.f32 0.0, %v1695
        %v1697 = vpop.f32.mrf.mxu0
        %1698 = vdwg.mxu0
        %1700 = vrot.lane.b32.xlu0 %v1618, 96
        %v1701 = vpop.permute.xlu0 %1700
        %v1702 = vsel %vm560, %v1618, 0
        %v1704 = vsel %vm560, %v1701, 0
        %1706 = vmatprep.subr.mxu0 0.0
        %1707 = vmatpush1.xpose.msra.mxu0 0.0
        %1708 = vmatprep.subr.mxu0 0.0
        %1709 = vmatpush1.xpose.msra.mxu0 0.0
        %1710 = vmatprep.subr.mxu0 0.0
        %1711 = vmatpush1.xpose.msra.mxu0 0.0
        %1712 = vmatprep.subr.mxu0 0.0
        %1713 = vmatpush1.xpose.msra.mxu0 0.0
        %1714 = vmatprep.subr.mxu0 0.0
        %1715 = vmatpush1.xpose.msra.mxu0 0.0
        %1716 = vmatprep.subr.mxu0 0.0
        %1717 = vmatpush1.xpose.msra.mxu0 0.0
        %1718 = vmatprep.subr.mxu0 0.0
        %1719 = vmatpush1.xpose.msra.mxu0 0.0
        %1720 = vmatprep.subr.mxu0 0.0
        %1721 = vmatpush1.xpose.msra.mxu0 0.0
        %1722 = vmatprep.subr.mxu0 0.0
        %1723 = vmatpush1.xpose.msra.mxu0 0.0
        %1724 = vmatprep.subr.mxu0 0.0
        %1725 = vmatpush1.xpose.msra.mxu0 0.0
        %1726 = vmatprep.subr.mxu0 0.0
        %1727 = vmatpush1.xpose.msra.mxu0 0.0
        %1728 = vmatprep.subr.mxu0 0.0
        %1729 = vmatpush1.xpose.msra.mxu0 0.0
        %1730 = vmatprep.subr.mxu0 0.0
        %1731 = vmatpush1.xpose.msra.mxu0 0.0
        %1732 = vmatprep.subr.mxu0 0.0
        %1733 = vmatpush1.xpose.msra.mxu0 0.0
        %1734 = vmatprep.subr.mxu0 0.0
        %1735 = vmatpush1.xpose.msra.mxu0 0.0
        %1736 = vmatprep.subr.mxu0 0.0
        %1737 = vmatpush1.xpose.msra.mxu0 %v1704
        %1738 = vmatprep.subr.mxu0 0.0
        %1739 = vmatpush2.xpose.msra.mxu0 0.0
        %1740 = vmatprep.subr.mxu0 0.0
        %1741 = vmatpush2.xpose.msra.mxu0 0.0
        %1742 = vmatprep.subr.mxu0 0.0
        %1743 = vmatpush2.xpose.msra.mxu0 0.0
        %1744 = vmatprep.subr.mxu0 0.0
        %1745 = vmatpush2.xpose.msra.mxu0 0.0
        %1746 = vmatprep.subr.mxu0 0.0
        %1747 = vmatpush2.xpose.msra.mxu0 0.0
        %1748 = vmatprep.subr.mxu0 0.0
        %1749 = vmatpush2.xpose.msra.mxu0 0.0
        %1750 = vmatprep.subr.mxu0 0.0
        %1751 = vmatpush2.xpose.msra.mxu0 0.0
        %1752 = vmatprep.subr.mxu0 0.0
        %1753 = vmatpush2.xpose.msra.mxu0 0.0
        %1754 = vmatprep.subr.mxu0 0.0
        %1755 = vmatpush2.xpose.msra.mxu0 0.0
        %1756 = vmatprep.subr.mxu0 0.0
        %1757 = vmatpush2.xpose.msra.mxu0 0.0
        %1758 = vmatprep.subr.mxu0 0.0
        %1759 = vmatpush2.xpose.msra.mxu0 0.0
        %1760 = vmatprep.subr.mxu0 0.0
        %1761 = vmatpush2.xpose.msra.mxu0 0.0
        %1762 = vmatprep.subr.mxu0 0.0
        %1763 = vmatpush2.xpose.msra.mxu0 0.0
        %1764 = vmatprep.subr.mxu0 0.0
        %1765 = vmatpush2.xpose.msra.mxu0 0.0
        %1766 = vmatprep.subr.mxu0 0.0
        %1767 = vmatpush2.xpose.msra.mxu0 0.0
        %1768 = vmatprep.subr.mxu0 0.0
        %1769 = vmatpush2.xpose.msra.mxu0 0.0
        %1770 = vmatprep.mubr.f32.mxu0 0.0
        %1771 = vmatmul.mubr.f32.gmra.mxu0 %v1702
        %v1772 = vpop.f32.mrf.mxu0
        %v1773 = vadd.f32 0.0, %v1772
        %v1774 = vpop.f32.mrf.mxu0
        %1775 = vdwg.mxu0
        %v1776 = vsel %vm560, %v1773, -inf
        %1777 = vmax.xlane.f32.xlu0 %v1776
        %v1778 = vpop.xlane.xlu0 %1777
        %v1779 = vsub.f32 %v1773, %v1778
        %v1780 = vmul.f32 %v1779, 1.442695
        %v1781 = vpow.pop %v1780
        %v1782 = vsel %vm560, %v1781, 0.0
        %1783 = vadd.xlane.f32.xlu0 %v1782
        %v1784 = vpop.xlane.xlu0 %1783
        %v1785 = vrcp.pop %v1784
        %v1786 = vmul.f32 %v1781, %v1785
        %v1788 = vsel %vm560, %v1786, 0
        %1790 = vmatprep.subr.mxu0 0.0
        %1791 = vmatpush1.msra.mxu0 0.0
        %1792 = vmatprep.subr.mxu0 0.0
        %1793 = vmatpush1.msra.mxu0 0.0
        %1794 = vmatprep.subr.mxu0 0.0
        %1795 = vmatpush1.msra.mxu0 0.0
        %1796 = vmatprep.subr.mxu0 0.0
        %1797 = vmatpush1.msra.mxu0 0.0
        %1798 = vmatprep.subr.mxu0 0.0
        %1799 = vmatpush1.msra.mxu0 0.0
        %1800 = vmatprep.subr.mxu0 0.0
        %1801 = vmatpush1.msra.mxu0 0.0
        %1802 = vmatprep.subr.mxu0 0.0
        %1803 = vmatpush1.msra.mxu0 0.0
        %1804 = vmatprep.subr.mxu0 0.0
        %1805 = vmatpush1.msra.mxu0 0.0
        %1806 = vmatprep.subr.mxu0 0.0
        %1807 = vmatpush1.msra.mxu0 0.0
        %1808 = vmatprep.subr.mxu0 0.0
        %1809 = vmatpush1.msra.mxu0 0.0
        %1810 = vmatprep.subr.mxu0 0.0
        %1811 = vmatpush1.msra.mxu0 0.0
        %1812 = vmatprep.subr.mxu0 0.0
        %1813 = vmatpush1.msra.mxu0 0.0
        %1814 = vmatprep.subr.mxu0 0.0
        %1815 = vmatpush1.msra.mxu0 0.0
        %1816 = vmatprep.subr.mxu0 0.0
        %1817 = vmatpush1.msra.mxu0 0.0
        %1818 = vmatprep.subr.mxu0 0.0
        %1819 = vmatpush1.msra.mxu0 0.0
        %1820 = vmatprep.subr.mxu0 0.0
        %1821 = vmatpush1.msra.mxu0 %v1696
        %1822 = vmatprep.subr.mxu0 0.0
        %1823 = vmatpush2.msra.mxu0 0.0
        %1824 = vmatprep.subr.mxu0 0.0
        %1825 = vmatpush2.msra.mxu0 0.0
        %1826 = vmatprep.subr.mxu0 0.0
        %1827 = vmatpush2.msra.mxu0 0.0
        %1828 = vmatprep.subr.mxu0 0.0
        %1829 = vmatpush2.msra.mxu0 0.0
        %1830 = vmatprep.subr.mxu0 0.0
        %1831 = vmatpush2.msra.mxu0 0.0
        %1832 = vmatprep.subr.mxu0 0.0
        %1833 = vmatpush2.msra.mxu0 0.0
        %1834 = vmatprep.subr.mxu0 0.0
        %1835 = vmatpush2.msra.mxu0 0.0
        %1836 = vmatprep.subr.mxu0 0.0
        %1837 = vmatpush2.msra.mxu0 0.0
        %1838 = vmatprep.subr.mxu0 0.0
        %1839 = vmatpush2.msra.mxu0 0.0
        %1840 = vmatprep.subr.mxu0 0.0
        %1841 = vmatpush2.msra.mxu0 0.0
        %1842 = vmatprep.subr.mxu0 0.0
        %1843 = vmatpush2.msra.mxu0 0.0
        %1844 = vmatprep.subr.mxu0 0.0
        %1845 = vmatpush2.msra.mxu0 0.0
        %1846 = vmatprep.subr.mxu0 0.0
        %1847 = vmatpush2.msra.mxu0 0.0
        %1848 = vmatprep.subr.mxu0 0.0
        %1849 = vmatpush2.msra.mxu0 0.0
        %1850 = vmatprep.subr.mxu0 0.0
        %1851 = vmatpush2.msra.mxu0 0.0
        %1852 = vmatprep.subr.mxu0 0.0
        %1853 = vmatpush2.msra.mxu0 0.0
        %1854 = vmatprep.mubr.f32.mxu0 0.0
        %1855 = vmatmul.mubr.f32.gmra.mxu0 %v1788
        %v1856 = vpop.f32.mrf.mxu0
        %v1857 = vadd.f32 0.0, %v1856
        %v1858 = vpop.f32.mrf.mxu0
        %1859 = vdwg.mxu0
        %1860 = vrot.lane.b32.xlu0 %v1618, 120
        %v1861 = vpop.permute.xlu0 %1860
        %1862 = vrot.lane.b32.xlu0 %v1618, 88
        %v1863 = vpop.permute.xlu0 %1862
        %v1864 = vsel %vm560, %v1861, 0
        %v1866 = vsel %vm560, %v1863, 0
        %1868 = vmatprep.subr.mxu0 0.0
        %1869 = vmatpush1.xpose.msra.mxu0 0.0
        %1870 = vmatprep.subr.mxu0 0.0
        %1871 = vmatpush1.xpose.msra.mxu0 0.0
        %1872 = vmatprep.subr.mxu0 0.0
        %1873 = vmatpush1.xpose.msra.mxu0 0.0
        %1874 = vmatprep.subr.mxu0 0.0
        %1875 = vmatpush1.xpose.msra.mxu0 0.0
        %1876 = vmatprep.subr.mxu0 0.0
        %1877 = vmatpush1.xpose.msra.mxu0 0.0
        %1878 = vmatprep.subr.mxu0 0.0
        %1879 = vmatpush1.xpose.msra.mxu0 0.0
        %1880 = vmatprep.subr.mxu0 0.0
        %1881 = vmatpush1.xpose.msra.mxu0 0.0
        %1882 = vmatprep.subr.mxu0 0.0
        %1883 = vmatpush1.xpose.msra.mxu0 0.0
        %1884 = vmatprep.subr.mxu0 0.0
        %1885 = vmatpush1.xpose.msra.mxu0 0.0
        %1886 = vmatprep.subr.mxu0 0.0
        %1887 = vmatpush1.xpose.msra.mxu0 0.0
        %1888 = vmatprep.subr.mxu0 0.0
        %1889 = vmatpush1.xpose.msra.mxu0 0.0
        %1890 = vmatprep.subr.mxu0 0.0
        %1891 = vmatpush1.xpose.msra.mxu0 0.0
        %1892 = vmatprep.subr.mxu0 0.0
        %1893 = vmatpush1.xpose.msra.mxu0 0.0
        %1894 = vmatprep.subr.mxu0 0.0
        %1895 = vmatpush1.xpose.msra.mxu0 0.0
        %1896 = vmatprep.subr.mxu0 0.0
        %1897 = vmatpush1.xpose.msra.mxu0 0.0
        %1898 = vmatprep.subr.mxu0 0.0
        %1899 = vmatpush1.xpose.msra.mxu0 %v1866
        %1900 = vmatprep.subr.mxu0 0.0
        %1901 = vmatpush2.xpose.msra.mxu0 0.0
        %1902 = vmatprep.subr.mxu0 0.0
        %1903 = vmatpush2.xpose.msra.mxu0 0.0
        %1904 = vmatprep.subr.mxu0 0.0
        %1905 = vmatpush2.xpose.msra.mxu0 0.0
        %1906 = vmatprep.subr.mxu0 0.0
        %1907 = vmatpush2.xpose.msra.mxu0 0.0
        %1908 = vmatprep.subr.mxu0 0.0
        %1909 = vmatpush2.xpose.msra.mxu0 0.0
        %1910 = vmatprep.subr.mxu0 0.0
        %1911 = vmatpush2.xpose.msra.mxu0 0.0
        %1912 = vmatprep.subr.mxu0 0.0
        %1913 = vmatpush2.xpose.msra.mxu0 0.0
        %1914 = vmatprep.subr.mxu0 0.0
        %1915 = vmatpush2.xpose.msra.mxu0 0.0
        %1916 = vmatprep.subr.mxu0 0.0
        %1917 = vmatpush2.xpose.msra.mxu0 0.0
        %1918 = vmatprep.subr.mxu0 0.0
        %1919 = vmatpush2.xpose.msra.mxu0 0.0
        %1920 = vmatprep.subr.mxu0 0.0
        %1921 = vmatpush2.xpose.msra.mxu0 0.0
        %1922 = vmatprep.subr.mxu0 0.0
        %1923 = vmatpush2.xpose.msra.mxu0 0.0
        %1924 = vmatprep.subr.mxu0 0.0
        %1925 = vmatpush2.xpose.msra.mxu0 0.0
        %1926 = vmatprep.subr.mxu0 0.0
        %1927 = vmatpush2.xpose.msra.mxu0 0.0
        %1928 = vmatprep.subr.mxu0 0.0
        %1929 = vmatpush2.xpose.msra.mxu0 0.0
        %1930 = vmatprep.subr.mxu0 0.0
        %1931 = vmatpush2.xpose.msra.mxu0 0.0
        %1932 = vmatprep.mubr.f32.mxu0 0.0
        %1933 = vmatmul.mubr.f32.gmra.mxu0 %v1864
        %v1934 = vpop.f32.mrf.mxu0
        %v1935 = vadd.f32 0.0, %v1934
        %v1936 = vpop.f32.mrf.mxu0
        %1937 = vdwg.mxu0
        %v1938 = vsel %vm560, %v1935, -inf
        %1939 = vmax.xlane.f32.xlu0 %v1938
        %v1940 = vpop.xlane.xlu0 %1939
        %v1941 = vsub.f32 %v1935, %v1940
        %v1942 = vmul.f32 %v1941, 1.442695
        %v1943 = vpow.pop %v1942
        %v1944 = vsel %vm560, %v1943, 0.0
        %1945 = vadd.xlane.f32.xlu0 %v1944
        %v1946 = vpop.xlane.xlu0 %1945
        %v1947 = vrcp.pop %v1946
        %v1948 = vmul.f32 %v1943, %v1947
        %1950 = vrot.lane.b32.xlu0 %v1696, 120
        %v1951 = vpop.permute.xlu0 %1950
        %v1954 = vsel %vm560, %v1948, 0
        %1956 = vmatprep.subr.mxu0 0.0
        %1957 = vmatpush1.msra.mxu0 0.0
        %1958 = vmatprep.subr.mxu0 0.0
        %1959 = vmatpush1.msra.mxu0 0.0
        %1960 = vmatprep.subr.mxu0 0.0
        %1961 = vmatpush1.msra.mxu0 0.0
        %1962 = vmatprep.subr.mxu0 0.0
        %1963 = vmatpush1.msra.mxu0 0.0
        %1964 = vmatprep.subr.mxu0 0.0
        %1965 = vmatpush1.msra.mxu0 0.0
        %1966 = vmatprep.subr.mxu0 0.0
        %1967 = vmatpush1.msra.mxu0 0.0
        %1968 = vmatprep.subr.mxu0 0.0
        %1969 = vmatpush1.msra.mxu0 0.0
        %1970 = vmatprep.subr.mxu0 0.0
        %1971 = vmatpush1.msra.mxu0 0.0
        %1972 = vmatprep.subr.mxu0 0.0
        %1973 = vmatpush1.msra.mxu0 0.0
        %1974 = vmatprep.subr.mxu0 0.0
        %1975 = vmatpush1.msra.mxu0 0.0
        %1976 = vmatprep.subr.mxu0 0.0
        %1977 = vmatpush1.msra.mxu0 0.0
        %1978 = vmatprep.subr.mxu0 0.0
        %1979 = vmatpush1.msra.mxu0 0.0
        %1980 = vmatprep.subr.mxu0 0.0
        %1981 = vmatpush1.msra.mxu0 0.0
        %1982 = vmatprep.subr.mxu0 0.0
        %1983 = vmatpush1.msra.mxu0 0.0
        %1984 = vmatprep.subr.mxu0 0.0
        %1985 = vmatpush1.msra.mxu0 0.0
        %1986 = vmatprep.subr.mxu0 0.0
        %1987 = vmatpush1.msra.mxu0 %v1951
        %1988 = vmatprep.subr.mxu0 0.0
        %1989 = vmatpush2.msra.mxu0 0.0
        %1990 = vmatprep.subr.mxu0 0.0
        %1991 = vmatpush2.msra.mxu0 0.0
        %1992 = vmatprep.subr.mxu0 0.0
        %1993 = vmatpush2.msra.mxu0 0.0
        %1994 = vmatprep.subr.mxu0 0.0
        %1995 = vmatpush2.msra.mxu0 0.0
        %1996 = vmatprep.subr.mxu0 0.0
        %1997 = vmatpush2.msra.mxu0 0.0
        %1998 = vmatprep.subr.mxu0 0.0
        %1999 = vmatpush2.msra.mxu0 0.0
        %2000 = vmatprep.subr.mxu0 0.0
        %2001 = vmatpush2.msra.mxu0 0.0
        %2002 = vmatprep.subr.mxu0 0.0
        %2003 = vmatpush2.msra.mxu0 0.0
        %2004 = vmatprep.subr.mxu0 0.0
        %2005 = vmatpush2.msra.mxu0 0.0
        %2006 = vmatprep.subr.mxu0 0.0
        %2007 = vmatpush2.msra.mxu0 0.0
        %2008 = vmatprep.subr.mxu0 0.0
        %2009 = vmatpush2.msra.mxu0 0.0
        %2010 = vmatprep.subr.mxu0 0.0
        %2011 = vmatpush2.msra.mxu0 0.0
        %2012 = vmatprep.subr.mxu0 0.0
        %2013 = vmatpush2.msra.mxu0 0.0
        %2014 = vmatprep.subr.mxu0 0.0
        %2015 = vmatpush2.msra.mxu0 0.0
        %2016 = vmatprep.subr.mxu0 0.0
        %2017 = vmatpush2.msra.mxu0 0.0
        %2018 = vmatprep.subr.mxu0 0.0
        %2019 = vmatpush2.msra.mxu0 0.0
        %2020 = vmatprep.mubr.f32.mxu0 0.0
        %2021 = vmatmul.mubr.f32.gmra.mxu0 %v1954
        %v2022 = vpop.f32.mrf.mxu0
        %v2023 = vadd.f32 0.0, %v2022
        %v2024 = vpop.f32.mrf.mxu0
        %2025 = vdwg.mxu0
        %2026 = vrot.lane.b32.xlu0 %v1618, 112
        %v2027 = vpop.permute.xlu0 %2026
        %2028 = vrot.lane.b32.xlu0 %v1618, 80
        %v2029 = vpop.permute.xlu0 %2028
        %v2030 = vsel %vm560, %v2027, 0
        %v2032 = vsel %vm560, %v2029, 0
        %2034 = vmatprep.subr.mxu0 0.0
        %2035 = vmatpush1.xpose.msra.mxu0 0.0
        %2036 = vmatprep.subr.mxu0 0.0
        %2037 = vmatpush1.xpose.msra.mxu0 0.0
        %2038 = vmatprep.subr.mxu0 0.0
        %2039 = vmatpush1.xpose.msra.mxu0 0.0
        %2040 = vmatprep.subr.mxu0 0.0
        %2041 = vmatpush1.xpose.msra.mxu0 0.0
        %2042 = vmatprep.subr.mxu0 0.0
        %2043 = vmatpush1.xpose.msra.mxu0 0.0
        %2044 = vmatprep.subr.mxu0 0.0
        %2045 = vmatpush1.xpose.msra.mxu0 0.0
        %2046 = vmatprep.subr.mxu0 0.0
        %2047 = vmatpush1.xpose.msra.mxu0 0.0
        %2048 = vmatprep.subr.mxu0 0.0
        %2049 = vmatpush1.xpose.msra.mxu0 0.0
        %2050 = vmatprep.subr.mxu0 0.0
        %2051 = vmatpush1.xpose.msra.mxu0 0.0
        %2052 = vmatprep.subr.mxu0 0.0
        %2053 = vmatpush1.xpose.msra.mxu0 0.0
        %2054 = vmatprep.subr.mxu0 0.0
        %2055 = vmatpush1.xpose.msra.mxu0 0.0
        %2056 = vmatprep.subr.mxu0 0.0
        %2057 = vmatpush1.xpose.msra.mxu0 0.0
        %2058 = vmatprep.subr.mxu0 0.0
        %2059 = vmatpush1.xpose.msra.mxu0 0.0
        %2060 = vmatprep.subr.mxu0 0.0
        %2061 = vmatpush1.xpose.msra.mxu0 0.0
        %2062 = vmatprep.subr.mxu0 0.0
        %2063 = vmatpush1.xpose.msra.mxu0 0.0
        %2064 = vmatprep.subr.mxu0 0.0
        %2065 = vmatpush1.xpose.msra.mxu0 %v2032
        %2066 = vmatprep.subr.mxu0 0.0
        %2067 = vmatpush2.xpose.msra.mxu0 0.0
        %2068 = vmatprep.subr.mxu0 0.0
        %2069 = vmatpush2.xpose.msra.mxu0 0.0
        %2070 = vmatprep.subr.mxu0 0.0
        %2071 = vmatpush2.xpose.msra.mxu0 0.0
        %2072 = vmatprep.subr.mxu0 0.0
        %2073 = vmatpush2.xpose.msra.mxu0 0.0
        %2074 = vmatprep.subr.mxu0 0.0
        %2075 = vmatpush2.xpose.msra.mxu0 0.0
        %2076 = vmatprep.subr.mxu0 0.0
        %2077 = vmatpush2.xpose.msra.mxu0 0.0
        %2078 = vmatprep.subr.mxu0 0.0
        %2079 = vmatpush2.xpose.msra.mxu0 0.0
        %2080 = vmatprep.subr.mxu0 0.0
        %2081 = vmatpush2.xpose.msra.mxu0 0.0
        %2082 = vmatprep.subr.mxu0 0.0
        %2083 = vmatpush2.xpose.msra.mxu0 0.0
        %2084 = vmatprep.subr.mxu0 0.0
        %2085 = vmatpush2.xpose.msra.mxu0 0.0
        %2086 = vmatprep.subr.mxu0 0.0
        %2087 = vmatpush2.xpose.msra.mxu0 0.0
        %2088 = vmatprep.subr.mxu0 0.0
        %2089 = vmatpush2.xpose.msra.mxu0 0.0
        %2090 = vmatprep.subr.mxu0 0.0
        %2091 = vmatpush2.xpose.msra.mxu0 0.0
        %2092 = vmatprep.subr.mxu0 0.0
        %2093 = vmatpush2.xpose.msra.mxu0 0.0
        %2094 = vmatprep.subr.mxu0 0.0
        %2095 = vmatpush2.xpose.msra.mxu0 0.0
        %2096 = vmatprep.subr.mxu0 0.0
        %2097 = vmatpush2.xpose.msra.mxu0 0.0
        %2098 = vmatprep.mubr.f32.mxu0 0.0
        %2099 = vmatmul.mubr.f32.gmra.mxu0 %v2030
        %v2100 = vpop.f32.mrf.mxu0
        %v2101 = vadd.f32 0.0, %v2100
        %v2102 = vpop.f32.mrf.mxu0
        %2103 = vdwg.mxu0
        %v2104 = vsel %vm560, %v2101, -inf
        %2105 = vmax.xlane.f32.xlu0 %v2104
        %v2106 = vpop.xlane.xlu0 %2105
        %v2107 = vsub.f32 %v2101, %v2106
        %v2108 = vmul.f32 %v2107, 1.442695
        %v2109 = vpow.pop %v2108
        %v2110 = vsel %vm560, %v2109, 0.0
        %2111 = vadd.xlane.f32.xlu0 %v2110
        %v2112 = vpop.xlane.xlu0 %2111
        %v2113 = vrcp.pop %v2112
        %v2114 = vmul.f32 %v2109, %v2113
        %2115 = vrot.lane.b32.xlu0 %v1696, 112
        %v2116 = vpop.permute.xlu0 %2115
        %v2119 = vsel %vm560, %v2114, 0
        %2121 = vmatprep.subr.mxu0 0.0
        %2122 = vmatpush1.msra.mxu0 0.0
        %2123 = vmatprep.subr.mxu0 0.0
        %2124 = vmatpush1.msra.mxu0 0.0
        %2125 = vmatprep.subr.mxu0 0.0
        %2126 = vmatpush1.msra.mxu0 0.0
        %2127 = vmatprep.subr.mxu0 0.0
        %2128 = vmatpush1.msra.mxu0 0.0
        %2129 = vmatprep.subr.mxu0 0.0
        %2130 = vmatpush1.msra.mxu0 0.0
        %2131 = vmatprep.subr.mxu0 0.0
        %2132 = vmatpush1.msra.mxu0 0.0
        %2133 = vmatprep.subr.mxu0 0.0
        %2134 = vmatpush1.msra.mxu0 0.0
        %2135 = vmatprep.subr.mxu0 0.0
        %2136 = vmatpush1.msra.mxu0 0.0
        %2137 = vmatprep.subr.mxu0 0.0
        %2138 = vmatpush1.msra.mxu0 0.0
        %2139 = vmatprep.subr.mxu0 0.0
        %2140 = vmatpush1.msra.mxu0 0.0
        %2141 = vmatprep.subr.mxu0 0.0
        %2142 = vmatpush1.msra.mxu0 0.0
        %2143 = vmatprep.subr.mxu0 0.0
        %2144 = vmatpush1.msra.mxu0 0.0
        %2145 = vmatprep.subr.mxu0 0.0
        %2146 = vmatpush1.msra.mxu0 0.0
        %2147 = vmatprep.subr.mxu0 0.0
        %2148 = vmatpush1.msra.mxu0 0.0
        %2149 = vmatprep.subr.mxu0 0.0
        %2150 = vmatpush1.msra.mxu0 0.0
        %2151 = vmatprep.subr.mxu0 0.0
        %2152 = vmatpush1.msra.mxu0 %v2116
        %2153 = vmatprep.subr.mxu0 0.0
        %2154 = vmatpush2.msra.mxu0 0.0
        %2155 = vmatprep.subr.mxu0 0.0
        %2156 = vmatpush2.msra.mxu0 0.0
        %2157 = vmatprep.subr.mxu0 0.0
        %2158 = vmatpush2.msra.mxu0 0.0
        %2159 = vmatprep.subr.mxu0 0.0
        %2160 = vmatpush2.msra.mxu0 0.0
        %2161 = vmatprep.subr.mxu0 0.0
        %2162 = vmatpush2.msra.mxu0 0.0
        %2163 = vmatprep.subr.mxu0 0.0
        %2164 = vmatpush2.msra.mxu0 0.0
        %2165 = vmatprep.subr.mxu0 0.0
        %2166 = vmatpush2.msra.mxu0 0.0
        %2167 = vmatprep.subr.mxu0 0.0
        %2168 = vmatpush2.msra.mxu0 0.0
        %2169 = vmatprep.subr.mxu0 0.0
        %2170 = vmatpush2.msra.mxu0 0.0
        %2171 = vmatprep.subr.mxu0 0.0
        %2172 = vmatpush2.msra.mxu0 0.0
        %2173 = vmatprep.subr.mxu0 0.0
        %2174 = vmatpush2.msra.mxu0 0.0
        %2175 = vmatprep.subr.mxu0 0.0
        %2176 = vmatpush2.msra.mxu0 0.0
        %2177 = vmatprep.subr.mxu0 0.0
        %2178 = vmatpush2.msra.mxu0 0.0
        %2179 = vmatprep.subr.mxu0 0.0
        %2180 = vmatpush2.msra.mxu0 0.0
        %2181 = vmatprep.subr.mxu0 0.0
        %2182 = vmatpush2.msra.mxu0 0.0
        %2183 = vmatprep.subr.mxu0 0.0
        %2184 = vmatpush2.msra.mxu0 0.0
        %2185 = vmatprep.mubr.f32.mxu0 0.0
        %2186 = vmatmul.mubr.f32.gmra.mxu0 %v2119
        %v2187 = vpop.f32.mrf.mxu0
        %v2188 = vadd.f32 0.0, %v2187
        %v2189 = vpop.f32.mrf.mxu0
        %2190 = vdwg.mxu0
        %2191 = vrot.lane.b32.xlu0 %v1618, 104
        %v2192 = vpop.permute.xlu0 %2191
        %2193 = vrot.lane.b32.xlu0 %v1618, 72
        %v2194 = vpop.permute.xlu0 %2193
        %v2195 = vsel %vm560, %v2192, 0
        %v2197 = vsel %vm560, %v2194, 0
        %2199 = vmatprep.subr.mxu0 0.0
        %2200 = vmatpush1.xpose.msra.mxu0 0.0
        %2201 = vmatprep.subr.mxu0 0.0
        %2202 = vmatpush1.xpose.msra.mxu0 0.0
        %2203 = vmatprep.subr.mxu0 0.0
        %2204 = vmatpush1.xpose.msra.mxu0 0.0
        %2205 = vmatprep.subr.mxu0 0.0
        %2206 = vmatpush1.xpose.msra.mxu0 0.0
        %2207 = vmatprep.subr.mxu0 0.0
        %2208 = vmatpush1.xpose.msra.mxu0 0.0
        %2209 = vmatprep.subr.mxu0 0.0
        %2210 = vmatpush1.xpose.msra.mxu0 0.0
        %2211 = vmatprep.subr.mxu0 0.0
        %2212 = vmatpush1.xpose.msra.mxu0 0.0
        %2213 = vmatprep.subr.mxu0 0.0
        %2214 = vmatpush1.xpose.msra.mxu0 0.0
        %2215 = vmatprep.subr.mxu0 0.0
        %2216 = vmatpush1.xpose.msra.mxu0 0.0
        %2217 = vmatprep.subr.mxu0 0.0
        %2218 = vmatpush1.xpose.msra.mxu0 0.0
        %2219 = vmatprep.subr.mxu0 0.0
        %2220 = vmatpush1.xpose.msra.mxu0 0.0
        %2221 = vmatprep.subr.mxu0 0.0
        %2222 = vmatpush1.xpose.msra.mxu0 0.0
        %2223 = vmatprep.subr.mxu0 0.0
        %2224 = vmatpush1.xpose.msra.mxu0 0.0
        %2225 = vmatprep.subr.mxu0 0.0
        %2226 = vmatpush1.xpose.msra.mxu0 0.0
        %2227 = vmatprep.subr.mxu0 0.0
        %2228 = vmatpush1.xpose.msra.mxu0 0.0
        %2229 = vmatprep.subr.mxu0 0.0
        %2230 = vmatpush1.xpose.msra.mxu0 %v2197
        %2231 = vmatprep.subr.mxu0 0.0
        %2232 = vmatpush2.xpose.msra.mxu0 0.0
        %2233 = vmatprep.subr.mxu0 0.0
        %2234 = vmatpush2.xpose.msra.mxu0 0.0
        %2235 = vmatprep.subr.mxu0 0.0
        %2236 = vmatpush2.xpose.msra.mxu0 0.0
        %2237 = vmatprep.subr.mxu0 0.0
        %2238 = vmatpush2.xpose.msra.mxu0 0.0
        %2239 = vmatprep.subr.mxu0 0.0
        %2240 = vmatpush2.xpose.msra.mxu0 0.0
        %2241 = vmatprep.subr.mxu0 0.0
        %2242 = vmatpush2.xpose.msra.mxu0 0.0
        %2243 = vmatprep.subr.mxu0 0.0
        %2244 = vmatpush2.xpose.msra.mxu0 0.0
        %2245 = vmatprep.subr.mxu0 0.0
        %2246 = vmatpush2.xpose.msra.mxu0 0.0
        %2247 = vmatprep.subr.mxu0 0.0
        %2248 = vmatpush2.xpose.msra.mxu0 0.0
        %2249 = vmatprep.subr.mxu0 0.0
        %2250 = vmatpush2.xpose.msra.mxu0 0.0
        %2251 = vmatprep.subr.mxu0 0.0
        %2252 = vmatpush2.xpose.msra.mxu0 0.0
        %2253 = vmatprep.subr.mxu0 0.0
        %2254 = vmatpush2.xpose.msra.mxu0 0.0
        %2255 = vmatprep.subr.mxu0 0.0
        %2256 = vmatpush2.xpose.msra.mxu0 0.0
        %2257 = vmatprep.subr.mxu0 0.0
        %2258 = vmatpush2.xpose.msra.mxu0 0.0
        %2259 = vmatprep.subr.mxu0 0.0
        %2260 = vmatpush2.xpose.msra.mxu0 0.0
        %2261 = vmatprep.subr.mxu0 0.0
        %2262 = vmatpush2.xpose.msra.mxu0 0.0
        %2263 = vmatprep.mubr.f32.mxu0 0.0
        %2264 = vmatmul.mubr.f32.gmra.mxu0 %v2195
        %v2265 = vpop.f32.mrf.mxu0
        %v2266 = vadd.f32 0.0, %v2265
        %v2267 = vpop.f32.mrf.mxu0
        %2268 = vdwg.mxu0
        %v2269 = vsel %vm560, %v2266, -inf
        %2270 = vmax.xlane.f32.xlu0 %v2269
        %v2271 = vpop.xlane.xlu0 %2270
        %v2272 = vsub.f32 %v2266, %v2271
        %v2273 = vmul.f32 %v2272, 1.442695
        %v2274 = vpow.pop %v2273
        %v2275 = vsel %vm560, %v2274, 0.0
        %2276 = vadd.xlane.f32.xlu0 %v2275
        %v2277 = vpop.xlane.xlu0 %2276
        %v2278 = vrcp.pop %v2277
        %v2279 = vmul.f32 %v2274, %v2278
        %2280 = vrot.lane.b32.xlu0 %v1696, 104
        %v2281 = vpop.permute.xlu0 %2280
        %v2284 = vsel %vm560, %v2279, 0
        %2286 = vmatprep.subr.mxu0 0.0
        %2287 = vmatpush1.msra.mxu0 0.0
        %2288 = vmatprep.subr.mxu0 0.0
        %2289 = vmatpush1.msra.mxu0 0.0
        %2290 = vmatprep.subr.mxu0 0.0
        %2291 = vmatpush1.msra.mxu0 0.0
        %2292 = vmatprep.subr.mxu0 0.0
        %2293 = vmatpush1.msra.mxu0 0.0
        %2294 = vmatprep.subr.mxu0 0.0
        %2295 = vmatpush1.msra.mxu0 0.0
        %2296 = vmatprep.subr.mxu0 0.0
        %2297 = vmatpush1.msra.mxu0 0.0
        %2298 = vmatprep.subr.mxu0 0.0
        %2299 = vmatpush1.msra.mxu0 0.0
        %2300 = vmatprep.subr.mxu0 0.0
        %2301 = vmatpush1.msra.mxu0 0.0
        %2302 = vmatprep.subr.mxu0 0.0
        %2303 = vmatpush1.msra.mxu0 0.0
        %2304 = vmatprep.subr.mxu0 0.0
        %2305 = vmatpush1.msra.mxu0 0.0
        %2306 = vmatprep.subr.mxu0 0.0
        %2307 = vmatpush1.msra.mxu0 0.0
        %2308 = vmatprep.subr.mxu0 0.0
        %2309 = vmatpush1.msra.mxu0 0.0
        %2310 = vmatprep.subr.mxu0 0.0
        %2311 = vmatpush1.msra.mxu0 0.0
        %2312 = vmatprep.subr.mxu0 0.0
        %2313 = vmatpush1.msra.mxu0 0.0
        %2314 = vmatprep.subr.mxu0 0.0
        %2315 = vmatpush1.msra.mxu0 0.0
        %2316 = vmatprep.subr.mxu0 0.0
        %2317 = vmatpush1.msra.mxu0 %v2281
        %2318 = vmatprep.subr.mxu0 0.0
        %2319 = vmatpush2.msra.mxu0 0.0
        %2320 = vmatprep.subr.mxu0 0.0
        %2321 = vmatpush2.msra.mxu0 0.0
        %2322 = vmatprep.subr.mxu0 0.0
        %2323 = vmatpush2.msra.mxu0 0.0
        %2324 = vmatprep.subr.mxu0 0.0
        %2325 = vmatpush2.msra.mxu0 0.0
        %2326 = vmatprep.subr.mxu0 0.0
        %2327 = vmatpush2.msra.mxu0 0.0
        %2328 = vmatprep.subr.mxu0 0.0
        %2329 = vmatpush2.msra.mxu0 0.0
        %2330 = vmatprep.subr.mxu0 0.0
        %2331 = vmatpush2.msra.mxu0 0.0
        %2332 = vmatprep.subr.mxu0 0.0
        %2333 = vmatpush2.msra.mxu0 0.0
        %2334 = vmatprep.subr.mxu0 0.0
        %2335 = vmatpush2.msra.mxu0 0.0
        %2336 = vmatprep.subr.mxu0 0.0
        %2337 = vmatpush2.msra.mxu0 0.0
        %2338 = vmatprep.subr.mxu0 0.0
        %2339 = vmatpush2.msra.mxu0 0.0
        %2340 = vmatprep.subr.mxu0 0.0
        %2341 = vmatpush2.msra.mxu0 0.0
        %2342 = vmatprep.subr.mxu0 0.0
        %2343 = vmatpush2.msra.mxu0 0.0
        %2344 = vmatprep.subr.mxu0 0.0
        %2345 = vmatpush2.msra.mxu0 0.0
        %2346 = vmatprep.subr.mxu0 0.0
        %2347 = vmatpush2.msra.mxu0 0.0
        %2348 = vmatprep.subr.mxu0 0.0
        %2349 = vmatpush2.msra.mxu0 0.0
        %2350 = vmatprep.mubr.f32.mxu0 0.0
        %2351 = vmatmul.mubr.f32.gmra.mxu0 %v2284
        %v2352 = vpop.f32.mrf.mxu0
        %v2353 = vadd.f32 0.0, %v2352
        %v2354 = vpop.f32.mrf.mxu0
        %2355 = vdwg.mxu0
        %2357 = vrot.lane.b32.xlu0 %v2023, 8
        %v2358 = vpop.permute.xlu0 %2357
        %2361 = vrot.lane.b32.xlu0 %v2188, 16
        %v2362 = vpop.permute.xlu0 %2361
        %2365 = vrot.lane.b32.xlu0 %v2353, 24
        %v2366 = vpop.permute.xlu0 %2365
        %v2368 = vsel %vm560, %v1857, %v2358
        %v2369 = vsel %vm1228, %v2368, %v2362
        %v2370 = vsel %vm1230, %v2369, %v2366
        %s2371 = scalar_lea.vmem %s4, 32
        %v2372 = vld [vmem:[%s2371] sm:$0xff]
        %v2373 = vld [vmem:[%s2371 + $0x8] sm:$0xff]
        %v2374 = vld [vmem:[%s2371 + $0x10] sm:$0xff]
        %v2375 = vld [vmem:[%s2371 + $0x18] sm:$0xff]
        %v2376 = vlaneseq
        %v2377 = vshrl.u32 %v2376, 7
        %v2378 = vsub.s32 0, %v2377
        %v2379 = vrot.slane %v1531, %v2378
        %v2381 = vsel %vm406, %v2370, 0
        %2383 = vmatprep.subr.mxu0 0.0
        %2384 = vmatpush1.msra.mxu0 0.0
        %2385 = vmatprep.subr.mxu0 0.0
        %2386 = vmatpush1.msra.mxu0 0.0
        %2387 = vmatprep.subr.mxu0 0.0
        %2388 = vmatpush1.msra.mxu0 0.0
        %2389 = vmatprep.subr.mxu0 0.0
        %2390 = vmatpush1.msra.mxu0 0.0
        %2391 = vmatprep.subr.mxu0 0.0
        %2392 = vmatpush1.msra.mxu0 0.0
        %2393 = vmatprep.subr.mxu0 0.0
        %2394 = vmatpush1.msra.mxu0 0.0
        %2395 = vmatprep.subr.mxu0 0.0
        %2396 = vmatpush1.msra.mxu0 0.0
        %2397 = vmatprep.subr.mxu0 0.0
        %2398 = vmatpush1.msra.mxu0 0.0
        %2399 = vmatprep.subr.mxu0 0.0
        %2400 = vmatpush1.msra.mxu0 0.0
        %2401 = vmatprep.subr.mxu0 0.0
        %2402 = vmatpush1.msra.mxu0 0.0
        %2403 = vmatprep.subr.mxu0 0.0
        %2404 = vmatpush1.msra.mxu0 0.0
        %2405 = vmatprep.subr.mxu0 0.0
        %2406 = vmatpush1.msra.mxu0 0.0
        %2407 = vmatprep.subr.mxu0 0.0
        %2408 = vmatpush1.msra.mxu0 %v2375
        %2409 = vmatprep.subr.mxu0 0.0
        %2410 = vmatpush1.msra.mxu0 %v2374
        %2411 = vmatprep.subr.mxu0 0.0
        %2412 = vmatpush1.msra.mxu0 %v2373
        %2413 = vmatprep.subr.mxu0 0.0
        %2414 = vmatpush1.msra.mxu0 %v2372
        %2415 = vmatprep.subr.mxu0 0.0
        %2416 = vmatpush2.msra.mxu0 0.0
        %2417 = vmatprep.subr.mxu0 0.0
        %2418 = vmatpush2.msra.mxu0 0.0
        %2419 = vmatprep.subr.mxu0 0.0
        %2420 = vmatpush2.msra.mxu0 0.0
        %2421 = vmatprep.subr.mxu0 0.0
        %2422 = vmatpush2.msra.mxu0 0.0
        %2423 = vmatprep.subr.mxu0 0.0
        %2424 = vmatpush2.msra.mxu0 0.0
        %2425 = vmatprep.subr.mxu0 0.0
        %2426 = vmatpush2.msra.mxu0 0.0
        %2427 = vmatprep.subr.mxu0 0.0
        %2428 = vmatpush2.msra.mxu0 0.0
        %2429 = vmatprep.subr.mxu0 0.0
        %2430 = vmatpush2.msra.mxu0 0.0
        %2431 = vmatprep.subr.mxu0 0.0
        %2432 = vmatpush2.msra.mxu0 0.0
        %2433 = vmatprep.subr.mxu0 0.0
        %2434 = vmatpush2.msra.mxu0 0.0
        %2435 = vmatprep.subr.mxu0 0.0
        %2436 = vmatpush2.msra.mxu0 0.0
        %2437 = vmatprep.subr.mxu0 0.0
        %2438 = vmatpush2.msra.mxu0 0.0
        %2439 = vmatprep.subr.mxu0 0.0
        %2440 = vmatpush2.msra.mxu0 0.0
        %2441 = vmatprep.subr.mxu0 0.0
        %2442 = vmatpush2.msra.mxu0 0.0
        %2443 = vmatprep.subr.mxu0 0.0
        %2444 = vmatpush2.msra.mxu0 0.0
        %2445 = vmatprep.subr.mxu0 0.0
        %2446 = vmatpush2.msra.mxu0 0.0
        %2447 = vmatprep.mubr.f32.mxu0 0.0
        %2448 = vmatmul.mubr.f32.gmra.mxu0 %v2381
        %v2449 = vpop.f32.mrf.mxu0
        %v2450 = vadd.f32 %v2379, %v2449
        %v2451 = vpop.f32.mrf.mxu0
        %2452 = vdwg.mxu0
        %v2453 = vadd.f32 %v1529, %v2450
        %v2454 = vsel %vm406, %v2453, 0.0
        %2455 = vadd.xlane.f32.xlu0 %v2454
        %v2456 = vpop.xlane.xlu0 %2455
        %v2457 = vmul.f32 %v2456, %v1317
        %v2458 = vsub.f32 %v2453, %v2457
        %v2459 = vmul.f32 %v2458, %v2458
        %v2460 = vsel %vm406, %v2459, 0.0
        %2461 = vadd.xlane.f32.xlu0 %v2460
        %v2462 = vpop.xlane.xlu0 %2461
        %v2463 = vmul.f32 %v2462, %v1317
        %v2464 = vadd.f32 %v2463, 1e-05
        %v2465 = vrsqrt.pop %v2464
        %v2466 = vmul.f32 %v2458, %v2465
        %v2467 = vlaneseq
        %v2468 = vshrl.u32 %v2467, 7
        %v2469 = vsub.s32 0, %v2468
        %v2470 = vrot.slane %v1534, %v2469
        %v2471 = vmul.f32 %v2466, %v2470
        %v2472 = vlaneseq
        %v2473 = vshrl.u32 %v2472, 7
        %v2474 = vsub.s32 0, %v2473
        %v2475 = vrot.slane %v1535, %v2474
        %v2476 = vadd.f32 %v2471, %v2475
        %s2477 = scalar_lea.vmem [#allocation7], 32
        %v2478 = vld [vmem:[%s2477] sm:$0xff]
        %v2479 = vld [vmem:[%s2477 + $0x8] sm:$0xff]
        %v2480 = vld [vmem:[%s2477 + $0x10] sm:$0xff]
        %v2481 = vld [vmem:[%s2477 + $0x18] sm:$0xff]
        %v2482 = vlaneseq
        %v2483 = vshrl.u32 %v2482, 7
        %v2484 = vsub.s32 0, %v2483
        %v2485 = vrot.slane %v1532, %v2484
        %v2487 = vsel %vm406, %v2476, 0
        %2489 = vmatprep.subr.mxu0 0.0
        %2490 = vmatpush1.msra.mxu0 0.0
        %2491 = vmatprep.subr.mxu0 0.0
        %2492 = vmatpush1.msra.mxu0 0.0
        %2493 = vmatprep.subr.mxu0 0.0
        %2494 = vmatpush1.msra.mxu0 0.0
        %2495 = vmatprep.subr.mxu0 0.0
        %2496 = vmatpush1.msra.mxu0 0.0
        %2497 = vmatprep.subr.mxu0 0.0
        %2498 = vmatpush1.msra.mxu0 0.0
        %2499 = vmatprep.subr.mxu0 0.0
        %2500 = vmatpush1.msra.mxu0 0.0
        %2501 = vmatprep.subr.mxu0 0.0
        %2502 = vmatpush1.msra.mxu0 0.0
        %2503 = vmatprep.subr.mxu0 0.0
        %2504 = vmatpush1.msra.mxu0 0.0
        %2505 = vmatprep.subr.mxu0 0.0
        %2506 = vmatpush1.msra.mxu0 0.0
        %2507 = vmatprep.subr.mxu0 0.0
        %2508 = vmatpush1.msra.mxu0 0.0
        %2509 = vmatprep.subr.mxu0 0.0
        %2510 = vmatpush1.msra.mxu0 0.0
        %2511 = vmatprep.subr.mxu0 0.0
        %2512 = vmatpush1.msra.mxu0 0.0
        %2513 = vmatprep.subr.mxu0 0.0
        %2514 = vmatpush1.msra.mxu0 %v2481
        %2515 = vmatprep.subr.mxu0 0.0
        %2516 = vmatpush1.msra.mxu0 %v2480
        %2517 = vmatprep.subr.mxu0 0.0
        %2518 = vmatpush1.msra.mxu0 %v2479
        %2519 = vmatprep.subr.mxu0 0.0
        %2520 = vmatpush1.msra.mxu0 %v2478
        %2521 = vmatprep.subr.mxu0 0.0
        %2522 = vmatpush2.msra.mxu0 0.0
        %2523 = vmatprep.subr.mxu0 0.0
        %2524 = vmatpush2.msra.mxu0 0.0
        %2525 = vmatprep.subr.mxu0 0.0
        %2526 = vmatpush2.msra.mxu0 0.0
        %2527 = vmatprep.subr.mxu0 0.0
        %2528 = vmatpush2.msra.mxu0 0.0
        %2529 = vmatprep.subr.mxu0 0.0
        %2530 = vmatpush2.msra.mxu0 0.0
        %2531 = vmatprep.subr.mxu0 0.0
        %2532 = vmatpush2.msra.mxu0 0.0
        %2533 = vmatprep.subr.mxu0 0.0
        %2534 = vmatpush2.msra.mxu0 0.0
        %2535 = vmatprep.subr.mxu0 0.0
        %2536 = vmatpush2.msra.mxu0 0.0
        %2537 = vmatprep.subr.mxu0 0.0
        %2538 = vmatpush2.msra.mxu0 0.0
        %2539 = vmatprep.subr.mxu0 0.0
        %2540 = vmatpush2.msra.mxu0 0.0
        %2541 = vmatprep.subr.mxu0 0.0
        %2542 = vmatpush2.msra.mxu0 0.0
        %2543 = vmatprep.subr.mxu0 0.0
        %2544 = vmatpush2.msra.mxu0 0.0
        %2545 = vmatprep.subr.mxu0 0.0
        %2546 = vmatpush2.msra.mxu0 0.0
        %2547 = vmatprep.subr.mxu0 0.0
        %2548 = vmatpush2.msra.mxu0 0.0
        %2549 = vmatprep.subr.mxu0 0.0
        %2550 = vmatpush2.msra.mxu0 0.0
        %2551 = vmatprep.subr.mxu0 0.0
        %2552 = vmatpush2.msra.mxu0 0.0
        %2553 = vmatprep.mubr.f32.mxu0 0.0
        %2554 = vmatmul.mubr.f32.gmra.mxu0 %v2487
        %v2555 = vpop.f32.mrf.mxu0
        %v2556 = vadd.f32 %v2485, %v2555
        %v2557 = vpop.f32.mrf.mxu0
        %2558 = vdwg.mxu0
        %v2559 = vmax.f32 %v2556, 0.0
        %s2560 = scalar_lea.vmem %s6, 64
        %v2561 = vld [vmem:[%s2560] sm:$0xff]
        %v2562 = vld [vmem:[%s2560 + $0x8] sm:$0xff]
        %v2563 = vld [vmem:[%s2560 + $0x10] sm:$0xff]
        %v2564 = vld [vmem:[%s2560 + $0x18] sm:$0xff]
        %v2565 = vld [vmem:[%s2560 + $0x20] sm:$0xff]
        %v2566 = vld [vmem:[%s2560 + $0x28] sm:$0xff]
        %v2567 = vld [vmem:[%s2560 + $0x30] sm:$0xff]
        %v2568 = vld [vmem:[%s2560 + $0x38] sm:$0xff]
        %v2569 = vlaneseq
        %v2570 = vshrl.u32 %v2569, 7
        %v2571 = vsub.s32 0, %v2570
        %v2572 = vrot.slane %v1533, %v2571
        %v2574 = vsel %vm1432, %v2559, 0
        %2576 = vmatprep.subr.mxu0 0.0
        %2577 = vmatpush1.msra.mxu0 0.0
        %2578 = vmatprep.subr.mxu0 0.0
        %2579 = vmatpush1.msra.mxu0 0.0
        %2580 = vmatprep.subr.mxu0 0.0
        %2581 = vmatpush1.msra.mxu0 0.0
        %2582 = vmatprep.subr.mxu0 0.0
        %2583 = vmatpush1.msra.mxu0 0.0
        %2584 = vmatprep.subr.mxu0 0.0
        %2585 = vmatpush1.msra.mxu0 0.0
        %2586 = vmatprep.subr.mxu0 0.0
        %2587 = vmatpush1.msra.mxu0 0.0
        %2588 = vmatprep.subr.mxu0 0.0
        %2589 = vmatpush1.msra.mxu0 0.0
        %2590 = vmatprep.subr.mxu0 0.0
        %2591 = vmatpush1.msra.mxu0 0.0
        %2592 = vmatprep.subr.mxu0 0.0
        %2593 = vmatpush1.msra.mxu0 %v2568
        %2594 = vmatprep.subr.mxu0 0.0
        %2595 = vmatpush1.msra.mxu0 %v2567
        %2596 = vmatprep.subr.mxu0 0.0
        %2597 = vmatpush1.msra.mxu0 %v2566
        %2598 = vmatprep.subr.mxu0 0.0
        %2599 = vmatpush1.msra.mxu0 %v2565
        %2600 = vmatprep.subr.mxu0 0.0
        %2601 = vmatpush1.msra.mxu0 %v2564
        %2602 = vmatprep.subr.mxu0 0.0
        %2603 = vmatpush1.msra.mxu0 %v2563
        %2604 = vmatprep.subr.mxu0 0.0
        %2605 = vmatpush1.msra.mxu0 %v2562
        %2606 = vmatprep.subr.mxu0 0.0
        %2607 = vmatpush1.msra.mxu0 %v2561
        %2608 = vmatprep.subr.mxu0 0.0
        %2609 = vmatpush2.msra.mxu0 0.0
        %2610 = vmatprep.subr.mxu0 0.0
        %2611 = vmatpush2.msra.mxu0 0.0
        %2612 = vmatprep.subr.mxu0 0.0
        %2613 = vmatpush2.msra.mxu0 0.0
        %2614 = vmatprep.subr.mxu0 0.0
        %2615 = vmatpush2.msra.mxu0 0.0
        %2616 = vmatprep.subr.mxu0 0.0
        %2617 = vmatpush2.msra.mxu0 0.0
        %2618 = vmatprep.subr.mxu0 0.0
        %2619 = vmatpush2.msra.mxu0 0.0
        %2620 = vmatprep.subr.mxu0 0.0
        %2621 = vmatpush2.msra.mxu0 0.0
        %2622 = vmatprep.subr.mxu0 0.0
        %2623 = vmatpush2.msra.mxu0 0.0
        %2624 = vmatprep.subr.mxu0 0.0
        %2625 = vmatpush2.msra.mxu0 0.0
        %2626 = vmatprep.subr.mxu0 0.0
        %2627 = vmatpush2.msra.mxu0 0.0
        %2628 = vmatprep.subr.mxu0 0.0
        %2629 = vmatpush2.msra.mxu0 0.0
        %2630 = vmatprep.subr.mxu0 0.0
        %2631 = vmatpush2.msra.mxu0 0.0
        %2632 = vmatprep.subr.mxu0 0.0
        %2633 = vmatpush2.msra.mxu0 0.0
        %2634 = vmatprep.subr.mxu0 0.0
        %2635 = vmatpush2.msra.mxu0 0.0
        %2636 = vmatprep.subr.mxu0 0.0
        %2637 = vmatpush2.msra.mxu0 0.0
        %2638 = vmatprep.subr.mxu0 0.0
        %2639 = vmatpush2.msra.mxu0 0.0
        %2640 = vmatprep.mubr.f32.mxu0 0.0
        %2641 = vmatmul.mubr.f32.gmra.mxu0 %v2574
        %v2642 = vpop.f32.mrf.mxu0
        %v2643 = vadd.f32 %v2572, %v2642
        %v2644 = vpop.f32.mrf.mxu0
        %2645 = vdwg.mxu0
        %v2646 = vadd.f32 %v2476, %v2643
        %v2647 = vsel %vm406, %v2646, 0.0
        %2648 = vadd.xlane.f32.xlu0 %v2647
        %v2649 = vpop.xlane.xlu0 %2648
        %v2650 = vmul.f32 %v2649, %v1317
        %v2651 = vsub.f32 %v2646, %v2650
        %v2652 = vmul.f32 %v2651, %v2651
        %v2653 = vsel %vm406, %v2652, 0.0
        %2654 = vadd.xlane.f32.xlu0 %v2653
        %v2655 = vpop.xlane.xlu0 %2654
        %v2656 = vmul.f32 %v2655, %v1317
        %v2657 = vadd.f32 %v2656, 1e-05
        %v2658 = vrsqrt.pop %v2657
        %v2659 = vmul.f32 %v2651, %v2658
        %v2660 = vlaneseq
        %v2661 = vshrl.u32 %v2660, 7
        %v2662 = vsub.s32 0, %v2661
        %v2663 = vrot.slane %v1536, %v2662
        %v2664 = vmul.f32 %v2659, %v2663
        %v2665 = vlaneseq
        %v2666 = vshrl.u32 %v2665, 7
        %v2667 = vsub.s32 0, %v2666
        %v2668 = vrot.slane %v1537, %v2667
        %v2669 = vadd.f32 %v2664, %v2668
        %v2670 = vld [vmem:[#allocation8 + $0x10] sm:$0x1]
        %v2671 = vld [vmem:[#allocation8 + $0x11] sm:$0x1]
        %v2672 = vsel %vm406, %v2669, 0.0
        %2673 = vadd.xlane.f32.xlu0 %v2672
        %v2674 = vpop.xlane.xlu0 %2673
        %v2675 = vmul.f32 %v2674, %v1317
        %v2676 = vsub.f32 %v2669, %v2675
        %v2677 = vmul.f32 %v2676, %v2676
        %v2678 = vsel %vm406, %v2677, 0.0
        %2679 = vadd.xlane.f32.xlu0 %v2678
        %v2680 = vpop.xlane.xlu0 %2679
        %v2681 = vmul.f32 %v2680, %v1317
        %v2682 = vadd.f32 %v2681, 1e-05
        %v2683 = vrsqrt.pop %v2682
        %v2684 = vmul.f32 %v2676, %v2683
        %v2685 = vlaneseq
        %v2686 = vshrl.u32 %v2685, 7
        %v2687 = vsub.s32 0, %v2686
        %v2688 = vrot.slane %v2670, %v2687
        %v2689 = vmul.f32 %v2684, %v2688
        %v2690 = vlaneseq
        %v2691 = vshrl.u32 %v2690, 7
        %v2692 = vsub.s32 0, %v2691
        %v2693 = vrot.slane %v2671, %v2692
        %v2694 = vadd.f32 %v2689, %v2693
        %2695 = vst.msk [vmem:[%s386] sm:$0xff] %vm406, %v2694
        %s2696 = sand.u32 %s215, 1
        %s2697 = scalar_lea.sflag [#allocation4], %s2696
        %s2698 = sand.u32 %s215, 1
        %s2699 = smul.addr %s2698, 8
        %s2700 = scalar_lea.vmem [#allocation10], %s2699
        // Predicated region
        $region69: #{tpu_custom_call.1} parent=51 // pred_check
          %p2701 = pneg %p225
        $region70: #{tpu_custom_call.1} parent=51 // pred_check_branch
          %2703 = sbr.rel (%p2701) target = $region72
        $region71: #{tpu_custom_call.1} parent=51 // pred_region
          %s2705 = ssub.s32 128, 128
          %2706 = vsyncadd %s2697, %s2705
          %s2707 = smul.addr %s29, 128
          %s2708 = scalar_lea.hbm %s8, %s2707
          %s2710 = sshll.u32 %s2700, 4
          %s2711 = int_to_ptr.vmem [resolvable:$true] %s2710
          %2713 = dma.vmem_to_hbm [thread:$0]  %s2711, 128, %s2708, %s2697
        $region72: #{tpu_custom_call.1} parent=51 // pred_fallthru
          _
      $region52: #{tpu_custom_call.1} parent=5 // pred_fallthru
        _
      %p2714 = scmp.le.s32.totalorder 2, %s24
      // Predicated region
      $region73: #{tpu_custom_call.1} parent=5 // pred_check
        %p2715 = pneg %p2714
      $region74: #{tpu_custom_call.1} parent=5 // pred_check_branch
        %2717 = sbr.rel (%p2715) target = $region76
      $region75: #{tpu_custom_call.1} parent=5 // pred_region
        %s2718 = ssub.s32 %s24, 2
        // Predicated region
        $region77: #{tpu_custom_call.1} parent=75 // pred_check
          %p2719 = pneg %p231
        $region78: #{tpu_custom_call.1} parent=75 // pred_check_branch
          %2721 = sbr.rel (%p2719) target = $region80
        $region79: #{tpu_custom_call.1} parent=75 // pred_region
          %s2722 = sand.u32 %s216, 1
          %s2723 = scalar_lea.sflag [#allocation4], %s2722
          %s2724 = sand.u32 %s216, 1
          %s2725 = smul.addr %s2724, 8
          %s2726 = scalar_lea.vmem [#allocation10], %s2725
          %2727 = dma.done %s2723, 128
        $region80: #{tpu_custom_call.1} parent=75 // pred_fallthru
          _
      $region76: #{tpu_custom_call.1} parent=5 // pred_fallthru
        _
    $region6: #{tpu_custom_call.1} parent=1 // loop_footer
      %s28 = sadd.s32 1, %s24
    $region7: #{tpu_custom_call.1} parent=1 // loop_footer_branch
      %23 = sbr.rel target = $region3
    $region8: #{tpu_custom_call.1} parent=1 // loop_exit
      _
    %2728 = vsyncpa [#allocation3], 1
    %s2729 = scalar_lea.sflag [#allocation3], 1
    %2730 = vsyncpa %s2729, 1
    %2731 = vsyncpa [#allocation6], 1
    %s2732 = scalar_lea.sflag [#allocation6], 1
    %2733 = vsyncpa %s2732, 1
    %2734 = vsyncpa [#allocation9], 1
    %2735 = vsyncpa [#allocation4], 1
    %s2736 = scalar_lea.sflag [#allocation4], 1
    %2737 = vsyncpa %s2736, 1

</llo_original>
